<compile_context>
chip_gen: v5e
topology: v5e:2x2
jax: 0.10.0
libtpu: 0.0.40
codegen_flags: <defaults>
</compile_context>

<pallas_src>
import math
import functools

import jax
import jax.numpy as jnp
from jax import lax
from jax.experimental import pallas as pl
from jax.experimental.pallas import tpu as pltpu


NEG_INF = -1e30


def _pick_tile(dim, candidates):
    """Largest candidate dividing dim, else the full dim (always a legal block)."""
    for c in candidates:
        if dim % c == 0:
            return c
    return dim


# ----------------------------------------------------------------------------
# Kernel 1: tiled linear  y = x @ W + b   (used for c_attn and c_proj)
#   grid = (M//tm, N//tn, K//tk), f32 accumulator in VMEM scratch.
#   The activation tile is cast to bf16 inside the kernel (no HBM bf16 copy).
# ----------------------------------------------------------------------------
def _linear_kernel(x_ref, w_ref, b_ref, o_ref, acc_ref):
    @pl.when(pl.program_id(2) == 0)
    def _():
        acc_ref[...] = jnp.zeros(acc_ref.shape, jnp.float32)

    acc_ref[...] += jnp.dot(x_ref[...].astype(jnp.bfloat16), w_ref[...],
                            preferred_element_type=jnp.float32)

    @pl.when(pl.program_id(2) == pl.num_programs(2) - 1)
    def _():
        o_ref[...] = (acc_ref[...] + b_ref[...]).astype(o_ref.dtype)


def linear_pallas(x2d, w, b, *, out_dtype):
    """x2d: [M, K] (f32 or bf16)  w: [K, N] (bf16)  b: [N] (f32) -> [M, N]."""
    M, K = x2d.shape
    K2, N = w.shape
    assert K == K2
    b2d = b.reshape(1, N).astype(jnp.float32)

    tm = _pick_tile(M, (1024, 512, 256, 128, 64, 32, 16, 8))
    tn = _pick_tile(N, (768, 512, 384, 256, 128))
    tk = _pick_tile(K, (512, 256, 128))
    grid = (M // tm, N // tn, K // tk)

    x_bytes = x2d.dtype.itemsize
    w_bytes = w.dtype.itemsize
    out_bytes = jnp.dtype(out_dtype).itemsize
    needed = (2 * tm * tk * x_bytes          # x tiles (double buffered)
              + 2 * tk * tn * w_bytes        # w tiles
              + 2 * tm * tn * out_bytes      # out tiles
              + tm * tn * 4                  # f32 accumulator
              + 2 * tn * 4)                  # bias
    vmem_limit = int(min(max(needed + (16 << 20), 32 << 20), 56 << 20))

    return pl.pallas_call(
        _linear_kernel,
        out_shape=jax.ShapeDtypeStruct((M, N), out_dtype),
        grid_spec=pltpu.PrefetchScalarGridSpec(
            num_scalar_prefetch=0,
            grid=grid,
            in_specs=[
                pl.BlockSpec((tm, tk), lambda i, j, k: (i, k)),
                pl.BlockSpec((tk, tn), lambda i, j, k: (k, j)),
                pl.BlockSpec((1, tn), lambda i, j, k: (0, j)),
            ],
            out_specs=pl.BlockSpec((tm, tn), lambda i, j, k: (i, j)),
            scratch_shapes=[pltpu.VMEM((tm, tn), jnp.float32)],
        ),
        compiler_params=pltpu.CompilerParams(
            dimension_semantics=("parallel", "parallel", "arbitrary"),
            vmem_limit_bytes=vmem_limit),
    )(x2d, w, b2d)


# ----------------------------------------------------------------------------
# Kernel 2: flash-style causal attention reading the fused qkv [B, T, 3C]
#   grid = (B, n_head_groups, T//tq) — all parallel.
#   K/V: full-T slabs per (b, group), resident in VMEM across the qi sweep.
#   KV loop is inside the kernel: fori_loop over ki in [0, qi) unmasked,
#   then one masked diagonal block (ki == qi).  Output written in [B, T, C].
# ----------------------------------------------------------------------------
def _flash_kernel(q_ref, k_ref, v_ref, o_ref, *, tq, tk, G, hd):
    qi = pl.program_id(2)

    # Per-head Q tiles loaded once (1/sqrt(hd) already folded into c_attn).
    qs = [q_ref[:, j * hd:(j + 1) * hd] for j in range(G)]       # (tq, hd) bf16

    # Causal mask for the diagonal block (qi == ki, tq == tk -> local r >= c).
    diag_mask = (lax.broadcasted_iota(jnp.int32, (tq, tk), 0)
                 >= lax.broadcasted_iota(jnp.int32, (tq, tk), 1))

    def attend(start, carry, masked):
        ms, ls, accs = carry
        start = pl.multiple_of(start, tk)
        new_ms, new_ls, new_accs = [], [], []
        for j in range(G):
            kj = k_ref[pl.ds(start, tk), j * hd:(j + 1) * hd]     # (tk, hd)
            vj = v_ref[pl.ds(start, tk), j * hd:(j + 1) * hd]     # (tk, hd)
            # 'qd,kd->qk' without transposing K (no XLU vxpose on the K tile).
            s = lax.dot_general(qs[j], kj, (((1,), (1,)), ((), ())),
                                preferred_element_type=jnp.float32)  # (tq, tk)
            if masked:
                s = jnp.where(diag_mask, s, NEG_INF)
            m_prev, l_prev, acc_prev = ms[j], ls[j], accs[j]
            m_new = jnp.maximum(m_prev, jnp.max(s, axis=-1, keepdims=True))
            alpha = jnp.exp(m_prev - m_new)
            p = jnp.exp(s - m_new)                                   # (tq, tk) f32
            new_ls.append(alpha * l_prev + jnp.sum(p, axis=-1, keepdims=True))
            new_accs.append(alpha * acc_prev + jnp.dot(
                p.astype(vj.dtype), vj, preferred_element_type=jnp.float32))
            new_ms.append(m_new)
        return (tuple(new_ms), tuple(new_ls), tuple(new_accs))

    init = (tuple(jnp.full((tq, 1), NEG_INF, jnp.float32) for _ in range(G)),
            tuple(jnp.zeros((tq, 1), jnp.float32) for _ in range(G)),
            tuple(jnp.zeros((tq, hd), jnp.float32) for _ in range(G)))

    # Off-diagonal KV blocks (ki < qi): fully unmasked, no dead grid steps.
    carry = lax.fori_loop(0, qi,
                          lambda ki, c: attend(ki * tk, c, masked=False),
                          init)
    # Diagonal KV block (ki == qi): causal mask inside the block, then finalize.
    ms, ls, accs = attend(qi * tq, carry, masked=True)

    parts = []
    for j in range(G):
        inv_l = pl.reciprocal(ls[j], approx=True)
        parts.append((accs[j] * inv_l).astype(o_ref.dtype))
    o_ref[...] = jnp.concatenate(parts, axis=-1)                  # lane-dense store


def flash_causal_attention(qkv, n_head):
    """qkv: [B, T, 3C] bf16 (c_attn output, Q columns pre-scaled) -> [B, T, C]."""
    B, T, threeC = qkv.shape
    C = threeC // 3
    hd = C // n_head
    if hd >= 128:
        assert hd % 128 == 0, "head_dim >= 128 must be a multiple of 128"
        G = 1
    else:
        assert 128 % hd == 0, "head_dim must divide 128"
        G = 128 // hd                       # heads per grid step (lane-dense)
    Gh = G * hd
    assert C % Gh == 0
    n_groups = C // Gh

    tq = _pick_tile(T, (128, 64, 32, 16, 8))
    tk = tq
    assert tq == tk                         # diagonal-block logic relies on this

    kernel = functools.partial(_flash_kernel, tq=tq, tk=tk, G=G, hd=hd)

    # Q tile: (tq, Gh) window of the Q columns of the current head-group.
    q_spec = pl.BlockSpec((None, tq, Gh), lambda b, g, qi: (b, qi, g))
    # Full-T K/V slabs for this (batch, head-group); the index does not depend
    # on qi, so they are fetched once and stay resident across the qi sweep.
    k_spec = pl.BlockSpec((None, T, Gh), lambda b, g, qi: (b, 0, n_groups + g))
    v_spec = pl.BlockSpec((None, T, Gh), lambda b, g, qi: (b, 0, 2 * n_groups + g))
    # Output written directly into [B, T, C] (no head-merge transpose).
    o_spec = pl.BlockSpec((None, tq, Gh), lambda b, g, qi: (b, qi, g))

    needed = (2 * tq * Gh * 2               # Q tiles (double buffered)
              + 2 * 2 * T * Gh * 2          # resident K and V slabs
              + 2 * tq * Gh * 2             # output tiles
              + 2 * G * tq * tk * 4         # s / p temporaries
              + G * tq * hd * 4)            # accumulators
    vmem_limit = int(min(max(needed + (16 << 20), 32 << 20), 56 << 20))

    return pl.pallas_call(
        kernel,
        out_shape=jax.ShapeDtypeStruct((B, T, C), qkv.dtype),
        grid_spec=pltpu.PrefetchScalarGridSpec(
            num_scalar_prefetch=0,
            grid=(B, n_groups, T // tq),
            in_specs=[q_spec, k_spec, v_spec],
            out_specs=o_spec,
        ),
        compiler_params=pltpu.CompilerParams(
            dimension_semantics=("parallel", "parallel", "parallel"),
            vmem_limit_bytes=vmem_limit),
    )(qkv, qkv, qkv)


# ----------------------------------------------------------------------------
# Module wrapper: CausalSelfAttention_MHA.forward
# ----------------------------------------------------------------------------
def prepare_params(params, n_head):
    """One-time prep: bf16 weight casts + fold 1/sqrt(hd) into the Q columns."""
    C = params["w_proj"].shape[0]
    hd = C // n_head
    scale = 1.0 / math.sqrt(hd)
    col_scale = jnp.concatenate([jnp.full((C,), scale, jnp.float32),
                                 jnp.ones((2 * C,), jnp.float32)])
    w_attn = (params["w_attn"].astype(jnp.float32) * col_scale[None, :]
              ).astype(jnp.bfloat16)
    b_attn = params["b_attn"].astype(jnp.float32) * col_scale
    return {
        "w_attn": w_attn,
        "b_attn": b_attn,
        "w_proj": params["w_proj"].astype(jnp.bfloat16),
        "b_proj": params["b_proj"].astype(jnp.float32),
    }


def causal_self_attention_mha(x, prepared, n_head):
    """x: [B, T, C] float32.  prepared: output of prepare_params()."""
    B, T, C = x.shape

    # qkv = self.c_attn(x)  (x stays f32 in HBM; cast to bf16 per-tile in-kernel)
    x2d = x.reshape(B * T, C)
    qkv = linear_pallas(x2d, prepared["w_attn"], prepared["b_attn"],
                        out_dtype=jnp.bfloat16)
    qkv = qkv.reshape(B, T, 3 * C)          # free reshape, no transpose

    # y = F.scaled_dot_product_attention(q, k, v, is_causal=True)
    # Head split / merge handled entirely by BlockSpec column indices.
    y = flash_causal_attention(qkv, n_head)            # [B, T, C] bf16

    # y = self.c_proj(y)
    out = linear_pallas(y.reshape(B * T, C), prepared["w_proj"],
                        prepared["b_proj"], out_dtype=jnp.float32)
    return out.reshape(B, T, C)


# ----------------------------------------------------------------------------
# Pure-JAX f32 reference for correctness check
# ----------------------------------------------------------------------------
def reference(x, params, n_head):
    B, T, C = x.shape
    hd = C // n_head
    qkv = x @ params["w_attn"] + params["b_attn"]
    q, k, v = jnp.split(qkv, 3, axis=2)
    q = q.reshape(B, T, n_head, hd).transpose(0, 2, 1, 3)
    k = k.reshape(B, T, n_head, hd).transpose(0, 2, 1, 3)
    v = v.reshape(B, T, n_head, hd).transpose(0, 2, 1, 3)
    s = jnp.einsum("bhqd,bhkd->bhqk", q, k) / math.sqrt(hd)
    mask = jnp.tril(jnp.ones((T, T), dtype=bool))
    s = jnp.where(mask, s, -jnp.inf)
    p = jax.nn.softmax(s, axis=-1)
    y = jnp.einsum("bhqk,bhkd->bhqd", p, v)
    y = y.transpose(0, 2, 1, 3).reshape(B, T, C)
    return y @ params["w_proj"] + params["b_proj"]


if __name__ == "__main__":
    # Small config consistent with the module (head_dim = 64 like the real config).
    B, T, C, n_head = 2, 256, 256, 4

    key = jax.random.PRNGKey(0)
    kx, k1, k2, k3, k4 = jax.random.split(key, 5)

    x = jax.random.normal(kx, (B, T, C), dtype=jnp.float32)

    # Parameters stored as [in, out] so y = x @ W + b.
    params = {
        "w_attn": jax.random.normal(k1, (C, 3 * C), dtype=jnp.float32) * 0.02,
        "b_attn": jax.random.normal(k2, (3 * C,), dtype=jnp.float32) * 0.02,
        "w_proj": jax.random.normal(k3, (C, C), dtype=jnp.float32) * 0.02,
        "b_proj": jax.random.normal(k4, (C,), dtype=jnp.float32) * 0.02,
    }

    prepared = prepare_params(params, n_head)
    out = causal_self_attention_mha(x, prepared, n_head)
    out = jax.block_until_ready(out)

    ref = reference(x, params, n_head)
    assert out.shape == (B, T, C)
    # bf16 matmul operands (f32 accumulation) -> loosened tolerance vs f32 reference.
    max_err = float(jnp.max(jnp.abs(out - ref)))
    assert max_err < 2e-2, f"mismatch vs reference, max abs err = {max_err}"

    print("KERNEL_OK")
</pallas_src>

<mosaic_0001>
module attributes {stable_mosaic.version = 11 : i64} {
  func.func @_linear_kernel(%arg0: i32, %arg1: i32, %arg2: i32, %arg3: memref<512x256xf32, #tpu.memory_space<vmem>>, %arg4: memref<256x768xbf16, #tpu.memory_space<vmem>>, %arg5: memref<1x768xf32, #tpu.memory_space<vmem>>, %arg6: memref<512x768xbf16, #tpu.memory_space<vmem>>, %arg7: memref<512x768xf32, #tpu.memory_space<vmem>>) attributes {dimension_semantics = [#tpu.dimension_semantics<parallel>, #tpu.dimension_semantics<parallel>, #tpu.dimension_semantics<arbitrary>], iteration_bounds = array<i64: 1, 1, 1>, scalar_prefetch = 0 : i64, scratch_operands = 1 : i64, tpu.core_type = #tpu.core_type<tc>, window_params = [{transform_indices = @transform_0, window_bounds = array<i64: 512, 256>}, {transform_indices = @transform_1, window_bounds = array<i64: 256, 768>}, {transform_indices = @transform_2, window_bounds = array<i64: 1, 768>}, {transform_indices = @transform_3, window_bounds = array<i64: 512, 768>}]} {
    %c0_i32 = arith.constant 0 : i32
    %0 = arith.cmpi eq, %arg2, %c0_i32 : i32
    %1 = arith.extui %0 : i1 to i32
    %c0_i32_0 = arith.constant 0 : i32
    %2 = arith.cmpi ne, %1, %c0_i32_0 : i32
    scf.if %2 {
      %cst_10 = arith.constant 0.000000e+00 : f32
      %13 = vector.broadcast %cst_10 : f32 to vector<512x768xf32>
      %c0_11 = arith.constant 0 : index
      %c0_12 = arith.constant 0 : index
      %14 = vector.load %arg7[%c0_11, %c0_12] : memref<512x768xf32, #tpu.memory_space<vmem>>, vector<512x768xf32>
      tpu.vector_store %arg7[%c0_11, %c0_12], %13 {strides = array<i32>} : memref<512x768xf32, #tpu.memory_space<vmem>>, vector<512x768xf32>,
    } else {
    }
    %c0 = arith.constant 0 : index
    %c0_1 = arith.constant 0 : index
    %3 = vector.load %arg7[%c0, %c0_1] : memref<512x768xf32, #tpu.memory_space<vmem>>, vector<512x768xf32>
    %c0_2 = arith.constant 0 : index
    %c0_3 = arith.constant 0 : index
    %4 = vector.load %arg3[%c0_2, %c0_3] : memref<512x256xf32, #tpu.memory_space<vmem>>, vector<512x256xf32>
    %5 = arith.truncf %4 : vector<512x256xf32> to vector<512x256xbf16>
    %c0_4 = arith.constant 0 : index
    %c0_5 = arith.constant 0 : index
    %6 = vector.load %arg4[%c0_4, %c0_5] : memref<256x768xbf16, #tpu.memory_space<vmem>>, vector<256x768xbf16>
    %cst = arith.constant dense<0.000000e+00> : vector<512x768xf32>
    %7 = tpu.matmul %5, %6, %cst {dimension_numbers = #tpu.dot_dimension_numbers<[1], [0], [0], [1], [0, 0, 1, 1], [], []>} : vector<512x256xbf16>, vector<256x768xbf16>, vector<512x768xf32> -> vector<512x768xf32>
    %8 = arith.addf %3, %7 : vector<512x768xf32>
    %c0_6 = arith.constant 0 : index
    %c0_7 = arith.constant 0 : index
    %9 = vector.load %arg7[%c0_6, %c0_7] : memref<512x768xf32, #tpu.memory_space<vmem>>, vector<512x768xf32>
    tpu.vector_store %arg7[%c0_6, %c0_7], %8 {strides = array<i32>} : memref<512x768xf32, #tpu.memory_space<vmem>>, vector<512x768xf32>,
    %c0_i32_8 = arith.constant 0 : i32
    %10 = arith.cmpi eq, %arg2, %c0_i32_8 : i32
    %11 = arith.extui %10 : i1 to i32
    %c0_i32_9 = arith.constant 0 : i32
    %12 = arith.cmpi ne, %11, %c0_i32_9 : i32
    scf.if %12 {
      %c0_10 = arith.constant 0 : index
      %c0_11 = arith.constant 0 : index
      %13 = vector.load %arg7[%c0_10, %c0_11] : memref<512x768xf32, #tpu.memory_space<vmem>>, vector<512x768xf32>
      %c0_12 = arith.constant 0 : index
      %c0_13 = arith.constant 0 : index
      %14 = vector.load %arg5[%c0_12, %c0_13] : memref<1x768xf32, #tpu.memory_space<vmem>>, vector<1x768xf32>
      %15 = vector.broadcast %14 : vector<1x768xf32> to vector<512x768xf32>
      %16 = arith.addf %13, %15 : vector<512x768xf32>
      %17 = arith.truncf %16 : vector<512x768xf32> to vector<512x768xbf16>
      %c0_14 = arith.constant 0 : index
      %c0_15 = arith.constant 0 : index
      %18 = vector.load %arg6[%c0_14, %c0_15] : memref<512x768xbf16, #tpu.memory_space<vmem>>, vector<512x768xbf16>
      tpu.vector_store %arg6[%c0_14, %c0_15], %17 {strides = array<i32>} : memref<512x768xbf16, #tpu.memory_space<vmem>>, vector<512x768xbf16>,
    } else {
    }
    return
  }
  func.func @transform_0(%arg0: i32, %arg1: i32, %arg2: i32) -> (i32, i32) {
    %c0_i32 = arith.constant 0 : i32
    return %arg0, %arg2 : i32, i32
  }
  func.func @transform_1(%arg0: i32, %arg1: i32, %arg2: i32) -> (i32, i32) {
    %c0_i32 = arith.constant 0 : i32
    return %arg2, %arg1 : i32, i32
  }
  func.func @transform_2(%arg0: i32, %arg1: i32, %arg2: i32) -> (i32, i32) {
    %c0_i32 = arith.constant 0 : i32
    %c0_i32_0 = arith.constant 0 : i32
    return %c0_i32, %arg1 : i32, i32
  }
  func.func @transform_3(%arg0: i32, %arg1: i32, %arg2: i32) -> (i32, i32) {
    %c0_i32 = arith.constant 0 : i32
    return %arg0, %arg1 : i32, i32
  }
}

</mosaic_0001>

<llo_original>
// kernel: tpu_custom_call.1
$region0: #{tpu_custom_call.1}
  #allocation0 [shape = 'u32[]', space=smem, size = 0x4, offset = 0x4, fixed_abs, tag = 'smem constant byte address 0x4 - core index']
  #allocation1 [shape = 'u32[72,128]{1,0:T(1,128)}', space=vmem, size = 0x9000, scoped, tag = 'internal scratch']
  #allocation2 [shape = 'f32[512,768]{1,0:T(8,128)}', space=vmem, size = 0x180000, scoped, tag = 'scratch operand']
  %s0 = inlined_call_operand.hbm [shape: f32[512,256], index: 0, kind: input, shape index: {}]
  %s1 = inlined_call_operand.hbm [shape: bf16[256,768], index: 1, kind: input, shape index: {}]
  %s2 = inlined_call_operand.hbm [shape: f32[1,768], index: 2, kind: input, shape index: {}]
  %s3 = inlined_call_operand.hbm [shape: bf16[512,768], index: 3, kind: output, shape index: {}]
  %s4 = sld [smem:[#allocation0]]
  $region42: #{tpu_custom_call.1} parent=0
    _
  %s6 = ssub.s32 1, %s4
  %s7 = scalar_select 0, %s6, %s4
  $region1: #{tpu_custom_call.1} parent=0
    #allocation3 [shape = 'u8[524288]{0}', space=vmem, size = 0x80000, scoped, tag = 'input window, operand 0, single buffered']
    #allocation4 [shape = 's32[1]{0}', space=sflag, size = 0x4, scoped, tag = 'scoped memory for tpu_custom_call.1']
    #allocation5 [shape = 's32[1]{0}', space=sflag, size = 0x4, scoped, tag = 'scoped memory for tpu_custom_call.1']
    #allocation6 [shape = 'u8[393216]{0}', space=vmem, size = 0x60000, scoped, tag = 'input window, operand 1, single buffered']
    #allocation7 [shape = 's32[1]{0}', space=sflag, size = 0x4, scoped, tag = 'scoped memory for tpu_custom_call.1']
    #allocation8 [shape = 'u8[3072]{0}', space=vmem, size = 0xc00, scoped, tag = 'input window, operand 2, single buffered']
    #allocation9 [shape = 'u8[786432]{0}', space=vmem, size = 0xc0000, scoped, tag = 'output window, operand 0, single buffered']
    %8 = vsyncpa [#allocation4], 0
    %9 = vsyncpa [#allocation7], 0
    %10 = vsyncpa [#allocation5], 0
    // Predicated region
    $region2: #{tpu_custom_call.1} parent=1 // pred_check
      _
    $region3: #{tpu_custom_call.1} parent=1 // pred_check_branch
      %12 = sbr.rel (0) target = $region5
    $region4: #{tpu_custom_call.1} parent=1 // pred_region
      %14 = vsyncadd [#allocation4], 0
      %s15 = sshll.u32 %s0, 4
      %s16 = int_to_ptr.hbm [resolvable:$true] %s15
      %s17 = sshll.u32 [#allocation3], 4
      %s18 = int_to_ptr.vmem [resolvable:$true] %s17
      %23 = dma.hbm_to_vmem [thread:$0]  %s16, 16384, %s18, [#allocation4], 256, 256, 16
    $region5: #{tpu_custom_call.1} parent=1 // pred_fallthru
      _
    // Predicated region
    $region6: #{tpu_custom_call.1} parent=1 // pred_check
      _
    $region7: #{tpu_custom_call.1} parent=1 // pred_check_branch
      %25 = sbr.rel (0) target = $region9
    $region8: #{tpu_custom_call.1} parent=1 // pred_region
      %27 = vsyncadd [#allocation7], 0
      %s28 = sshll.u32 %s1, 4
      %s29 = int_to_ptr.hbm [resolvable:$true] %s28
      %s30 = sshll.u32 [#allocation6], 4
      %s31 = int_to_ptr.vmem [resolvable:$true] %s30
      %36 = dma.hbm_to_vmem [thread:$0]  %s29, 12288, %s31, [#allocation7], 384, 384, 24
    $region9: #{tpu_custom_call.1} parent=1 // pred_fallthru
      _
    // Predicated region
    $region10: #{tpu_custom_call.1} parent=1 // pred_check
      _
    $region11: #{tpu_custom_call.1} parent=1 // pred_check_branch
      %38 = sbr.rel (0) target = $region13
    $region12: #{tpu_custom_call.1} parent=1 // pred_region
      %40 = vsyncadd [#allocation7], 0
      %s42 = sshll.u32 %s2, 4
      %s43 = int_to_ptr.hbm [resolvable:$true] %s42
      %s44 = sshll.u32 [#allocation8], 4
      %s45 = int_to_ptr.vmem [resolvable:$true] %s44
      %47 = dma.hbm_to_vmem [thread:$0]  %s43, 96, %s45, [#allocation7]
    $region13: #{tpu_custom_call.1} parent=1 // pred_fallthru
      _
    // Predicated region
    $region14: #{tpu_custom_call.1} parent=1 // pred_check
      _
    $region15: #{tpu_custom_call.1} parent=1 // pred_check_branch
      %49 = sbr.rel (0) target = $region17
    $region16: #{tpu_custom_call.1} parent=1 // pred_region
      %51 = dma.done [#allocation4], 16384
    $region17: #{tpu_custom_call.1} parent=1 // pred_fallthru
      _
    // Predicated region
    $region18: #{tpu_custom_call.1} parent=1 // pred_check
      _
    $region19: #{tpu_custom_call.1} parent=1 // pred_check_branch
      %53 = sbr.rel (0) target = $region21
    $region20: #{tpu_custom_call.1} parent=1 // pred_region
      %55 = dma.done [#allocation7], 12288
    $region21: #{tpu_custom_call.1} parent=1 // pred_fallthru
      _
    // Predicated region
    $region22: #{tpu_custom_call.1} parent=1 // pred_check
      _
    $region23: #{tpu_custom_call.1} parent=1 // pred_check_branch
      %57 = sbr.rel (0) target = $region25
    $region24: #{tpu_custom_call.1} parent=1 // pred_region
      %59 = dma.done [#allocation7], 96
    $region25: #{tpu_custom_call.1} parent=1 // pred_fallthru
      _
    %p60 = scmp.eq.s32.totalorder 0, 0
    // Predicated region
    $region26: #{tpu_custom_call.1} parent=1 // pred_check
      %p61 = pneg %p60
    $region27: #{tpu_custom_call.1} parent=1 // pred_check_branch
      %63 = sbr.rel (%p61) target = $region29
    $region28: #{tpu_custom_call.1} parent=1 // pred_region
      %64 = vst [vmem:[#allocation2] sm:$0xff] 0.0
      %65 = vst [vmem:[#allocation2 + $0x8] sm:$0xff] 0.0
      %66 = vst [vmem:[#allocation2 + $0x10] sm:$0xff] 0.0
      %67 = vst [vmem:[#allocation2 + $0x18] sm:$0xff] 0.0
      %68 = vst [vmem:[#allocation2 + $0x20] sm:$0xff] 0.0
      %69 = vst [vmem:[#allocation2 + $0x28] sm:$0xff] 0.0
      %70 = vst [vmem:[#allocation2 + $0x30] sm:$0xff] 0.0
      %71 = vst [vmem:[#allocation2 + $0x38] sm:$0xff] 0.0
      %72 = vst [vmem:[#allocation2 + $0x40] sm:$0xff] 0.0
      %73 = vst [vmem:[#allocation2 + $0x48] sm:$0xff] 0.0
      %74 = vst [vmem:[#allocation2 + $0x50] sm:$0xff] 0.0
      %75 = vst [vmem:[#allocation2 + $0x58] sm:$0xff] 0.0
      %76 = vst [vmem:[#allocation2 + $0x60] sm:$0xff] 0.0
      %77 = vst [vmem:[#allocation2 + $0x68] sm:$0xff] 0.0
      %78 = vst [vmem:[#allocation2 + $0x70] sm:$0xff] 0.0
      %79 = vst [vmem:[#allocation2 + $0x78] sm:$0xff] 0.0
      %80 = vst [vmem:[#allocation2 + $0x80] sm:$0xff] 0.0
      %81 = vst [vmem:[#allocation2 + $0x88] sm:$0xff] 0.0
      %82 = vst [vmem:[#allocation2 + $0x90] sm:$0xff] 0.0
      %83 = vst [vmem:[#allocation2 + $0x98] sm:$0xff] 0.0
      %84 = vst [vmem:[#allocation2 + $0xa0] sm:$0xff] 0.0
      %85 = vst [vmem:[#allocation2 + $0xa8] sm:$0xff] 0.0
      %86 = vst [vmem:[#allocation2 + $0xb0] sm:$0xff] 0.0
      %87 = vst [vmem:[#allocation2 + $0xb8] sm:$0xff] 0.0
      %88 = vst [vmem:[#allocation2 + $0xc0] sm:$0xff] 0.0
      %89 = vst [vmem:[#allocation2 + $0xc8] sm:$0xff] 0.0
      %90 = vst [vmem:[#allocation2 + $0xd0] sm:$0xff] 0.0
      %91 = vst [vmem:[#allocation2 + $0xd8] sm:$0xff] 0.0
      %92 = vst [vmem:[#allocation2 + $0xe0] sm:$0xff] 0.0
      %93 = vst [vmem:[#allocation2 + $0xe8] sm:$0xff] 0.0
      %94 = vst [vmem:[#allocation2 + $0xf0] sm:$0xff] 0.0
      %95 = vst [vmem:[#allocation2 + $0xf8] sm:$0xff] 0.0
      %96 = vst [vmem:[#allocation2 + $0x100] sm:$0xff] 0.0
      %97 = vst [vmem:[#allocation2 + $0x108] sm:$0xff] 0.0
      %98 = vst [vmem:[#allocation2 + $0x110] sm:$0xff] 0.0
      %99 = vst [vmem:[#allocation2 + $0x118] sm:$0xff] 0.0
      %100 = vst [vmem:[#allocation2 + $0x120] sm:$0xff] 0.0
      %101 = vst [vmem:[#allocation2 + $0x128] sm:$0xff] 0.0
      %102 = vst [vmem:[#allocation2 + $0x130] sm:$0xff] 0.0
      %103 = vst [vmem:[#allocation2 + $0x138] sm:$0xff] 0.0
      %104 = vst [vmem:[#allocation2 + $0x140] sm:$0xff] 0.0
      %105 = vst [vmem:[#allocation2 + $0x148] sm:$0xff] 0.0
      %106 = vst [vmem:[#allocation2 + $0x150] sm:$0xff] 0.0
      %107 = vst [vmem:[#allocation2 + $0x158] sm:$0xff] 0.0
      %108 = vst [vmem:[#allocation2 + $0x160] sm:$0xff] 0.0
      %109 = vst [vmem:[#allocation2 + $0x168] sm:$0xff] 0.0
      %110 = vst [vmem:[#allocation2 + $0x170] sm:$0xff] 0.0
      %111 = vst [vmem:[#allocation2 + $0x178] sm:$0xff] 0.0
      %112 = vst [vmem:[#allocation2 + $0x180] sm:$0xff] 0.0
      %113 = vst [vmem:[#allocation2 + $0x188] sm:$0xff] 0.0
      %114 = vst [vmem:[#allocation2 + $0x190] sm:$0xff] 0.0
      %115 = vst [vmem:[#allocation2 + $0x198] sm:$0xff] 0.0
      %116 = vst [vmem:[#allocation2 + $0x1a0] sm:$0xff] 0.0
      %117 = vst [vmem:[#allocation2 + $0x1a8] sm:$0xff] 0.0
      %118 = vst [vmem:[#allocation2 + $0x1b0] sm:$0xff] 0.0
      %119 = vst [vmem:[#allocation2 + $0x1b8] sm:$0xff] 0.0
      %120 = vst [vmem:[#allocation2 + $0x1c0] sm:$0xff] 0.0
      %121 = vst [vmem:[#allocation2 + $0x1c8] sm:$0xff] 0.0
      %122 = vst [vmem:[#allocation2 + $0x1d0] sm:$0xff] 0.0
      %123 = vst [vmem:[#allocation2 + $0x1d8] sm:$0xff] 0.0
      %124 = vst [vmem:[#allocation2 + $0x1e0] sm:$0xff] 0.0
      %125 = vst [vmem:[#allocation2 + $0x1e8] sm:$0xff] 0.0
      %126 = vst [vmem:[#allocation2 + $0x1f0] sm:$0xff] 0.0
      %127 = vst [vmem:[#allocation2 + $0x1f8] sm:$0xff] 0.0
      %128 = vst [vmem:[#allocation2 + $0x200] sm:$0xff] 0.0
      %129 = vst [vmem:[#allocation2 + $0x208] sm:$0xff] 0.0
      %130 = vst [vmem:[#allocation2 + $0x210] sm:$0xff] 0.0
      %131 = vst [vmem:[#allocation2 + $0x218] sm:$0xff] 0.0
      %132 = vst [vmem:[#allocation2 + $0x220] sm:$0xff] 0.0
      %133 = vst [vmem:[#allocation2 + $0x228] sm:$0xff] 0.0
      %134 = vst [vmem:[#allocation2 + $0x230] sm:$0xff] 0.0
      %135 = vst [vmem:[#allocation2 + $0x238] sm:$0xff] 0.0
      %136 = vst [vmem:[#allocation2 + $0x240] sm:$0xff] 0.0
      %137 = vst [vmem:[#allocation2 + $0x248] sm:$0xff] 0.0
      %138 = vst [vmem:[#allocation2 + $0x250] sm:$0xff] 0.0
      %139 = vst [vmem:[#allocation2 + $0x258] sm:$0xff] 0.0
      %140 = vst [vmem:[#allocation2 + $0x260] sm:$0xff] 0.0
      %141 = vst [vmem:[#allocation2 + $0x268] sm:$0xff] 0.0
      %142 = vst [vmem:[#allocation2 + $0x270] sm:$0xff] 0.0
      %143 = vst [vmem:[#allocation2 + $0x278] sm:$0xff] 0.0
      %144 = vst [vmem:[#allocation2 + $0x280] sm:$0xff] 0.0
      %145 = vst [vmem:[#allocation2 + $0x288] sm:$0xff] 0.0
      %146 = vst [vmem:[#allocation2 + $0x290] sm:$0xff] 0.0
      %147 = vst [vmem:[#allocation2 + $0x298] sm:$0xff] 0.0
      %148 = vst [vmem:[#allocation2 + $0x2a0] sm:$0xff] 0.0
      %149 = vst [vmem:[#allocation2 + $0x2a8] sm:$0xff] 0.0
      %150 = vst [vmem:[#allocation2 + $0x2b0] sm:$0xff] 0.0
      %151 = vst [vmem:[#allocation2 + $0x2b8] sm:$0xff] 0.0
      %152 = vst [vmem:[#allocation2 + $0x2c0] sm:$0xff] 0.0
      %153 = vst [vmem:[#allocation2 + $0x2c8] sm:$0xff] 0.0
      %154 = vst [vmem:[#allocation2 + $0x2d0] sm:$0xff] 0.0
      %155 = vst [vmem:[#allocation2 + $0x2d8] sm:$0xff] 0.0
      %156 = vst [vmem:[#allocation2 + $0x2e0] sm:$0xff] 0.0
      %157 = vst [vmem:[#allocation2 + $0x2e8] sm:$0xff] 0.0
      %158 = vst [vmem:[#allocation2 + $0x2f0] sm:$0xff] 0.0
      %159 = vst [vmem:[#allocation2 + $0x2f8] sm:$0xff] 0.0
      %160 = vst [vmem:[#allocation2 + $0x300] sm:$0xff] 0.0
      %161 = vst [vmem:[#allocation2 + $0x308] sm:$0xff] 0.0
      %162 = vst [vmem:[#allocation2 + $0x310] sm:$0xff] 0.0
      %163 = vst [vmem:[#allocation2 + $0x318] sm:$0xff] 0.0
      %164 = vst [vmem:[#allocation2 + $0x320] sm:$0xff] 0.0
      %165 = vst [vmem:[#allocation2 + $0x328] sm:$0xff] 0.0
      %166 = vst [vmem:[#allocation2 + $0x330] sm:$0xff] 0.0
      %167 = vst [vmem:[#allocation2 + $0x338] sm:$0xff] 0.0
      %168 = vst [vmem:[#allocation2 + $0x340] sm:$0xff] 0.0
      %169 = vst [vmem:[#allocation2 + $0x348] sm:$0xff] 0.0
      %170 = vst [vmem:[#allocation2 + $0x350] sm:$0xff] 0.0
      %171 = vst [vmem:[#allocation2 + $0x358] sm:$0xff] 0.0
      %172 = vst [vmem:[#allocation2 + $0x360] sm:$0xff] 0.0
      %173 = vst [vmem:[#allocation2 + $0x368] sm:$0xff] 0.0
      %174 = vst [vmem:[#allocation2 + $0x370] sm:$0xff] 0.0
      %175 = vst [vmem:[#allocation2 + $0x378] sm:$0xff] 0.0
      %176 = vst [vmem:[#allocation2 + $0x380] sm:$0xff] 0.0
      %177 = vst [vmem:[#allocation2 + $0x388] sm:$0xff] 0.0
      %178 = vst [vmem:[#allocation2 + $0x390] sm:$0xff] 0.0
      %179 = vst [vmem:[#allocation2 + $0x398] sm:$0xff] 0.0
      %180 = vst [vmem:[#allocation2 + $0x3a0] sm:$0xff] 0.0
      %181 = vst [vmem:[#allocation2 + $0x3a8] sm:$0xff] 0.0
      %182 = vst [vmem:[#allocation2 + $0x3b0] sm:$0xff] 0.0
      %183 = vst [vmem:[#allocation2 + $0x3b8] sm:$0xff] 0.0
      %184 = vst [vmem:[#allocation2 + $0x3c0] sm:$0xff] 0.0
      %185 = vst [vmem:[#allocation2 + $0x3c8] sm:$0xff] 0.0
      %186 = vst [vmem:[#allocation2 + $0x3d0] sm:$0xff] 0.0
      %187 = vst [vmem:[#allocation2 + $0x3d8] sm:$0xff] 0.0
      %188 = vst [vmem:[#allocation2 + $0x3e0] sm:$0xff] 0.0
      %189 = vst [vmem:[#allocation2 + $0x3e8] sm:$0xff] 0.0
      %190 = vst [vmem:[#allocation2 + $0x3f0] sm:$0xff] 0.0
      %191 = vst [vmem:[#allocation2 + $0x3f8] sm:$0xff] 0.0
      %192 = vst [vmem:[#allocation2 + $0x400] sm:$0xff] 0.0
      %193 = vst [vmem:[#allocation2 + $0x408] sm:$0xff] 0.0
      %194 = vst [vmem:[#allocation2 + $0x410] sm:$0xff] 0.0
      %195 = vst [vmem:[#allocation2 + $0x418] sm:$0xff] 0.0
      %196 = vst [vmem:[#allocation2 + $0x420] sm:$0xff] 0.0
      %197 = vst [vmem:[#allocation2 + $0x428] sm:$0xff] 0.0
      %198 = vst [vmem:[#allocation2 + $0x430] sm:$0xff] 0.0
      %199 = vst [vmem:[#allocation2 + $0x438] sm:$0xff] 0.0
      %200 = vst [vmem:[#allocation2 + $0x440] sm:$0xff] 0.0
      %201 = vst [vmem:[#allocation2 + $0x448] sm:$0xff] 0.0
      %202 = vst [vmem:[#allocation2 + $0x450] sm:$0xff] 0.0
      %203 = vst [vmem:[#allocation2 + $0x458] sm:$0xff] 0.0
      %204 = vst [vmem:[#allocation2 + $0x460] sm:$0xff] 0.0
      %205 = vst [vmem:[#allocation2 + $0x468] sm:$0xff] 0.0
      %206 = vst [vmem:[#allocation2 + $0x470] sm:$0xff] 0.0
      %207 = vst [vmem:[#allocation2 + $0x478] sm:$0xff] 0.0
      %208 = vst [vmem:[#allocation2 + $0x480] sm:$0xff] 0.0
      %209 = vst [vmem:[#allocation2 + $0x488] sm:$0xff] 0.0
      %210 = vst [vmem:[#allocation2 + $0x490] sm:$0xff] 0.0
      %211 = vst [vmem:[#allocation2 + $0x498] sm:$0xff] 0.0
      %212 = vst [vmem:[#allocation2 + $0x4a0] sm:$0xff] 0.0
      %213 = vst [vmem:[#allocation2 + $0x4a8] sm:$0xff] 0.0
      %214 = vst [vmem:[#allocation2 + $0x4b0] sm:$0xff] 0.0
      %215 = vst [vmem:[#allocation2 + $0x4b8] sm:$0xff] 0.0
      %216 = vst [vmem:[#allocation2 + $0x4c0] sm:$0xff] 0.0
      %217 = vst [vmem:[#allocation2 + $0x4c8] sm:$0xff] 0.0
      %218 = vst [vmem:[#allocation2 + $0x4d0] sm:$0xff] 0.0
      %219 = vst [vmem:[#allocation2 + $0x4d8] sm:$0xff] 0.0
      %220 = vst [vmem:[#allocation2 + $0x4e0] sm:$0xff] 0.0
      %221 = vst [vmem:[#allocation2 + $0x4e8] sm:$0xff] 0.0
      %222 = vst [vmem:[#allocation2 + $0x4f0] sm:$0xff] 0.0
      %223 = vst [vmem:[#allocation2 + $0x4f8] sm:$0xff] 0.0
      %224 = vst [vmem:[#allocation2 + $0x500] sm:$0xff] 0.0
      %225 = vst [vmem:[#allocation2 + $0x508] sm:$0xff] 0.0
      %226 = vst [vmem:[#allocation2 + $0x510] sm:$0xff] 0.0
      %227 = vst [vmem:[#allocation2 + $0x518] sm:$0xff] 0.0
      %228 = vst [vmem:[#allocation2 + $0x520] sm:$0xff] 0.0
      %229 = vst [vmem:[#allocation2 + $0x528] sm:$0xff] 0.0
      %230 = vst [vmem:[#allocation2 + $0x530] sm:$0xff] 0.0
      %231 = vst [vmem:[#allocation2 + $0x538] sm:$0xff] 0.0
      %232 = vst [vmem:[#allocation2 + $0x540] sm:$0xff] 0.0
      %233 = vst [vmem:[#allocation2 + $0x548] sm:$0xff] 0.0
      %234 = vst [vmem:[#allocation2 + $0x550] sm:$0xff] 0.0
      %235 = vst [vmem:[#allocation2 + $0x558] sm:$0xff] 0.0
      %236 = vst [vmem:[#allocation2 + $0x560] sm:$0xff] 0.0
      %237 = vst [vmem:[#allocation2 + $0x568] sm:$0xff] 0.0
      %238 = vst [vmem:[#allocation2 + $0x570] sm:$0xff] 0.0
      %239 = vst [vmem:[#allocation2 + $0x578] sm:$0xff] 0.0
      %240 = vst [vmem:[#allocation2 + $0x580] sm:$0xff] 0.0
      %241 = vst [vmem:[#allocation2 + $0x588] sm:$0xff] 0.0
      %242 = vst [vmem:[#allocation2 + $0x590] sm:$0xff] 0.0
      %243 = vst [vmem:[#allocation2 + $0x598] sm:$0xff] 0.0
      %244 = vst [vmem:[#allocation2 + $0x5a0] sm:$0xff] 0.0
      %245 = vst [vmem:[#allocation2 + $0x5a8] sm:$0xff] 0.0
      %246 = vst [vmem:[#allocation2 + $0x5b0] sm:$0xff] 0.0
      %247 = vst [vmem:[#allocation2 + $0x5b8] sm:$0xff] 0.0
      %248 = vst [vmem:[#allocation2 + $0x5c0] sm:$0xff] 0.0
      %249 = vst [vmem:[#allocation2 + $0x5c8] sm:$0xff] 0.0
      %250 = vst [vmem:[#allocation2 + $0x5d0] sm:$0xff] 0.0
      %251 = vst [vmem:[#allocation2 + $0x5d8] sm:$0xff] 0.0
      %252 = vst [vmem:[#allocation2 + $0x5e0] sm:$0xff] 0.0
      %253 = vst [vmem:[#allocation2 + $0x5e8] sm:$0xff] 0.0
      %254 = vst [vmem:[#allocation2 + $0x5f0] sm:$0xff] 0.0
      %255 = vst [vmem:[#allocation2 + $0x5f8] sm:$0xff] 0.0
      %256 = vst [vmem:[#allocation2 + $0x600] sm:$0xff] 0.0
      %257 = vst [vmem:[#allocation2 + $0x608] sm:$0xff] 0.0
      %258 = vst [vmem:[#allocation2 + $0x610] sm:$0xff] 0.0
      %259 = vst [vmem:[#allocation2 + $0x618] sm:$0xff] 0.0
      %260 = vst [vmem:[#allocation2 + $0x620] sm:$0xff] 0.0
      %261 = vst [vmem:[#allocation2 + $0x628] sm:$0xff] 0.0
      %262 = vst [vmem:[#allocation2 + $0x630] sm:$0xff] 0.0
      %263 = vst [vmem:[#allocation2 + $0x638] sm:$0xff] 0.0
      %264 = vst [vmem:[#allocation2 + $0x640] sm:$0xff] 0.0
      %265 = vst [vmem:[#allocation2 + $0x648] sm:$0xff] 0.0
      %266 = vst [vmem:[#allocation2 + $0x650] sm:$0xff] 0.0
      %267 = vst [vmem:[#allocation2 + $0x658] sm:$0xff] 0.0
      %268 = vst [vmem:[#allocation2 + $0x660] sm:$0xff] 0.0
      %269 = vst [vmem:[#allocation2 + $0x668] sm:$0xff] 0.0
      %270 = vst [vmem:[#allocation2 + $0x670] sm:$0xff] 0.0
      %271 = vst [vmem:[#allocation2 + $0x678] sm:$0xff] 0.0
      %272 = vst [vmem:[#allocation2 + $0x680] sm:$0xff] 0.0
      %273 = vst [vmem:[#allocation2 + $0x688] sm:$0xff] 0.0
      %274 = vst [vmem:[#allocation2 + $0x690] sm:$0xff] 0.0
      %275 = vst [vmem:[#allocation2 + $0x698] sm:$0xff] 0.0
      %276 = vst [vmem:[#allocation2 + $0x6a0] sm:$0xff] 0.0
      %277 = vst [vmem:[#allocation2 + $0x6a8] sm:$0xff] 0.0
      %278 = vst [vmem:[#allocation2 + $0x6b0] sm:$0xff] 0.0
      %279 = vst [vmem:[#allocation2 + $0x6b8] sm:$0xff] 0.0
      %280 = vst [vmem:[#allocation2 + $0x6c0] sm:$0xff] 0.0
      %281 = vst [vmem:[#allocation2 + $0x6c8] sm:$0xff] 0.0
      %282 = vst [vmem:[#allocation2 + $0x6d0] sm:$0xff] 0.0
      %283 = vst [vmem:[#allocation2 + $0x6d8] sm:$0xff] 0.0
      %284 = vst [vmem:[#allocation2 + $0x6e0] sm:$0xff] 0.0
      %285 = vst [vmem:[#allocation2 + $0x6e8] sm:$0xff] 0.0
      %286 = vst [vmem:[#allocation2 + $0x6f0] sm:$0xff] 0.0
      %287 = vst [vmem:[#allocation2 + $0x6f8] sm:$0xff] 0.0
      %288 = vst [vmem:[#allocation2 + $0x700] sm:$0xff] 0.0
      %289 = vst [vmem:[#allocation2 + $0x708] sm:$0xff] 0.0
      %290 = vst [vmem:[#allocation2 + $0x710] sm:$0xff] 0.0
      %291 = vst [vmem:[#allocation2 + $0x718] sm:$0xff] 0.0
      %292 = vst [vmem:[#allocation2 + $0x720] sm:$0xff] 0.0
      %293 = vst [vmem:[#allocation2 + $0x728] sm:$0xff] 0.0
      %294 = vst [vmem:[#allocation2 + $0x730] sm:$0xff] 0.0
      %295 = vst [vmem:[#allocation2 + $0x738] sm:$0xff] 0.0
      %296 = vst [vmem:[#allocation2 + $0x740] sm:$0xff] 0.0
      %297 = vst [vmem:[#allocation2 + $0x748] sm:$0xff] 0.0
      %298 = vst [vmem:[#allocation2 + $0x750] sm:$0xff] 0.0
      %299 = vst [vmem:[#allocation2 + $0x758] sm:$0xff] 0.0
      %300 = vst [vmem:[#allocation2 + $0x760] sm:$0xff] 0.0
      %301 = vst [vmem:[#allocation2 + $0x768] sm:$0xff] 0.0
      %302 = vst [vmem:[#allocation2 + $0x770] sm:$0xff] 0.0
      %303 = vst [vmem:[#allocation2 + $0x778] sm:$0xff] 0.0
      %304 = vst [vmem:[#allocation2 + $0x780] sm:$0xff] 0.0
      %305 = vst [vmem:[#allocation2 + $0x788] sm:$0xff] 0.0
      %306 = vst [vmem:[#allocation2 + $0x790] sm:$0xff] 0.0
      %307 = vst [vmem:[#allocation2 + $0x798] sm:$0xff] 0.0
      %308 = vst [vmem:[#allocation2 + $0x7a0] sm:$0xff] 0.0
      %309 = vst [vmem:[#allocation2 + $0x7a8] sm:$0xff] 0.0
      %310 = vst [vmem:[#allocation2 + $0x7b0] sm:$0xff] 0.0
      %311 = vst [vmem:[#allocation2 + $0x7b8] sm:$0xff] 0.0
      %312 = vst [vmem:[#allocation2 + $0x7c0] sm:$0xff] 0.0
      %313 = vst [vmem:[#allocation2 + $0x7c8] sm:$0xff] 0.0
      %314 = vst [vmem:[#allocation2 + $0x7d0] sm:$0xff] 0.0
      %315 = vst [vmem:[#allocation2 + $0x7d8] sm:$0xff] 0.0
      %316 = vst [vmem:[#allocation2 + $0x7e0] sm:$0xff] 0.0
      %317 = vst [vmem:[#allocation2 + $0x7e8] sm:$0xff] 0.0
      %318 = vst [vmem:[#allocation2 + $0x7f0] sm:$0xff] 0.0
      %319 = vst [vmem:[#allocation2 + $0x7f8] sm:$0xff] 0.0
      %320 = vst [vmem:[#allocation2 + $0x800] sm:$0xff] 0.0
      %321 = vst [vmem:[#allocation2 + $0x808] sm:$0xff] 0.0
      %322 = vst [vmem:[#allocation2 + $0x810] sm:$0xff] 0.0
      %323 = vst [vmem:[#allocation2 + $0x818] sm:$0xff] 0.0
      %324 = vst [vmem:[#allocation2 + $0x820] sm:$0xff] 0.0
      %325 = vst [vmem:[#allocation2 + $0x828] sm:$0xff] 0.0
      %326 = vst [vmem:[#allocation2 + $0x830] sm:$0xff] 0.0
      %327 = vst [vmem:[#allocation2 + $0x838] sm:$0xff] 0.0
      %328 = vst [vmem:[#allocation2 + $0x840] sm:$0xff] 0.0
      %329 = vst [vmem:[#allocation2 + $0x848] sm:$0xff] 0.0
      %330 = vst [vmem:[#allocation2 + $0x850] sm:$0xff] 0.0
      %331 = vst [vmem:[#allocation2 + $0x858] sm:$0xff] 0.0
      %332 = vst [vmem:[#allocation2 + $0x860] sm:$0xff] 0.0
      %333 = vst [vmem:[#allocation2 + $0x868] sm:$0xff] 0.0
      %334 = vst [vmem:[#allocation2 + $0x870] sm:$0xff] 0.0
      %335 = vst [vmem:[#allocation2 + $0x878] sm:$0xff] 0.0
      %336 = vst [vmem:[#allocation2 + $0x880] sm:$0xff] 0.0
      %337 = vst [vmem:[#allocation2 + $0x888] sm:$0xff] 0.0
      %338 = vst [vmem:[#allocation2 + $0x890] sm:$0xff] 0.0
      %339 = vst [vmem:[#allocation2 + $0x898] sm:$0xff] 0.0
      %340 = vst [vmem:[#allocation2 + $0x8a0] sm:$0xff] 0.0
      %341 = vst [vmem:[#allocation2 + $0x8a8] sm:$0xff] 0.0
      %342 = vst [vmem:[#allocation2 + $0x8b0] sm:$0xff] 0.0
      %343 = vst [vmem:[#allocation2 + $0x8b8] sm:$0xff] 0.0
      %344 = vst [vmem:[#allocation2 + $0x8c0] sm:$0xff] 0.0
      %345 = vst [vmem:[#allocation2 + $0x8c8] sm:$0xff] 0.0
      %346 = vst [vmem:[#allocation2 + $0x8d0] sm:$0xff] 0.0
      %347 = vst [vmem:[#allocation2 + $0x8d8] sm:$0xff] 0.0
      %348 = vst [vmem:[#allocation2 + $0x8e0] sm:$0xff] 0.0
      %349 = vst [vmem:[#allocation2 + $0x8e8] sm:$0xff] 0.0
      %350 = vst [vmem:[#allocation2 + $0x8f0] sm:$0xff] 0.0
      %351 = vst [vmem:[#allocation2 + $0x8f8] sm:$0xff] 0.0
      %352 = vst [vmem:[#allocation2 + $0x900] sm:$0xff] 0.0
      %353 = vst [vmem:[#allocation2 + $0x908] sm:$0xff] 0.0
      %354 = vst [vmem:[#allocation2 + $0x910] sm:$0xff] 0.0
      %355 = vst [vmem:[#allocation2 + $0x918] sm:$0xff] 0.0
      %356 = vst [vmem:[#allocation2 + $0x920] sm:$0xff] 0.0
      %357 = vst [vmem:[#allocation2 + $0x928] sm:$0xff] 0.0
      %358 = vst [vmem:[#allocation2 + $0x930] sm:$0xff] 0.0
      %359 = vst [vmem:[#allocation2 + $0x938] sm:$0xff] 0.0
      %360 = vst [vmem:[#allocation2 + $0x940] sm:$0xff] 0.0
      %361 = vst [vmem:[#allocation2 + $0x948] sm:$0xff] 0.0
      %362 = vst [vmem:[#allocation2 + $0x950] sm:$0xff] 0.0
      %363 = vst [vmem:[#allocation2 + $0x958] sm:$0xff] 0.0
      %364 = vst [vmem:[#allocation2 + $0x960] sm:$0xff] 0.0
      %365 = vst [vmem:[#allocation2 + $0x968] sm:$0xff] 0.0
      %366 = vst [vmem:[#allocation2 + $0x970] sm:$0xff] 0.0
      %367 = vst [vmem:[#allocation2 + $0x978] sm:$0xff] 0.0
      %368 = vst [vmem:[#allocation2 + $0x980] sm:$0xff] 0.0
      %369 = vst [vmem:[#allocation2 + $0x988] sm:$0xff] 0.0
      %370 = vst [vmem:[#allocation2 + $0x990] sm:$0xff] 0.0
      %371 = vst [vmem:[#allocation2 + $0x998] sm:$0xff] 0.0
      %372 = vst [vmem:[#allocation2 + $0x9a0] sm:$0xff] 0.0
      %373 = vst [vmem:[#allocation2 + $0x9a8] sm:$0xff] 0.0
      %374 = vst [vmem:[#allocation2 + $0x9b0] sm:$0xff] 0.0
      %375 = vst [vmem:[#allocation2 + $0x9b8] sm:$0xff] 0.0
      %376 = vst [vmem:[#allocation2 + $0x9c0] sm:$0xff] 0.0
      %377 = vst [vmem:[#allocation2 + $0x9c8] sm:$0xff] 0.0
      %378 = vst [vmem:[#allocation2 + $0x9d0] sm:$0xff] 0.0
      %379 = vst [vmem:[#allocation2 + $0x9d8] sm:$0xff] 0.0
      %380 = vst [vmem:[#allocation2 + $0x9e0] sm:$0xff] 0.0
      %381 = vst [vmem:[#allocation2 + $0x9e8] sm:$0xff] 0.0
      %382 = vst [vmem:[#allocation2 + $0x9f0] sm:$0xff] 0.0
      %383 = vst [vmem:[#allocation2 + $0x9f8] sm:$0xff] 0.0
      %384 = vst [vmem:[#allocation2 + $0xa00] sm:$0xff] 0.0
      %385 = vst [vmem:[#allocation2 + $0xa08] sm:$0xff] 0.0
      %386 = vst [vmem:[#allocation2 + $0xa10] sm:$0xff] 0.0
      %387 = vst [vmem:[#allocation2 + $0xa18] sm:$0xff] 0.0
      %388 = vst [vmem:[#allocation2 + $0xa20] sm:$0xff] 0.0
      %389 = vst [vmem:[#allocation2 + $0xa28] sm:$0xff] 0.0
      %390 = vst [vmem:[#allocation2 + $0xa30] sm:$0xff] 0.0
      %391 = vst [vmem:[#allocation2 + $0xa38] sm:$0xff] 0.0
      %392 = vst [vmem:[#allocation2 + $0xa40] sm:$0xff] 0.0
      %393 = vst [vmem:[#allocation2 + $0xa48] sm:$0xff] 0.0
      %394 = vst [vmem:[#allocation2 + $0xa50] sm:$0xff] 0.0
      %395 = vst [vmem:[#allocation2 + $0xa58] sm:$0xff] 0.0
      %396 = vst [vmem:[#allocation2 + $0xa60] sm:$0xff] 0.0
      %397 = vst [vmem:[#allocation2 + $0xa68] sm:$0xff] 0.0
      %398 = vst [vmem:[#allocation2 + $0xa70] sm:$0xff] 0.0
      %399 = vst [vmem:[#allocation2 + $0xa78] sm:$0xff] 0.0
      %400 = vst [vmem:[#allocation2 + $0xa80] sm:$0xff] 0.0
      %401 = vst [vmem:[#allocation2 + $0xa88] sm:$0xff] 0.0
      %402 = vst [vmem:[#allocation2 + $0xa90] sm:$0xff] 0.0
      %403 = vst [vmem:[#allocation2 + $0xa98] sm:$0xff] 0.0
      %404 = vst [vmem:[#allocation2 + $0xaa0] sm:$0xff] 0.0
      %405 = vst [vmem:[#allocation2 + $0xaa8] sm:$0xff] 0.0
      %406 = vst [vmem:[#allocation2 + $0xab0] sm:$0xff] 0.0
      %407 = vst [vmem:[#allocation2 + $0xab8] sm:$0xff] 0.0
      %408 = vst [vmem:[#allocation2 + $0xac0] sm:$0xff] 0.0
      %409 = vst [vmem:[#allocation2 + $0xac8] sm:$0xff] 0.0
      %410 = vst [vmem:[#allocation2 + $0xad0] sm:$0xff] 0.0
      %411 = vst [vmem:[#allocation2 + $0xad8] sm:$0xff] 0.0
      %412 = vst [vmem:[#allocation2 + $0xae0] sm:$0xff] 0.0
      %413 = vst [vmem:[#allocation2 + $0xae8] sm:$0xff] 0.0
      %414 = vst [vmem:[#allocation2 + $0xaf0] sm:$0xff] 0.0
      %415 = vst [vmem:[#allocation2 + $0xaf8] sm:$0xff] 0.0
      %416 = vst [vmem:[#allocation2 + $0xb00] sm:$0xff] 0.0
      %417 = vst [vmem:[#allocation2 + $0xb08] sm:$0xff] 0.0
      %418 = vst [vmem:[#allocation2 + $0xb10] sm:$0xff] 0.0
      %419 = vst [vmem:[#allocation2 + $0xb18] sm:$0xff] 0.0
      %420 = vst [vmem:[#allocation2 + $0xb20] sm:$0xff] 0.0
      %421 = vst [vmem:[#allocation2 + $0xb28] sm:$0xff] 0.0
      %422 = vst [vmem:[#allocation2 + $0xb30] sm:$0xff] 0.0
      %423 = vst [vmem:[#allocation2 + $0xb38] sm:$0xff] 0.0
      %424 = vst [vmem:[#allocation2 + $0xb40] sm:$0xff] 0.0
      %425 = vst [vmem:[#allocation2 + $0xb48] sm:$0xff] 0.0
      %426 = vst [vmem:[#allocation2 + $0xb50] sm:$0xff] 0.0
      %427 = vst [vmem:[#allocation2 + $0xb58] sm:$0xff] 0.0
      %428 = vst [vmem:[#allocation2 + $0xb60] sm:$0xff] 0.0
      %429 = vst [vmem:[#allocation2 + $0xb68] sm:$0xff] 0.0
      %430 = vst [vmem:[#allocation2 + $0xb70] sm:$0xff] 0.0
      %431 = vst [vmem:[#allocation2 + $0xb78] sm:$0xff] 0.0
      %432 = vst [vmem:[#allocation2 + $0xb80] sm:$0xff] 0.0
      %433 = vst [vmem:[#allocation2 + $0xb88] sm:$0xff] 0.0
      %434 = vst [vmem:[#allocation2 + $0xb90] sm:$0xff] 0.0
      %435 = vst [vmem:[#allocation2 + $0xb98] sm:$0xff] 0.0
      %436 = vst [vmem:[#allocation2 + $0xba0] sm:$0xff] 0.0
      %437 = vst [vmem:[#allocation2 + $0xba8] sm:$0xff] 0.0
      %438 = vst [vmem:[#allocation2 + $0xbb0] sm:$0xff] 0.0
      %439 = vst [vmem:[#allocation2 + $0xbb8] sm:$0xff] 0.0
      %440 = vst [vmem:[#allocation2 + $0xbc0] sm:$0xff] 0.0
      %441 = vst [vmem:[#allocation2 + $0xbc8] sm:$0xff] 0.0
      %442 = vst [vmem:[#allocation2 + $0xbd0] sm:$0xff] 0.0
      %443 = vst [vmem:[#allocation2 + $0xbd8] sm:$0xff] 0.0
      %444 = vst [vmem:[#allocation2 + $0xbe0] sm:$0xff] 0.0
      %445 = vst [vmem:[#allocation2 + $0xbe8] sm:$0xff] 0.0
      %446 = vst [vmem:[#allocation2 + $0xbf0] sm:$0xff] 0.0
      %447 = vst [vmem:[#allocation2 + $0xbf8] sm:$0xff] 0.0
    $region29: #{tpu_custom_call.1} parent=1 // pred_fallthru
      _
    %v448 = vld [vmem:[#allocation2] sm:$0xff]
    %v449 = vld [vmem:[#allocation2 + $0x8] sm:$0xff]
    %v450 = vld [vmem:[#allocation2 + $0x10] sm:$0xff]
    %v451 = vld [vmem:[#allocation2 + $0x18] sm:$0xff]
    %v452 = vld [vmem:[#allocation2 + $0x20] sm:$0xff]
    %v453 = vld [vmem:[#allocation2 + $0x28] sm:$0xff]
    %v454 = vld [vmem:[#allocation2 + $0x30] sm:$0xff]
    %v455 = vld [vmem:[#allocation2 + $0x38] sm:$0xff]
    %v456 = vld [vmem:[#allocation2 + $0x40] sm:$0xff]
    %v457 = vld [vmem:[#allocation2 + $0x48] sm:$0xff]
    %v458 = vld [vmem:[#allocation2 + $0x50] sm:$0xff]
    %v459 = vld [vmem:[#allocation2 + $0x58] sm:$0xff]
    %v460 = vld [vmem:[#allocation2 + $0x60] sm:$0xff]
    %v461 = vld [vmem:[#allocation2 + $0x68] sm:$0xff]
    %v462 = vld [vmem:[#allocation2 + $0x70] sm:$0xff]
    %v463 = vld [vmem:[#allocation2 + $0x78] sm:$0xff]
    %v464 = vld [vmem:[#allocation2 + $0x80] sm:$0xff]
    %v465 = vld [vmem:[#allocation2 + $0x88] sm:$0xff]
    %v466 = vld [vmem:[#allocation2 + $0x90] sm:$0xff]
    %v467 = vld [vmem:[#allocation2 + $0x98] sm:$0xff]
    %v468 = vld [vmem:[#allocation2 + $0xa0] sm:$0xff]
    %v469 = vld [vmem:[#allocation2 + $0xa8] sm:$0xff]
    %v470 = vld [vmem:[#allocation2 + $0xb0] sm:$0xff]
    %v471 = vld [vmem:[#allocation2 + $0xb8] sm:$0xff]
    %v472 = vld [vmem:[#allocation2 + $0xc0] sm:$0xff]
    %v473 = vld [vmem:[#allocation2 + $0xc8] sm:$0xff]
    %v474 = vld [vmem:[#allocation2 + $0xd0] sm:$0xff]
    %v475 = vld [vmem:[#allocation2 + $0xd8] sm:$0xff]
    %v476 = vld [vmem:[#allocation2 + $0xe0] sm:$0xff]
    %v477 = vld [vmem:[#allocation2 + $0xe8] sm:$0xff]
    %v478 = vld [vmem:[#allocation2 + $0xf0] sm:$0xff]
    %v479 = vld [vmem:[#allocation2 + $0xf8] sm:$0xff]
    %v480 = vld [vmem:[#allocation2 + $0x100] sm:$0xff]
    %v481 = vld [vmem:[#allocation2 + $0x108] sm:$0xff]
    %v482 = vld [vmem:[#allocation2 + $0x110] sm:$0xff]
    %v483 = vld [vmem:[#allocation2 + $0x118] sm:$0xff]
    %v484 = vld [vmem:[#allocation2 + $0x120] sm:$0xff]
    %v485 = vld [vmem:[#allocation2 + $0x128] sm:$0xff]
    %v486 = vld [vmem:[#allocation2 + $0x130] sm:$0xff]
    %v487 = vld [vmem:[#allocation2 + $0x138] sm:$0xff]
    %v488 = vld [vmem:[#allocation2 + $0x140] sm:$0xff]
    %v489 = vld [vmem:[#allocation2 + $0x148] sm:$0xff]
    %v490 = vld [vmem:[#allocation2 + $0x150] sm:$0xff]
    %v491 = vld [vmem:[#allocation2 + $0x158] sm:$0xff]
    %v492 = vld [vmem:[#allocation2 + $0x160] sm:$0xff]
    %v493 = vld [vmem:[#allocation2 + $0x168] sm:$0xff]
    %v494 = vld [vmem:[#allocation2 + $0x170] sm:$0xff]
    %v495 = vld [vmem:[#allocation2 + $0x178] sm:$0xff]
    %v496 = vld [vmem:[#allocation2 + $0x180] sm:$0xff]
    %v497 = vld [vmem:[#allocation2 + $0x188] sm:$0xff]
    %v498 = vld [vmem:[#allocation2 + $0x190] sm:$0xff]
    %v499 = vld [vmem:[#allocation2 + $0x198] sm:$0xff]
    %v500 = vld [vmem:[#allocation2 + $0x1a0] sm:$0xff]
    %v501 = vld [vmem:[#allocation2 + $0x1a8] sm:$0xff]
    %v502 = vld [vmem:[#allocation2 + $0x1b0] sm:$0xff]
    %v503 = vld [vmem:[#allocation2 + $0x1b8] sm:$0xff]
    %v504 = vld [vmem:[#allocation2 + $0x1c0] sm:$0xff]
    %v505 = vld [vmem:[#allocation2 + $0x1c8] sm:$0xff]
    %v506 = vld [vmem:[#allocation2 + $0x1d0] sm:$0xff]
    %v507 = vld [vmem:[#allocation2 + $0x1d8] sm:$0xff]
    %v508 = vld [vmem:[#allocation2 + $0x1e0] sm:$0xff]
    %v509 = vld [vmem:[#allocation2 + $0x1e8] sm:$0xff]
    %v510 = vld [vmem:[#allocation2 + $0x1f0] sm:$0xff]
    %v511 = vld [vmem:[#allocation2 + $0x1f8] sm:$0xff]
    %v512 = vld [vmem:[#allocation2 + $0x200] sm:$0xff]
    %v513 = vld [vmem:[#allocation2 + $0x208] sm:$0xff]
    %v514 = vld [vmem:[#allocation2 + $0x210] sm:$0xff]
    %v515 = vld [vmem:[#allocation2 + $0x218] sm:$0xff]
    %v516 = vld [vmem:[#allocation2 + $0x220] sm:$0xff]
    %v517 = vld [vmem:[#allocation2 + $0x228] sm:$0xff]
    %v518 = vld [vmem:[#allocation2 + $0x230] sm:$0xff]
    %v519 = vld [vmem:[#allocation2 + $0x238] sm:$0xff]
    %v520 = vld [vmem:[#allocation2 + $0x240] sm:$0xff]
    %v521 = vld [vmem:[#allocation2 + $0x248] sm:$0xff]
    %v522 = vld [vmem:[#allocation2 + $0x250] sm:$0xff]
    %v523 = vld [vmem:[#allocation2 + $0x258] sm:$0xff]
    %v524 = vld [vmem:[#allocation2 + $0x260] sm:$0xff]
    %v525 = vld [vmem:[#allocation2 + $0x268] sm:$0xff]
    %v526 = vld [vmem:[#allocation2 + $0x270] sm:$0xff]
    %v527 = vld [vmem:[#allocation2 + $0x278] sm:$0xff]
    %v528 = vld [vmem:[#allocation2 + $0x280] sm:$0xff]
    %v529 = vld [vmem:[#allocation2 + $0x288] sm:$0xff]
    %v530 = vld [vmem:[#allocation2 + $0x290] sm:$0xff]
    %v531 = vld [vmem:[#allocation2 + $0x298] sm:$0xff]
    %v532 = vld [vmem:[#allocation2 + $0x2a0] sm:$0xff]
    %v533 = vld [vmem:[#allocation2 + $0x2a8] sm:$0xff]
    %v534 = vld [vmem:[#allocation2 + $0x2b0] sm:$0xff]
    %v535 = vld [vmem:[#allocation2 + $0x2b8] sm:$0xff]
    %v536 = vld [vmem:[#allocation2 + $0x2c0] sm:$0xff]
    %v537 = vld [vmem:[#allocation2 + $0x2c8] sm:$0xff]
    %v538 = vld [vmem:[#allocation2 + $0x2d0] sm:$0xff]
    %v539 = vld [vmem:[#allocation2 + $0x2d8] sm:$0xff]
    %v540 = vld [vmem:[#allocation2 + $0x2e0] sm:$0xff]
    %v541 = vld [vmem:[#allocation2 + $0x2e8] sm:$0xff]
    %v542 = vld [vmem:[#allocation2 + $0x2f0] sm:$0xff]
    %v543 = vld [vmem:[#allocation2 + $0x2f8] sm:$0xff]
    %v544 = vld [vmem:[#allocation2 + $0x300] sm:$0xff]
    %v545 = vld [vmem:[#allocation2 + $0x308] sm:$0xff]
    %v546 = vld [vmem:[#allocation2 + $0x310] sm:$0xff]
    %v547 = vld [vmem:[#allocation2 + $0x318] sm:$0xff]
    %v548 = vld [vmem:[#allocation2 + $0x320] sm:$0xff]
    %v549 = vld [vmem:[#allocation2 + $0x328] sm:$0xff]
    %v550 = vld [vmem:[#allocation2 + $0x330] sm:$0xff]
    %v551 = vld [vmem:[#allocation2 + $0x338] sm:$0xff]
    %v552 = vld [vmem:[#allocation2 + $0x340] sm:$0xff]
    %v553 = vld [vmem:[#allocation2 + $0x348] sm:$0xff]
    %v554 = vld [vmem:[#allocation2 + $0x350] sm:$0xff]
    %v555 = vld [vmem:[#allocation2 + $0x358] sm:$0xff]
    %v556 = vld [vmem:[#allocation2 + $0x360] sm:$0xff]
    %v557 = vld [vmem:[#allocation2 + $0x368] sm:$0xff]
    %v558 = vld [vmem:[#allocation2 + $0x370] sm:$0xff]
    %v559 = vld [vmem:[#allocation2 + $0x378] sm:$0xff]
    %v560 = vld [vmem:[#allocation2 + $0x380] sm:$0xff]
    %v561 = vld [vmem:[#allocation2 + $0x388] sm:$0xff]
    %v562 = vld [vmem:[#allocation2 + $0x390] sm:$0xff]
    %v563 = vld [vmem:[#allocation2 + $0x398] sm:$0xff]
    %v564 = vld [vmem:[#allocation2 + $0x3a0] sm:$0xff]
    %v565 = vld [vmem:[#allocation2 + $0x3a8] sm:$0xff]
    %v566 = vld [vmem:[#allocation2 + $0x3b0] sm:$0xff]
    %v567 = vld [vmem:[#allocation2 + $0x3b8] sm:$0xff]
    %v568 = vld [vmem:[#allocation2 + $0x3c0] sm:$0xff]
    %v569 = vld [vmem:[#allocation2 + $0x3c8] sm:$0xff]
    %v570 = vld [vmem:[#allocation2 + $0x3d0] sm:$0xff]
    %v571 = vld [vmem:[#allocation2 + $0x3d8] sm:$0xff]
    %v572 = vld [vmem:[#allocation2 + $0x3e0] sm:$0xff]
    %v573 = vld [vmem:[#allocation2 + $0x3e8] sm:$0xff]
    %v574 = vld [vmem:[#allocation2 + $0x3f0] sm:$0xff]
    %v575 = vld [vmem:[#allocation2 + $0x3f8] sm:$0xff]
    %v576 = vld [vmem:[#allocation2 + $0x400] sm:$0xff]
    %v577 = vld [vmem:[#allocation2 + $0x408] sm:$0xff]
    %v578 = vld [vmem:[#allocation2 + $0x410] sm:$0xff]
    %v579 = vld [vmem:[#allocation2 + $0x418] sm:$0xff]
    %v580 = vld [vmem:[#allocation2 + $0x420] sm:$0xff]
    %v581 = vld [vmem:[#allocation2 + $0x428] sm:$0xff]
    %v582 = vld [vmem:[#allocation2 + $0x430] sm:$0xff]
    %v583 = vld [vmem:[#allocation2 + $0x438] sm:$0xff]
    %v584 = vld [vmem:[#allocation2 + $0x440] sm:$0xff]
    %v585 = vld [vmem:[#allocation2 + $0x448] sm:$0xff]
    %v586 = vld [vmem:[#allocation2 + $0x450] sm:$0xff]
    %v587 = vld [vmem:[#allocation2 + $0x458] sm:$0xff]
    %v588 = vld [vmem:[#allocation2 + $0x460] sm:$0xff]
    %v589 = vld [vmem:[#allocation2 + $0x468] sm:$0xff]
    %v590 = vld [vmem:[#allocation2 + $0x470] sm:$0xff]
    %v591 = vld [vmem:[#allocation2 + $0x478] sm:$0xff]
    %v592 = vld [vmem:[#allocation2 + $0x480] sm:$0xff]
    %v593 = vld [vmem:[#allocation2 + $0x488] sm:$0xff]
    %v594 = vld [vmem:[#allocation2 + $0x490] sm:$0xff]
    %v595 = vld [vmem:[#allocation2 + $0x498] sm:$0xff]
    %v596 = vld [vmem:[#allocation2 + $0x4a0] sm:$0xff]
    %v597 = vld [vmem:[#allocation2 + $0x4a8] sm:$0xff]
    %v598 = vld [vmem:[#allocation2 + $0x4b0] sm:$0xff]
    %v599 = vld [vmem:[#allocation2 + $0x4b8] sm:$0xff]
    %v600 = vld [vmem:[#allocation2 + $0x4c0] sm:$0xff]
    %v601 = vld [vmem:[#allocation2 + $0x4c8] sm:$0xff]
    %v602 = vld [vmem:[#allocation2 + $0x4d0] sm:$0xff]
    %v603 = vld [vmem:[#allocation2 + $0x4d8] sm:$0xff]
    %v604 = vld [vmem:[#allocation2 + $0x4e0] sm:$0xff]
    %v605 = vld [vmem:[#allocation2 + $0x4e8] sm:$0xff]
    %v606 = vld [vmem:[#allocation2 + $0x4f0] sm:$0xff]
    %v607 = vld [vmem:[#allocation2 + $0x4f8] sm:$0xff]
    %v608 = vld [vmem:[#allocation2 + $0x500] sm:$0xff]
    %v609 = vld [vmem:[#allocation2 + $0x508] sm:$0xff]
    %v610 = vld [vmem:[#allocation2 + $0x510] sm:$0xff]
    %v611 = vld [vmem:[#allocation2 + $0x518] sm:$0xff]
    %v612 = vld [vmem:[#allocation2 + $0x520] sm:$0xff]
    %v613 = vld [vmem:[#allocation2 + $0x528] sm:$0xff]
    %v614 = vld [vmem:[#allocation2 + $0x530] sm:$0xff]
    %v615 = vld [vmem:[#allocation2 + $0x538] sm:$0xff]
    %v616 = vld [vmem:[#allocation2 + $0x540] sm:$0xff]
    %v617 = vld [vmem:[#allocation2 + $0x548] sm:$0xff]
    %v618 = vld [vmem:[#allocation2 + $0x550] sm:$0xff]
    %v619 = vld [vmem:[#allocation2 + $0x558] sm:$0xff]
    %v620 = vld [vmem:[#allocation2 + $0x560] sm:$0xff]
    %v621 = vld [vmem:[#allocation2 + $0x568] sm:$0xff]
    %v622 = vld [vmem:[#allocation2 + $0x570] sm:$0xff]
    %v623 = vld [vmem:[#allocation2 + $0x578] sm:$0xff]
    %v624 = vld [vmem:[#allocation2 + $0x580] sm:$0xff]
    %v625 = vld [vmem:[#allocation2 + $0x588] sm:$0xff]
    %v626 = vld [vmem:[#allocation2 + $0x590] sm:$0xff]
    %v627 = vld [vmem:[#allocation2 + $0x598] sm:$0xff]
    %v628 = vld [vmem:[#allocation2 + $0x5a0] sm:$0xff]
    %v629 = vld [vmem:[#allocation2 + $0x5a8] sm:$0xff]
    %v630 = vld [vmem:[#allocation2 + $0x5b0] sm:$0xff]
    %v631 = vld [vmem:[#allocation2 + $0x5b8] sm:$0xff]
    %v632 = vld [vmem:[#allocation2 + $0x5c0] sm:$0xff]
    %v633 = vld [vmem:[#allocation2 + $0x5c8] sm:$0xff]
    %v634 = vld [vmem:[#allocation2 + $0x5d0] sm:$0xff]
    %v635 = vld [vmem:[#allocation2 + $0x5d8] sm:$0xff]
    %v636 = vld [vmem:[#allocation2 + $0x5e0] sm:$0xff]
    %v637 = vld [vmem:[#allocation2 + $0x5e8] sm:$0xff]
    %v638 = vld [vmem:[#allocation2 + $0x5f0] sm:$0xff]
    %v639 = vld [vmem:[#allocation2 + $0x5f8] sm:$0xff]
    %v640 = vld [vmem:[#allocation2 + $0x600] sm:$0xff]
    %v641 = vld [vmem:[#allocation2 + $0x608] sm:$0xff]
    %v642 = vld [vmem:[#allocation2 + $0x610] sm:$0xff]
    %v643 = vld [vmem:[#allocation2 + $0x618] sm:$0xff]
    %v644 = vld [vmem:[#allocation2 + $0x620] sm:$0xff]
    %v645 = vld [vmem:[#allocation2 + $0x628] sm:$0xff]
    %v646 = vld [vmem:[#allocation2 + $0x630] sm:$0xff]
    %v647 = vld [vmem:[#allocation2 + $0x638] sm:$0xff]
    %v648 = vld [vmem:[#allocation2 + $0x640] sm:$0xff]
    %v649 = vld [vmem:[#allocation2 + $0x648] sm:$0xff]
    %v650 = vld [vmem:[#allocation2 + $0x650] sm:$0xff]
    %v651 = vld [vmem:[#allocation2 + $0x658] sm:$0xff]
    %v652 = vld [vmem:[#allocation2 + $0x660] sm:$0xff]
    %v653 = vld [vmem:[#allocation2 + $0x668] sm:$0xff]
    %v654 = vld [vmem:[#allocation2 + $0x670] sm:$0xff]
    %v655 = vld [vmem:[#allocation2 + $0x678] sm:$0xff]
    %v656 = vld [vmem:[#allocation2 + $0x680] sm:$0xff]
    %v657 = vld [vmem:[#allocation2 + $0x688] sm:$0xff]
    %v658 = vld [vmem:[#allocation2 + $0x690] sm:$0xff]
    %v659 = vld [vmem:[#allocation2 + $0x698] sm:$0xff]
    %v660 = vld [vmem:[#allocation2 + $0x6a0] sm:$0xff]
    %v661 = vld [vmem:[#allocation2 + $0x6a8] sm:$0xff]
    %v662 = vld [vmem:[#allocation2 + $0x6b0] sm:$0xff]
    %v663 = vld [vmem:[#allocation2 + $0x6b8] sm:$0xff]
    %v664 = vld [vmem:[#allocation2 + $0x6c0] sm:$0xff]
    %v665 = vld [vmem:[#allocation2 + $0x6c8] sm:$0xff]
    %v666 = vld [vmem:[#allocation2 + $0x6d0] sm:$0xff]
    %v667 = vld [vmem:[#allocation2 + $0x6d8] sm:$0xff]
    %v668 = vld [vmem:[#allocation2 + $0x6e0] sm:$0xff]
    %v669 = vld [vmem:[#allocation2 + $0x6e8] sm:$0xff]
    %v670 = vld [vmem:[#allocation2 + $0x6f0] sm:$0xff]
    %v671 = vld [vmem:[#allocation2 + $0x6f8] sm:$0xff]
    %v672 = vld [vmem:[#allocation2 + $0x700] sm:$0xff]
    %v673 = vld [vmem:[#allocation2 + $0x708] sm:$0xff]
    %v674 = vld [vmem:[#allocation2 + $0x710] sm:$0xff]
    %v675 = vld [vmem:[#allocation2 + $0x718] sm:$0xff]
    %v676 = vld [vmem:[#allocation2 + $0x720] sm:$0xff]
    %v677 = vld [vmem:[#allocation2 + $0x728] sm:$0xff]
    %v678 = vld [vmem:[#allocation2 + $0x730] sm:$0xff]
    %v679 = vld [vmem:[#allocation2 + $0x738] sm:$0xff]
    %v680 = vld [vmem:[#allocation2 + $0x740] sm:$0xff]
    %v681 = vld [vmem:[#allocation2 + $0x748] sm:$0xff]
    %v682 = vld [vmem:[#allocation2 + $0x750] sm:$0xff]
    %v683 = vld [vmem:[#allocation2 + $0x758] sm:$0xff]
    %v684 = vld [vmem:[#allocation2 + $0x760] sm:$0xff]
    %v685 = vld [vmem:[#allocation2 + $0x768] sm:$0xff]
    %v686 = vld [vmem:[#allocation2 + $0x770] sm:$0xff]
    %v687 = vld [vmem:[#allocation2 + $0x778] sm:$0xff]
    %v688 = vld [vmem:[#allocation2 + $0x780] sm:$0xff]
    %v689 = vld [vmem:[#allocation2 + $0x788] sm:$0xff]
    %v690 = vld [vmem:[#allocation2 + $0x790] sm:$0xff]
    %v691 = vld [vmem:[#allocation2 + $0x798] sm:$0xff]
    %v692 = vld [vmem:[#allocation2 + $0x7a0] sm:$0xff]
    %v693 = vld [vmem:[#allocation2 + $0x7a8] sm:$0xff]
    %v694 = vld [vmem:[#allocation2 + $0x7b0] sm:$0xff]
    %v695 = vld [vmem:[#allocation2 + $0x7b8] sm:$0xff]
    %v696 = vld [vmem:[#allocation2 + $0x7c0] sm:$0xff]
    %v697 = vld [vmem:[#allocation2 + $0x7c8] sm:$0xff]
    %v698 = vld [vmem:[#allocation2 + $0x7d0] sm:$0xff]
    %v699 = vld [vmem:[#allocation2 + $0x7d8] sm:$0xff]
    %v700 = vld [vmem:[#allocation2 + $0x7e0] sm:$0xff]
    %v701 = vld [vmem:[#allocation2 + $0x7e8] sm:$0xff]
    %v702 = vld [vmem:[#allocation2 + $0x7f0] sm:$0xff]
    %v703 = vld [vmem:[#allocation2 + $0x7f8] sm:$0xff]
    %v704 = vld [vmem:[#allocation2 + $0x800] sm:$0xff]
    %v705 = vld [vmem:[#allocation2 + $0x808] sm:$0xff]
    %v706 = vld [vmem:[#allocation2 + $0x810] sm:$0xff]
    %v707 = vld [vmem:[#allocation2 + $0x818] sm:$0xff]
    %v708 = vld [vmem:[#allocation2 + $0x820] sm:$0xff]
    %v709 = vld [vmem:[#allocation2 + $0x828] sm:$0xff]
    %v710 = vld [vmem:[#allocation2 + $0x830] sm:$0xff]
    %v711 = vld [vmem:[#allocation2 + $0x838] sm:$0xff]
    %v712 = vld [vmem:[#allocation2 + $0x840] sm:$0xff]
    %v713 = vld [vmem:[#allocation2 + $0x848] sm:$0xff]
    %v714 = vld [vmem:[#allocation2 + $0x850] sm:$0xff]
    %v715 = vld [vmem:[#allocation2 + $0x858] sm:$0xff]
    %v716 = vld [vmem:[#allocation2 + $0x860] sm:$0xff]
    %v717 = vld [vmem:[#allocation2 + $0x868] sm:$0xff]
    %v718 = vld [vmem:[#allocation2 + $0x870] sm:$0xff]
    %v719 = vld [vmem:[#allocation2 + $0x878] sm:$0xff]
    %v720 = vld [vmem:[#allocation2 + $0x880] sm:$0xff]
    %v721 = vld [vmem:[#allocation2 + $0x888] sm:$0xff]
    %v722 = vld [vmem:[#allocation2 + $0x890] sm:$0xff]
    %v723 = vld [vmem:[#allocation2 + $0x898] sm:$0xff]
    %v724 = vld [vmem:[#allocation2 + $0x8a0] sm:$0xff]
    %v725 = vld [vmem:[#allocation2 + $0x8a8] sm:$0xff]
    %v726 = vld [vmem:[#allocation2 + $0x8b0] sm:$0xff]
    %v727 = vld [vmem:[#allocation2 + $0x8b8] sm:$0xff]
    %v728 = vld [vmem:[#allocation2 + $0x8c0] sm:$0xff]
    %v729 = vld [vmem:[#allocation2 + $0x8c8] sm:$0xff]
    %v730 = vld [vmem:[#allocation2 + $0x8d0] sm:$0xff]
    %v731 = vld [vmem:[#allocation2 + $0x8d8] sm:$0xff]
    %v732 = vld [vmem:[#allocation2 + $0x8e0] sm:$0xff]
    %v733 = vld [vmem:[#allocation2 + $0x8e8] sm:$0xff]
    %v734 = vld [vmem:[#allocation2 + $0x8f0] sm:$0xff]
    %v735 = vld [vmem:[#allocation2 + $0x8f8] sm:$0xff]
    %v736 = vld [vmem:[#allocation2 + $0x900] sm:$0xff]
    %v737 = vld [vmem:[#allocation2 + $0x908] sm:$0xff]
    %v738 = vld [vmem:[#allocation2 + $0x910] sm:$0xff]
    %v739 = vld [vmem:[#allocation2 + $0x918] sm:$0xff]
    %v740 = vld [vmem:[#allocation2 + $0x920] sm:$0xff]
    %v741 = vld [vmem:[#allocation2 + $0x928] sm:$0xff]
    %v742 = vld [vmem:[#allocation2 + $0x930] sm:$0xff]
    %v743 = vld [vmem:[#allocation2 + $0x938] sm:$0xff]
    %v744 = vld [vmem:[#allocation2 + $0x940] sm:$0xff]
    %v745 = vld [vmem:[#allocation2 + $0x948] sm:$0xff]
    %v746 = vld [vmem:[#allocation2 + $0x950] sm:$0xff]
    %v747 = vld [vmem:[#allocation2 + $0x958] sm:$0xff]
    %v748 = vld [vmem:[#allocation2 + $0x960] sm:$0xff]
    %v749 = vld [vmem:[#allocation2 + $0x968] sm:$0xff]
    %v750 = vld [vmem:[#allocation2 + $0x970] sm:$0xff]
    %v751 = vld [vmem:[#allocation2 + $0x978] sm:$0xff]
    %v752 = vld [vmem:[#allocation2 + $0x980] sm:$0xff]
    %v753 = vld [vmem:[#allocation2 + $0x988] sm:$0xff]
    %v754 = vld [vmem:[#allocation2 + $0x990] sm:$0xff]
    %v755 = vld [vmem:[#allocation2 + $0x998] sm:$0xff]
    %v756 = vld [vmem:[#allocation2 + $0x9a0] sm:$0xff]
    %v757 = vld [vmem:[#allocation2 + $0x9a8] sm:$0xff]
    %v758 = vld [vmem:[#allocation2 + $0x9b0] sm:$0xff]
    %v759 = vld [vmem:[#allocation2 + $0x9b8] sm:$0xff]
    %v760 = vld [vmem:[#allocation2 + $0x9c0] sm:$0xff]
    %v761 = vld [vmem:[#allocation2 + $0x9c8] sm:$0xff]
    %v762 = vld [vmem:[#allocation2 + $0x9d0] sm:$0xff]
    %v763 = vld [vmem:[#allocation2 + $0x9d8] sm:$0xff]
    %v764 = vld [vmem:[#allocation2 + $0x9e0] sm:$0xff]
    %v765 = vld [vmem:[#allocation2 + $0x9e8] sm:$0xff]
    %v766 = vld [vmem:[#allocation2 + $0x9f0] sm:$0xff]
    %v767 = vld [vmem:[#allocation2 + $0x9f8] sm:$0xff]
    %v768 = vld [vmem:[#allocation2 + $0xa00] sm:$0xff]
    %v769 = vld [vmem:[#allocation2 + $0xa08] sm:$0xff]
    %v770 = vld [vmem:[#allocation2 + $0xa10] sm:$0xff]
    %v771 = vld [vmem:[#allocation2 + $0xa18] sm:$0xff]
    %v772 = vld [vmem:[#allocation2 + $0xa20] sm:$0xff]
    %v773 = vld [vmem:[#allocation2 + $0xa28] sm:$0xff]
    %v774 = vld [vmem:[#allocation2 + $0xa30] sm:$0xff]
    %v775 = vld [vmem:[#allocation2 + $0xa38] sm:$0xff]
    %v776 = vld [vmem:[#allocation2 + $0xa40] sm:$0xff]
    %v777 = vld [vmem:[#allocation2 + $0xa48] sm:$0xff]
    %v778 = vld [vmem:[#allocation2 + $0xa50] sm:$0xff]
    %v779 = vld [vmem:[#allocation2 + $0xa58] sm:$0xff]
    %v780 = vld [vmem:[#allocation2 + $0xa60] sm:$0xff]
    %v781 = vld [vmem:[#allocation2 + $0xa68] sm:$0xff]
    %v782 = vld [vmem:[#allocation2 + $0xa70] sm:$0xff]
    %v783 = vld [vmem:[#allocation2 + $0xa78] sm:$0xff]
    %v784 = vld [vmem:[#allocation2 + $0xa80] sm:$0xff]
    %v785 = vld [vmem:[#allocation2 + $0xa88] sm:$0xff]
    %v786 = vld [vmem:[#allocation2 + $0xa90] sm:$0xff]
    %v787 = vld [vmem:[#allocation2 + $0xa98] sm:$0xff]
    %v788 = vld [vmem:[#allocation2 + $0xaa0] sm:$0xff]
    %v789 = vld [vmem:[#allocation2 + $0xaa8] sm:$0xff]
    %v790 = vld [vmem:[#allocation2 + $0xab0] sm:$0xff]
    %v791 = vld [vmem:[#allocation2 + $0xab8] sm:$0xff]
    %v792 = vld [vmem:[#allocation2 + $0xac0] sm:$0xff]
    %v793 = vld [vmem:[#allocation2 + $0xac8] sm:$0xff]
    %v794 = vld [vmem:[#allocation2 + $0xad0] sm:$0xff]
    %v795 = vld [vmem:[#allocation2 + $0xad8] sm:$0xff]
    %v796 = vld [vmem:[#allocation2 + $0xae0] sm:$0xff]
    %v797 = vld [vmem:[#allocation2 + $0xae8] sm:$0xff]
    %v798 = vld [vmem:[#allocation2 + $0xaf0] sm:$0xff]
    %v799 = vld [vmem:[#allocation2 + $0xaf8] sm:$0xff]
    %v800 = vld [vmem:[#allocation2 + $0xb00] sm:$0xff]
    %v801 = vld [vmem:[#allocation2 + $0xb08] sm:$0xff]
    %v802 = vld [vmem:[#allocation2 + $0xb10] sm:$0xff]
    %v803 = vld [vmem:[#allocation2 + $0xb18] sm:$0xff]
    %v804 = vld [vmem:[#allocation2 + $0xb20] sm:$0xff]
    %v805 = vld [vmem:[#allocation2 + $0xb28] sm:$0xff]
    %v806 = vld [vmem:[#allocation2 + $0xb30] sm:$0xff]
    %v807 = vld [vmem:[#allocation2 + $0xb38] sm:$0xff]
    %v808 = vld [vmem:[#allocation2 + $0xb40] sm:$0xff]
    %v809 = vld [vmem:[#allocation2 + $0xb48] sm:$0xff]
    %v810 = vld [vmem:[#allocation2 + $0xb50] sm:$0xff]
    %v811 = vld [vmem:[#allocation2 + $0xb58] sm:$0xff]
    %v812 = vld [vmem:[#allocation2 + $0xb60] sm:$0xff]
    %v813 = vld [vmem:[#allocation2 + $0xb68] sm:$0xff]
    %v814 = vld [vmem:[#allocation2 + $0xb70] sm:$0xff]
    %v815 = vld [vmem:[#allocation2 + $0xb78] sm:$0xff]
    %v816 = vld [vmem:[#allocation2 + $0xb80] sm:$0xff]
    %v817 = vld [vmem:[#allocation2 + $0xb88] sm:$0xff]
    %v818 = vld [vmem:[#allocation2 + $0xb90] sm:$0xff]
    %v819 = vld [vmem:[#allocation2 + $0xb98] sm:$0xff]
    %v820 = vld [vmem:[#allocation2 + $0xba0] sm:$0xff]
    %v821 = vld [vmem:[#allocation2 + $0xba8] sm:$0xff]
    %v822 = vld [vmem:[#allocation2 + $0xbb0] sm:$0xff]
    %v823 = vld [vmem:[#allocation2 + $0xbb8] sm:$0xff]
    %v824 = vld [vmem:[#allocation2 + $0xbc0] sm:$0xff]
    %v825 = vld [vmem:[#allocation2 + $0xbc8] sm:$0xff]
    %v826 = vld [vmem:[#allocation2 + $0xbd0] sm:$0xff]
    %v827 = vld [vmem:[#allocation2 + $0xbd8] sm:$0xff]
    %v828 = vld [vmem:[#allocation2 + $0xbe0] sm:$0xff]
    %v829 = vld [vmem:[#allocation2 + $0xbe8] sm:$0xff]
    %v830 = vld [vmem:[#allocation2 + $0xbf0] sm:$0xff]
    %v831 = vld [vmem:[#allocation2 + $0xbf8] sm:$0xff]
    %v832 = vld [vmem:[#allocation3] sm:$0xff]
    %v833 = vld [vmem:[#allocation3 + $0x8] sm:$0xff]
    %v834 = vld [vmem:[#allocation3 + $0x10] sm:$0xff]
    %v835 = vld [vmem:[#allocation3 + $0x18] sm:$0xff]
    %v836 = vld [vmem:[#allocation3 + $0x20] sm:$0xff]
    %v837 = vld [vmem:[#allocation3 + $0x28] sm:$0xff]
    %v838 = vld [vmem:[#allocation3 + $0x30] sm:$0xff]
    %v839 = vld [vmem:[#allocation3 + $0x38] sm:$0xff]
    %v840 = vld [vmem:[#allocation3 + $0x40] sm:$0xff]
    %v841 = vld [vmem:[#allocation3 + $0x48] sm:$0xff]
    %v842 = vld [vmem:[#allocation3 + $0x50] sm:$0xff]
    %v843 = vld [vmem:[#allocation3 + $0x58] sm:$0xff]
    %v844 = vld [vmem:[#allocation3 + $0x60] sm:$0xff]
    %v845 = vld [vmem:[#allocation3 + $0x68] sm:$0xff]
    %v846 = vld [vmem:[#allocation3 + $0x70] sm:$0xff]
    %v847 = vld [vmem:[#allocation3 + $0x78] sm:$0xff]
    %v848 = vld [vmem:[#allocation3 + $0x80] sm:$0xff]
    %v849 = vld [vmem:[#allocation3 + $0x88] sm:$0xff]
    %v850 = vld [vmem:[#allocation3 + $0x90] sm:$0xff]
    %v851 = vld [vmem:[#allocation3 + $0x98] sm:$0xff]
    %v852 = vld [vmem:[#allocation3 + $0xa0] sm:$0xff]
    %v853 = vld [vmem:[#allocation3 + $0xa8] sm:$0xff]
    %v854 = vld [vmem:[#allocation3 + $0xb0] sm:$0xff]
    %v855 = vld [vmem:[#allocation3 + $0xb8] sm:$0xff]
    %v856 = vld [vmem:[#allocation3 + $0xc0] sm:$0xff]
    %v857 = vld [vmem:[#allocation3 + $0xc8] sm:$0xff]
    %v858 = vld [vmem:[#allocation3 + $0xd0] sm:$0xff]
    %v859 = vld [vmem:[#allocation3 + $0xd8] sm:$0xff]
    %v860 = vld [vmem:[#allocation3 + $0xe0] sm:$0xff]
    %v861 = vld [vmem:[#allocation3 + $0xe8] sm:$0xff]
    %v862 = vld [vmem:[#allocation3 + $0xf0] sm:$0xff]
    %v863 = vld [vmem:[#allocation3 + $0xf8] sm:$0xff]
    %v864 = vld [vmem:[#allocation3 + $0x100] sm:$0xff]
    %v865 = vld [vmem:[#allocation3 + $0x108] sm:$0xff]
    %v866 = vld [vmem:[#allocation3 + $0x110] sm:$0xff]
    %v867 = vld [vmem:[#allocation3 + $0x118] sm:$0xff]
    %v868 = vld [vmem:[#allocation3 + $0x120] sm:$0xff]
    %v869 = vld [vmem:[#allocation3 + $0x128] sm:$0xff]
    %v870 = vld [vmem:[#allocation3 + $0x130] sm:$0xff]
    %v871 = vld [vmem:[#allocation3 + $0x138] sm:$0xff]
    %v872 = vld [vmem:[#allocation3 + $0x140] sm:$0xff]
    %v873 = vld [vmem:[#allocation3 + $0x148] sm:$0xff]
    %v874 = vld [vmem:[#allocation3 + $0x150] sm:$0xff]
    %v875 = vld [vmem:[#allocation3 + $0x158] sm:$0xff]
    %v876 = vld [vmem:[#allocation3 + $0x160] sm:$0xff]
    %v877 = vld [vmem:[#allocation3 + $0x168] sm:$0xff]
    %v878 = vld [vmem:[#allocation3 + $0x170] sm:$0xff]
    %v879 = vld [vmem:[#allocation3 + $0x178] sm:$0xff]
    %v880 = vld [vmem:[#allocation3 + $0x180] sm:$0xff]
    %v881 = vld [vmem:[#allocation3 + $0x188] sm:$0xff]
    %v882 = vld [vmem:[#allocation3 + $0x190] sm:$0xff]
    %v883 = vld [vmem:[#allocation3 + $0x198] sm:$0xff]
    %v884 = vld [vmem:[#allocation3 + $0x1a0] sm:$0xff]
    %v885 = vld [vmem:[#allocation3 + $0x1a8] sm:$0xff]
    %v886 = vld [vmem:[#allocation3 + $0x1b0] sm:$0xff]
    %v887 = vld [vmem:[#allocation3 + $0x1b8] sm:$0xff]
    %v888 = vld [vmem:[#allocation3 + $0x1c0] sm:$0xff]
    %v889 = vld [vmem:[#allocation3 + $0x1c8] sm:$0xff]
    %v890 = vld [vmem:[#allocation3 + $0x1d0] sm:$0xff]
    %v891 = vld [vmem:[#allocation3 + $0x1d8] sm:$0xff]
    %v892 = vld [vmem:[#allocation3 + $0x1e0] sm:$0xff]
    %v893 = vld [vmem:[#allocation3 + $0x1e8] sm:$0xff]
    %v894 = vld [vmem:[#allocation3 + $0x1f0] sm:$0xff]
    %v895 = vld [vmem:[#allocation3 + $0x1f8] sm:$0xff]
    %v896 = vld [vmem:[#allocation3 + $0x200] sm:$0xff]
    %v897 = vld [vmem:[#allocation3 + $0x208] sm:$0xff]
    %v898 = vld [vmem:[#allocation3 + $0x210] sm:$0xff]
    %v899 = vld [vmem:[#allocation3 + $0x218] sm:$0xff]
    %v900 = vld [vmem:[#allocation3 + $0x220] sm:$0xff]
    %v901 = vld [vmem:[#allocation3 + $0x228] sm:$0xff]
    %v902 = vld [vmem:[#allocation3 + $0x230] sm:$0xff]
    %v903 = vld [vmem:[#allocation3 + $0x238] sm:$0xff]
    %v904 = vld [vmem:[#allocation3 + $0x240] sm:$0xff]
    %v905 = vld [vmem:[#allocation3 + $0x248] sm:$0xff]
    %v906 = vld [vmem:[#allocation3 + $0x250] sm:$0xff]
    %v907 = vld [vmem:[#allocation3 + $0x258] sm:$0xff]
    %v908 = vld [vmem:[#allocation3 + $0x260] sm:$0xff]
    %v909 = vld [vmem:[#allocation3 + $0x268] sm:$0xff]
    %v910 = vld [vmem:[#allocation3 + $0x270] sm:$0xff]
    %v911 = vld [vmem:[#allocation3 + $0x278] sm:$0xff]
    %v912 = vld [vmem:[#allocation3 + $0x280] sm:$0xff]
    %v913 = vld [vmem:[#allocation3 + $0x288] sm:$0xff]
    %v914 = vld [vmem:[#allocation3 + $0x290] sm:$0xff]
    %v915 = vld [vmem:[#allocation3 + $0x298] sm:$0xff]
    %v916 = vld [vmem:[#allocation3 + $0x2a0] sm:$0xff]
    %v917 = vld [vmem:[#allocation3 + $0x2a8] sm:$0xff]
    %v918 = vld [vmem:[#allocation3 + $0x2b0] sm:$0xff]
    %v919 = vld [vmem:[#allocation3 + $0x2b8] sm:$0xff]
    %v920 = vld [vmem:[#allocation3 + $0x2c0] sm:$0xff]
    %v921 = vld [vmem:[#allocation3 + $0x2c8] sm:$0xff]
    %v922 = vld [vmem:[#allocation3 + $0x2d0] sm:$0xff]
    %v923 = vld [vmem:[#allocation3 + $0x2d8] sm:$0xff]
    %v924 = vld [vmem:[#allocation3 + $0x2e0] sm:$0xff]
    %v925 = vld [vmem:[#allocation3 + $0x2e8] sm:$0xff]
    %v926 = vld [vmem:[#allocation3 + $0x2f0] sm:$0xff]
    %v927 = vld [vmem:[#allocation3 + $0x2f8] sm:$0xff]
    %v928 = vld [vmem:[#allocation3 + $0x300] sm:$0xff]
    %v929 = vld [vmem:[#allocation3 + $0x308] sm:$0xff]
    %v930 = vld [vmem:[#allocation3 + $0x310] sm:$0xff]
    %v931 = vld [vmem:[#allocation3 + $0x318] sm:$0xff]
    %v932 = vld [vmem:[#allocation3 + $0x320] sm:$0xff]
    %v933 = vld [vmem:[#allocation3 + $0x328] sm:$0xff]
    %v934 = vld [vmem:[#allocation3 + $0x330] sm:$0xff]
    %v935 = vld [vmem:[#allocation3 + $0x338] sm:$0xff]
    %v936 = vld [vmem:[#allocation3 + $0x340] sm:$0xff]
    %v937 = vld [vmem:[#allocation3 + $0x348] sm:$0xff]
    %v938 = vld [vmem:[#allocation3 + $0x350] sm:$0xff]
    %v939 = vld [vmem:[#allocation3 + $0x358] sm:$0xff]
    %v940 = vld [vmem:[#allocation3 + $0x360] sm:$0xff]
    %v941 = vld [vmem:[#allocation3 + $0x368] sm:$0xff]
    %v942 = vld [vmem:[#allocation3 + $0x370] sm:$0xff]
    %v943 = vld [vmem:[#allocation3 + $0x378] sm:$0xff]
    %v944 = vld [vmem:[#allocation3 + $0x380] sm:$0xff]
    %v945 = vld [vmem:[#allocation3 + $0x388] sm:$0xff]
    %v946 = vld [vmem:[#allocation3 + $0x390] sm:$0xff]
    %v947 = vld [vmem:[#allocation3 + $0x398] sm:$0xff]
    %v948 = vld [vmem:[#allocation3 + $0x3a0] sm:$0xff]
    %v949 = vld [vmem:[#allocation3 + $0x3a8] sm:$0xff]
    %v950 = vld [vmem:[#allocation3 + $0x3b0] sm:$0xff]
    %v951 = vld [vmem:[#allocation3 + $0x3b8] sm:$0xff]
    %v952 = vld [vmem:[#allocation3 + $0x3c0] sm:$0xff]
    %v953 = vld [vmem:[#allocation3 + $0x3c8] sm:$0xff]
    %v954 = vld [vmem:[#allocation3 + $0x3d0] sm:$0xff]
    %v955 = vld [vmem:[#allocation3 + $0x3d8] sm:$0xff]
    %v956 = vld [vmem:[#allocation3 + $0x3e0] sm:$0xff]
    %v957 = vld [vmem:[#allocation3 + $0x3e8] sm:$0xff]
    %v958 = vld [vmem:[#allocation3 + $0x3f0] sm:$0xff]
    %v959 = vld [vmem:[#allocation3 + $0x3f8] sm:$0xff]
    %v960 = vpack.c.bf16 %v834, %v832
    %v961 = vpack.c.bf16 %v835, %v833
    %v962 = vpack.c.bf16 %v838, %v836
    %v963 = vpack.c.bf16 %v839, %v837
    %v964 = vpack.c.bf16 %v842, %v840
    %v965 = vpack.c.bf16 %v843, %v841
    %v966 = vpack.c.bf16 %v846, %v844
    %v967 = vpack.c.bf16 %v847, %v845
    %v968 = vpack.c.bf16 %v850, %v848
    %v969 = vpack.c.bf16 %v851, %v849
    %v970 = vpack.c.bf16 %v854, %v852
    %v971 = vpack.c.bf16 %v855, %v853
    %v972 = vpack.c.bf16 %v858, %v856
    %v973 = vpack.c.bf16 %v859, %v857
    %v974 = vpack.c.bf16 %v862, %v860
    %v975 = vpack.c.bf16 %v863, %v861
    %v976 = vpack.c.bf16 %v866, %v864
    %v977 = vpack.c.bf16 %v867, %v865
    %v978 = vpack.c.bf16 %v870, %v868
    %v979 = vpack.c.bf16 %v871, %v869
    %v980 = vpack.c.bf16 %v874, %v872
    %v981 = vpack.c.bf16 %v875, %v873
    %v982 = vpack.c.bf16 %v878, %v876
    %v983 = vpack.c.bf16 %v879, %v877
    %v984 = vpack.c.bf16 %v882, %v880
    %v985 = vpack.c.bf16 %v883, %v881
    %v986 = vpack.c.bf16 %v886, %v884
    %v987 = vpack.c.bf16 %v887, %v885
    %v988 = vpack.c.bf16 %v890, %v888
    %v989 = vpack.c.bf16 %v891, %v889
    %v990 = vpack.c.bf16 %v894, %v892
    %v991 = vpack.c.bf16 %v895, %v893
    %v992 = vpack.c.bf16 %v898, %v896
    %v993 = vpack.c.bf16 %v899, %v897
    %v994 = vpack.c.bf16 %v902, %v900
    %v995 = vpack.c.bf16 %v903, %v901
    %v996 = vpack.c.bf16 %v906, %v904
    %v997 = vpack.c.bf16 %v907, %v905
    %v998 = vpack.c.bf16 %v910, %v908
    %v999 = vpack.c.bf16 %v911, %v909
    %v1000 = vpack.c.bf16 %v914, %v912
    %v1001 = vpack.c.bf16 %v915, %v913
    %v1002 = vpack.c.bf16 %v918, %v916
    %v1003 = vpack.c.bf16 %v919, %v917
    %v1004 = vpack.c.bf16 %v922, %v920
    %v1005 = vpack.c.bf16 %v923, %v921
    %v1006 = vpack.c.bf16 %v926, %v924
    %v1007 = vpack.c.bf16 %v927, %v925
    %v1008 = vpack.c.bf16 %v930, %v928
    %v1009 = vpack.c.bf16 %v931, %v929
    %v1010 = vpack.c.bf16 %v934, %v932
    %v1011 = vpack.c.bf16 %v935, %v933
    %v1012 = vpack.c.bf16 %v938, %v936
    %v1013 = vpack.c.bf16 %v939, %v937
    %v1014 = vpack.c.bf16 %v942, %v940
    %v1015 = vpack.c.bf16 %v943, %v941
    %v1016 = vpack.c.bf16 %v946, %v944
    %v1017 = vpack.c.bf16 %v947, %v945
    %v1018 = vpack.c.bf16 %v950, %v948
    %v1019 = vpack.c.bf16 %v951, %v949
    %v1020 = vpack.c.bf16 %v954, %v952
    %v1021 = vpack.c.bf16 %v955, %v953
    %v1022 = vpack.c.bf16 %v958, %v956
    %v1023 = vpack.c.bf16 %v959, %v957
    %v1024 = vld [vmem:[#allocation6] sm:$0xff]
    %v1025 = vld [vmem:[#allocation6 + $0x8] sm:$0xff]
    %v1026 = vld [vmem:[#allocation6 + $0x10] sm:$0xff]
    %v1027 = vld [vmem:[#allocation6 + $0x18] sm:$0xff]
    %v1028 = vld [vmem:[#allocation6 + $0x20] sm:$0xff]
    %v1029 = vld [vmem:[#allocation6 + $0x28] sm:$0xff]
    %v1030 = vld [vmem:[#allocation6 + $0x30] sm:$0xff]
    %v1031 = vld [vmem:[#allocation6 + $0x38] sm:$0xff]
    %v1032 = vld [vmem:[#allocation6 + $0x40] sm:$0xff]
    %v1033 = vld [vmem:[#allocation6 + $0x48] sm:$0xff]
    %v1034 = vld [vmem:[#allocation6 + $0x50] sm:$0xff]
    %v1035 = vld [vmem:[#allocation6 + $0x58] sm:$0xff]
    %v1036 = vld [vmem:[#allocation6 + $0x60] sm:$0xff]
    %v1037 = vld [vmem:[#allocation6 + $0x68] sm:$0xff]
    %v1038 = vld [vmem:[#allocation6 + $0x70] sm:$0xff]
    %v1039 = vld [vmem:[#allocation6 + $0x78] sm:$0xff]
    %v1040 = vld [vmem:[#allocation6 + $0x80] sm:$0xff]
    %v1041 = vld [vmem:[#allocation6 + $0x88] sm:$0xff]
    %v1042 = vld [vmem:[#allocation6 + $0x90] sm:$0xff]
    %v1043 = vld [vmem:[#allocation6 + $0x98] sm:$0xff]
    %v1044 = vld [vmem:[#allocation6 + $0xa0] sm:$0xff]
    %v1045 = vld [vmem:[#allocation6 + $0xa8] sm:$0xff]
    %v1046 = vld [vmem:[#allocation6 + $0xb0] sm:$0xff]
    %v1047 = vld [vmem:[#allocation6 + $0xb8] sm:$0xff]
    %v1048 = vld [vmem:[#allocation6 + $0xc0] sm:$0xff]
    %v1049 = vld [vmem:[#allocation6 + $0xc8] sm:$0xff]
    %v1050 = vld [vmem:[#allocation6 + $0xd0] sm:$0xff]
    %v1051 = vld [vmem:[#allocation6 + $0xd8] sm:$0xff]
    %v1052 = vld [vmem:[#allocation6 + $0xe0] sm:$0xff]
    %v1053 = vld [vmem:[#allocation6 + $0xe8] sm:$0xff]
    %v1054 = vld [vmem:[#allocation6 + $0xf0] sm:$0xff]
    %v1055 = vld [vmem:[#allocation6 + $0xf8] sm:$0xff]
    %v1056 = vld [vmem:[#allocation6 + $0x100] sm:$0xff]
    %v1057 = vld [vmem:[#allocation6 + $0x108] sm:$0xff]
    %v1058 = vld [vmem:[#allocation6 + $0x110] sm:$0xff]
    %v1059 = vld [vmem:[#allocation6 + $0x118] sm:$0xff]
    %v1060 = vld [vmem:[#allocation6 + $0x120] sm:$0xff]
    %v1061 = vld [vmem:[#allocation6 + $0x128] sm:$0xff]
    %v1062 = vld [vmem:[#allocation6 + $0x130] sm:$0xff]
    %v1063 = vld [vmem:[#allocation6 + $0x138] sm:$0xff]
    %v1064 = vld [vmem:[#allocation6 + $0x140] sm:$0xff]
    %v1065 = vld [vmem:[#allocation6 + $0x148] sm:$0xff]
    %v1066 = vld [vmem:[#allocation6 + $0x150] sm:$0xff]
    %v1067 = vld [vmem:[#allocation6 + $0x158] sm:$0xff]
    %v1068 = vld [vmem:[#allocation6 + $0x160] sm:$0xff]
    %v1069 = vld [vmem:[#allocation6 + $0x168] sm:$0xff]
    %v1070 = vld [vmem:[#allocation6 + $0x170] sm:$0xff]
    %v1071 = vld [vmem:[#allocation6 + $0x178] sm:$0xff]
    %v1072 = vld [vmem:[#allocation6 + $0x180] sm:$0xff]
    %v1073 = vld [vmem:[#allocation6 + $0x188] sm:$0xff]
    %v1074 = vld [vmem:[#allocation6 + $0x190] sm:$0xff]
    %v1075 = vld [vmem:[#allocation6 + $0x198] sm:$0xff]
    %v1076 = vld [vmem:[#allocation6 + $0x1a0] sm:$0xff]
    %v1077 = vld [vmem:[#allocation6 + $0x1a8] sm:$0xff]
    %v1078 = vld [vmem:[#allocation6 + $0x1b0] sm:$0xff]
    %v1079 = vld [vmem:[#allocation6 + $0x1b8] sm:$0xff]
    %v1080 = vld [vmem:[#allocation6 + $0x1c0] sm:$0xff]
    %v1081 = vld [vmem:[#allocation6 + $0x1c8] sm:$0xff]
    %v1082 = vld [vmem:[#allocation6 + $0x1d0] sm:$0xff]
    %v1083 = vld [vmem:[#allocation6 + $0x1d8] sm:$0xff]
    %v1084 = vld [vmem:[#allocation6 + $0x1e0] sm:$0xff]
    %v1085 = vld [vmem:[#allocation6 + $0x1e8] sm:$0xff]
    %v1086 = vld [vmem:[#allocation6 + $0x1f0] sm:$0xff]
    %v1087 = vld [vmem:[#allocation6 + $0x1f8] sm:$0xff]
    %v1088 = vld [vmem:[#allocation6 + $0x200] sm:$0xff]
    %v1089 = vld [vmem:[#allocation6 + $0x208] sm:$0xff]
    %v1090 = vld [vmem:[#allocation6 + $0x210] sm:$0xff]
    %v1091 = vld [vmem:[#allocation6 + $0x218] sm:$0xff]
    %v1092 = vld [vmem:[#allocation6 + $0x220] sm:$0xff]
    %v1093 = vld [vmem:[#allocation6 + $0x228] sm:$0xff]
    %v1094 = vld [vmem:[#allocation6 + $0x230] sm:$0xff]
    %v1095 = vld [vmem:[#allocation6 + $0x238] sm:$0xff]
    %v1096 = vld [vmem:[#allocation6 + $0x240] sm:$0xff]
    %v1097 = vld [vmem:[#allocation6 + $0x248] sm:$0xff]
    %v1098 = vld [vmem:[#allocation6 + $0x250] sm:$0xff]
    %v1099 = vld [vmem:[#allocation6 + $0x258] sm:$0xff]
    %v1100 = vld [vmem:[#allocation6 + $0x260] sm:$0xff]
    %v1101 = vld [vmem:[#allocation6 + $0x268] sm:$0xff]
    %v1102 = vld [vmem:[#allocation6 + $0x270] sm:$0xff]
    %v1103 = vld [vmem:[#allocation6 + $0x278] sm:$0xff]
    %v1104 = vld [vmem:[#allocation6 + $0x280] sm:$0xff]
    %v1105 = vld [vmem:[#allocation6 + $0x288] sm:$0xff]
    %v1106 = vld [vmem:[#allocation6 + $0x290] sm:$0xff]
    %v1107 = vld [vmem:[#allocation6 + $0x298] sm:$0xff]
    %v1108 = vld [vmem:[#allocation6 + $0x2a0] sm:$0xff]
    %v1109 = vld [vmem:[#allocation6 + $0x2a8] sm:$0xff]
    %v1110 = vld [vmem:[#allocation6 + $0x2b0] sm:$0xff]
    %v1111 = vld [vmem:[#allocation6 + $0x2b8] sm:$0xff]
    %v1112 = vld [vmem:[#allocation6 + $0x2c0] sm:$0xff]
    %v1113 = vld [vmem:[#allocation6 + $0x2c8] sm:$0xff]
    %v1114 = vld [vmem:[#allocation6 + $0x2d0] sm:$0xff]
    %v1115 = vld [vmem:[#allocation6 + $0x2d8] sm:$0xff]
    %v1116 = vld [vmem:[#allocation6 + $0x2e0] sm:$0xff]
    %v1117 = vld [vmem:[#allocation6 + $0x2e8] sm:$0xff]
    %v1118 = vld [vmem:[#allocation6 + $0x2f0] sm:$0xff]
    %v1119 = vld [vmem:[#allocation6 + $0x2f8] sm:$0xff]
    %v1216 = vunpack.c.l.b16 %v1024
    %v1217 = vunpack.c.h.b16 %v1024
    %v1218 = vunpack.c.l.b16 %v1025
    %v1219 = vunpack.c.h.b16 %v1025
    %v1220 = vunpack.c.l.b16 %v1026
    %v1221 = vunpack.c.h.b16 %v1026
    %v1222 = vunpack.c.l.b16 %v1027
    %v1223 = vunpack.c.h.b16 %v1027
    %v1224 = vunpack.c.l.b16 %v1028
    %v1225 = vunpack.c.h.b16 %v1028
    %v1226 = vunpack.c.l.b16 %v1029
    %v1227 = vunpack.c.h.b16 %v1029
    %v1228 = vunpack.c.l.b16 %v1030
    %v1229 = vunpack.c.h.b16 %v1030
    %v1230 = vunpack.c.l.b16 %v1031
    %v1231 = vunpack.c.h.b16 %v1031
    %v1232 = vunpack.c.l.b16 %v1032
    %v1233 = vunpack.c.h.b16 %v1032
    %v1234 = vunpack.c.l.b16 %v1033
    %v1235 = vunpack.c.h.b16 %v1033
    %v1236 = vunpack.c.l.b16 %v1034
    %v1237 = vunpack.c.h.b16 %v1034
    %v1238 = vunpack.c.l.b16 %v1035
    %v1239 = vunpack.c.h.b16 %v1035
    %v1240 = vunpack.c.l.b16 %v1036
    %v1241 = vunpack.c.h.b16 %v1036
    %v1242 = vunpack.c.l.b16 %v1037
    %v1243 = vunpack.c.h.b16 %v1037
    %v1244 = vunpack.c.l.b16 %v1038
    %v1245 = vunpack.c.h.b16 %v1038
    %v1246 = vunpack.c.l.b16 %v1039
    %v1247 = vunpack.c.h.b16 %v1039
    %v1248 = vunpack.c.l.b16 %v1040
    %v1249 = vunpack.c.h.b16 %v1040
    %v1250 = vunpack.c.l.b16 %v1041
    %v1251 = vunpack.c.h.b16 %v1041
    %v1252 = vunpack.c.l.b16 %v1042
    %v1253 = vunpack.c.h.b16 %v1042
    %v1254 = vunpack.c.l.b16 %v1043
    %v1255 = vunpack.c.h.b16 %v1043
    %v1256 = vunpack.c.l.b16 %v1044
    %v1257 = vunpack.c.h.b16 %v1044
    %v1258 = vunpack.c.l.b16 %v1045
    %v1259 = vunpack.c.h.b16 %v1045
    %v1260 = vunpack.c.l.b16 %v1046
    %v1261 = vunpack.c.h.b16 %v1046
    %v1262 = vunpack.c.l.b16 %v1047
    %v1263 = vunpack.c.h.b16 %v1047
    %v1264 = vunpack.c.l.b16 %v1048
    %v1265 = vunpack.c.h.b16 %v1048
    %v1266 = vunpack.c.l.b16 %v1049
    %v1267 = vunpack.c.h.b16 %v1049
    %v1268 = vunpack.c.l.b16 %v1050
    %v1269 = vunpack.c.h.b16 %v1050
    %v1270 = vunpack.c.l.b16 %v1051
    %v1271 = vunpack.c.h.b16 %v1051
    %v1272 = vunpack.c.l.b16 %v1052
    %v1273 = vunpack.c.h.b16 %v1052
    %v1274 = vunpack.c.l.b16 %v1053
    %v1275 = vunpack.c.h.b16 %v1053
    %v1276 = vunpack.c.l.b16 %v1054
    %v1277 = vunpack.c.h.b16 %v1054
    %v1278 = vunpack.c.l.b16 %v1055
    %v1279 = vunpack.c.h.b16 %v1055
    %v1280 = vunpack.c.l.b16 %v1056
    %v1281 = vunpack.c.h.b16 %v1056
    %v1282 = vunpack.c.l.b16 %v1057
    %v1283 = vunpack.c.h.b16 %v1057
    %v1284 = vunpack.c.l.b16 %v1058
    %v1285 = vunpack.c.h.b16 %v1058
    %v1286 = vunpack.c.l.b16 %v1059
    %v1287 = vunpack.c.h.b16 %v1059
    %v1288 = vunpack.c.l.b16 %v1060
    %v1289 = vunpack.c.h.b16 %v1060
    %v1290 = vunpack.c.l.b16 %v1061
    %v1291 = vunpack.c.h.b16 %v1061
    %v1292 = vunpack.c.l.b16 %v1062
    %v1293 = vunpack.c.h.b16 %v1062
    %v1294 = vunpack.c.l.b16 %v1063
    %v1295 = vunpack.c.h.b16 %v1063
    %v1296 = vunpack.c.l.b16 %v1064
    %v1297 = vunpack.c.h.b16 %v1064
    %v1298 = vunpack.c.l.b16 %v1065
    %v1299 = vunpack.c.h.b16 %v1065
    %v1300 = vunpack.c.l.b16 %v1066
    %v1301 = vunpack.c.h.b16 %v1066
    %v1302 = vunpack.c.l.b16 %v1067
    %v1303 = vunpack.c.h.b16 %v1067
    %v1304 = vunpack.c.l.b16 %v1068
    %v1305 = vunpack.c.h.b16 %v1068
    %v1306 = vunpack.c.l.b16 %v1069
    %v1307 = vunpack.c.h.b16 %v1069
    %v1308 = vunpack.c.l.b16 %v1070
    %v1309 = vunpack.c.h.b16 %v1070
    %v1310 = vunpack.c.l.b16 %v1071
    %v1311 = vunpack.c.h.b16 %v1071
    %v1312 = vunpack.c.l.b16 %v1072
    %v1313 = vunpack.c.h.b16 %v1072
    %v1314 = vunpack.c.l.b16 %v1073
    %v1315 = vunpack.c.h.b16 %v1073
    %v1316 = vunpack.c.l.b16 %v1074
    %v1317 = vunpack.c.h.b16 %v1074
    %v1318 = vunpack.c.l.b16 %v1075
    %v1319 = vunpack.c.h.b16 %v1075
    %v1320 = vunpack.c.l.b16 %v1076
    %v1321 = vunpack.c.h.b16 %v1076
    %v1322 = vunpack.c.l.b16 %v1077
    %v1323 = vunpack.c.h.b16 %v1077
    %v1324 = vunpack.c.l.b16 %v1078
    %v1325 = vunpack.c.h.b16 %v1078
    %v1326 = vunpack.c.l.b16 %v1079
    %v1327 = vunpack.c.h.b16 %v1079
    %v1328 = vunpack.c.l.b16 %v1080
    %v1329 = vunpack.c.h.b16 %v1080
    %v1330 = vunpack.c.l.b16 %v1081
    %v1331 = vunpack.c.h.b16 %v1081
    %v1332 = vunpack.c.l.b16 %v1082
    %v1333 = vunpack.c.h.b16 %v1082
    %v1334 = vunpack.c.l.b16 %v1083
    %v1335 = vunpack.c.h.b16 %v1083
    %v1336 = vunpack.c.l.b16 %v1084
    %v1337 = vunpack.c.h.b16 %v1084
    %v1338 = vunpack.c.l.b16 %v1085
    %v1339 = vunpack.c.h.b16 %v1085
    %v1340 = vunpack.c.l.b16 %v1086
    %v1341 = vunpack.c.h.b16 %v1086
    %v1342 = vunpack.c.l.b16 %v1087
    %v1343 = vunpack.c.h.b16 %v1087
    %v1344 = vunpack.c.l.b16 %v1088
    %v1345 = vunpack.c.h.b16 %v1088
    %v1346 = vunpack.c.l.b16 %v1089
    %v1347 = vunpack.c.h.b16 %v1089
    %v1348 = vunpack.c.l.b16 %v1090
    %v1349 = vunpack.c.h.b16 %v1090
    %v1350 = vunpack.c.l.b16 %v1091
    %v1351 = vunpack.c.h.b16 %v1091
    %v1352 = vunpack.c.l.b16 %v1092
    %v1353 = vunpack.c.h.b16 %v1092
    %v1354 = vunpack.c.l.b16 %v1093
    %v1355 = vunpack.c.h.b16 %v1093
    %v1356 = vunpack.c.l.b16 %v1094
    %v1357 = vunpack.c.h.b16 %v1094
    %v1358 = vunpack.c.l.b16 %v1095
    %v1359 = vunpack.c.h.b16 %v1095
    %v1360 = vunpack.c.l.b16 %v1096
    %v1361 = vunpack.c.h.b16 %v1096
    %v1362 = vunpack.c.l.b16 %v1097
    %v1363 = vunpack.c.h.b16 %v1097
    %v1364 = vunpack.c.l.b16 %v1098
    %v1365 = vunpack.c.h.b16 %v1098
    %v1366 = vunpack.c.l.b16 %v1099
    %v1367 = vunpack.c.h.b16 %v1099
    %v1368 = vunpack.c.l.b16 %v1100
    %v1369 = vunpack.c.h.b16 %v1100
    %v1370 = vunpack.c.l.b16 %v1101
    %v1371 = vunpack.c.h.b16 %v1101
    %v1372 = vunpack.c.l.b16 %v1102
    %v1373 = vunpack.c.h.b16 %v1102
    %v1374 = vunpack.c.l.b16 %v1103
    %v1375 = vunpack.c.h.b16 %v1103
    %v1376 = vunpack.c.l.b16 %v1104
    %v1377 = vunpack.c.h.b16 %v1104
    %v1378 = vunpack.c.l.b16 %v1105
    %v1379 = vunpack.c.h.b16 %v1105
    %v1380 = vunpack.c.l.b16 %v1106
    %v1381 = vunpack.c.h.b16 %v1106
    %v1382 = vunpack.c.l.b16 %v1107
    %v1383 = vunpack.c.h.b16 %v1107
    %v1384 = vunpack.c.l.b16 %v1108
    %v1385 = vunpack.c.h.b16 %v1108
    %v1386 = vunpack.c.l.b16 %v1109
    %v1387 = vunpack.c.h.b16 %v1109
    %v1388 = vunpack.c.l.b16 %v1110
    %v1389 = vunpack.c.h.b16 %v1110
    %v1390 = vunpack.c.l.b16 %v1111
    %v1391 = vunpack.c.h.b16 %v1111
    %v1392 = vunpack.c.l.b16 %v1112
    %v1393 = vunpack.c.h.b16 %v1112
    %v1394 = vunpack.c.l.b16 %v1113
    %v1395 = vunpack.c.h.b16 %v1113
    %v1396 = vunpack.c.l.b16 %v1114
    %v1397 = vunpack.c.h.b16 %v1114
    %v1398 = vunpack.c.l.b16 %v1115
    %v1399 = vunpack.c.h.b16 %v1115
    %v1400 = vunpack.c.l.b16 %v1116
    %v1401 = vunpack.c.h.b16 %v1116
    %v1402 = vunpack.c.l.b16 %v1117
    %v1403 = vunpack.c.h.b16 %v1117
    %v1404 = vunpack.c.l.b16 %v1118
    %v1405 = vunpack.c.h.b16 %v1118
    %v1406 = vunpack.c.l.b16 %v1119
    %v1407 = vunpack.c.h.b16 %v1119
    %v1408 = vpack.c.b16 %v1222, %v1216
    %v1409 = vpack.c.b16 %v1223, %v1217
    %v1410 = vpack.c.b16 %v1224, %v1218
    %v1411 = vpack.c.b16 %v1225, %v1219
    %v1412 = vpack.c.b16 %v1226, %v1220
    %v1413 = vpack.c.b16 %v1227, %v1221
    %v1414 = vpack.c.b16 %v1234, %v1228
    %v1415 = vpack.c.b16 %v1235, %v1229
    %v1416 = vpack.c.b16 %v1236, %v1230
    %v1417 = vpack.c.b16 %v1237, %v1231
    %v1418 = vpack.c.b16 %v1238, %v1232
    %v1419 = vpack.c.b16 %v1239, %v1233
    %v1420 = vpack.c.b16 %v1246, %v1240
    %v1421 = vpack.c.b16 %v1247, %v1241
    %v1422 = vpack.c.b16 %v1248, %v1242
    %v1423 = vpack.c.b16 %v1249, %v1243
    %v1424 = vpack.c.b16 %v1250, %v1244
    %v1425 = vpack.c.b16 %v1251, %v1245
    %v1426 = vpack.c.b16 %v1258, %v1252
    %v1427 = vpack.c.b16 %v1259, %v1253
    %v1428 = vpack.c.b16 %v1260, %v1254
    %v1429 = vpack.c.b16 %v1261, %v1255
    %v1430 = vpack.c.b16 %v1262, %v1256
    %v1431 = vpack.c.b16 %v1263, %v1257
    %v1432 = vpack.c.b16 %v1270, %v1264
    %v1433 = vpack.c.b16 %v1271, %v1265
    %v1434 = vpack.c.b16 %v1272, %v1266
    %v1435 = vpack.c.b16 %v1273, %v1267
    %v1436 = vpack.c.b16 %v1274, %v1268
    %v1437 = vpack.c.b16 %v1275, %v1269
    %v1438 = vpack.c.b16 %v1282, %v1276
    %v1439 = vpack.c.b16 %v1283, %v1277
    %v1440 = vpack.c.b16 %v1284, %v1278
    %v1441 = vpack.c.b16 %v1285, %v1279
    %v1442 = vpack.c.b16 %v1286, %v1280
    %v1443 = vpack.c.b16 %v1287, %v1281
    %v1444 = vpack.c.b16 %v1294, %v1288
    %v1445 = vpack.c.b16 %v1295, %v1289
    %v1446 = vpack.c.b16 %v1296, %v1290
    %v1447 = vpack.c.b16 %v1297, %v1291
    %v1448 = vpack.c.b16 %v1298, %v1292
    %v1449 = vpack.c.b16 %v1299, %v1293
    %v1450 = vpack.c.b16 %v1306, %v1300
    %v1451 = vpack.c.b16 %v1307, %v1301
    %v1452 = vpack.c.b16 %v1308, %v1302
    %v1453 = vpack.c.b16 %v1309, %v1303
    %v1454 = vpack.c.b16 %v1310, %v1304
    %v1455 = vpack.c.b16 %v1311, %v1305
    %v1456 = vpack.c.b16 %v1318, %v1312
    %v1457 = vpack.c.b16 %v1319, %v1313
    %v1458 = vpack.c.b16 %v1320, %v1314
    %v1459 = vpack.c.b16 %v1321, %v1315
    %v1460 = vpack.c.b16 %v1322, %v1316
    %v1461 = vpack.c.b16 %v1323, %v1317
    %v1462 = vpack.c.b16 %v1330, %v1324
    %v1463 = vpack.c.b16 %v1331, %v1325
    %v1464 = vpack.c.b16 %v1332, %v1326
    %v1465 = vpack.c.b16 %v1333, %v1327
    %v1466 = vpack.c.b16 %v1334, %v1328
    %v1467 = vpack.c.b16 %v1335, %v1329
    %v1468 = vpack.c.b16 %v1342, %v1336
    %v1469 = vpack.c.b16 %v1343, %v1337
    %v1470 = vpack.c.b16 %v1344, %v1338
    %v1471 = vpack.c.b16 %v1345, %v1339
    %v1472 = vpack.c.b16 %v1346, %v1340
    %v1473 = vpack.c.b16 %v1347, %v1341
    %v1474 = vpack.c.b16 %v1354, %v1348
    %v1475 = vpack.c.b16 %v1355, %v1349
    %v1476 = vpack.c.b16 %v1356, %v1350
    %v1477 = vpack.c.b16 %v1357, %v1351
    %v1478 = vpack.c.b16 %v1358, %v1352
    %v1479 = vpack.c.b16 %v1359, %v1353
    %v1480 = vpack.c.b16 %v1366, %v1360
    %v1481 = vpack.c.b16 %v1367, %v1361
    %v1482 = vpack.c.b16 %v1368, %v1362
    %v1483 = vpack.c.b16 %v1369, %v1363
    %v1484 = vpack.c.b16 %v1370, %v1364
    %v1485 = vpack.c.b16 %v1371, %v1365
    %v1486 = vpack.c.b16 %v1378, %v1372
    %v1487 = vpack.c.b16 %v1379, %v1373
    %v1488 = vpack.c.b16 %v1380, %v1374
    %v1489 = vpack.c.b16 %v1381, %v1375
    %v1490 = vpack.c.b16 %v1382, %v1376
    %v1491 = vpack.c.b16 %v1383, %v1377
    %v1492 = vpack.c.b16 %v1390, %v1384
    %v1493 = vpack.c.b16 %v1391, %v1385
    %v1494 = vpack.c.b16 %v1392, %v1386
    %v1495 = vpack.c.b16 %v1393, %v1387
    %v1496 = vpack.c.b16 %v1394, %v1388
    %v1497 = vpack.c.b16 %v1395, %v1389
    %v1498 = vpack.c.b16 %v1402, %v1396
    %v1499 = vpack.c.b16 %v1403, %v1397
    %v1500 = vpack.c.b16 %v1404, %v1398
    %v1501 = vpack.c.b16 %v1405, %v1399
    %v1502 = vpack.c.b16 %v1406, %v1400
    %v1503 = vpack.c.b16 %v1407, %v1401
    %1600 = vmatpush.bf16.msra.mxu0 %v1450
    %1601 = vmatpush.bf16.msra.mxu0 %v1444
    %1602 = vmatpush.bf16.msra.mxu0 %v1438
    %1603 = vmatpush.bf16.msra.mxu0 %v1432
    %1604 = vmatpush.bf16.msra.mxu0 %v1426
    %1605 = vmatpush.bf16.msra.mxu0 %v1420
    %1606 = vmatpush.bf16.msra.mxu0 %v1414
    %1607 = vmatpush.bf16.msra.mxu0 %v1408
    %1608 = vmatmul.bf16.gmra.mxu0 %v960
    %v1609 = vpop.f32.mrf.mxu0
    %v1610 = vadd.f32 0.0, %v1609
    %v1611 = vpop.f32.mrf.mxu0
    %v1612 = vadd.f32 0.0, %v1611
    %1613 = vmatmul.bf16.gmra.mxu0 %v962
    %v1614 = vpop.f32.mrf.mxu0
    %v1615 = vadd.f32 0.0, %v1614
    %v1616 = vpop.f32.mrf.mxu0
    %v1617 = vadd.f32 0.0, %v1616
    %1618 = vmatmul.bf16.gmra.mxu0 %v964
    %v1619 = vpop.f32.mrf.mxu0
    %v1620 = vadd.f32 0.0, %v1619
    %v1621 = vpop.f32.mrf.mxu0
    %v1622 = vadd.f32 0.0, %v1621
    %1623 = vmatmul.bf16.gmra.mxu0 %v966
    %v1624 = vpop.f32.mrf.mxu0
    %v1625 = vadd.f32 0.0, %v1624
    %v1626 = vpop.f32.mrf.mxu0
    %v1627 = vadd.f32 0.0, %v1626
    %1628 = vmatmul.bf16.gmra.mxu0 %v968
    %v1629 = vpop.f32.mrf.mxu0
    %v1630 = vadd.f32 0.0, %v1629
    %v1631 = vpop.f32.mrf.mxu0
    %v1632 = vadd.f32 0.0, %v1631
    %1633 = vmatmul.bf16.gmra.mxu0 %v970
    %v1634 = vpop.f32.mrf.mxu0
    %v1635 = vadd.f32 0.0, %v1634
    %v1636 = vpop.f32.mrf.mxu0
    %v1637 = vadd.f32 0.0, %v1636
    %1638 = vmatmul.bf16.gmra.mxu0 %v972
    %v1639 = vpop.f32.mrf.mxu0
    %v1640 = vadd.f32 0.0, %v1639
    %v1641 = vpop.f32.mrf.mxu0
    %v1642 = vadd.f32 0.0, %v1641
    %1643 = vmatmul.bf16.gmra.mxu0 %v974
    %v1644 = vpop.f32.mrf.mxu0
    %v1645 = vadd.f32 0.0, %v1644
    %v1646 = vpop.f32.mrf.mxu0
    %v1647 = vadd.f32 0.0, %v1646
    %1648 = vmatmul.bf16.gmra.mxu0 %v976
    %v1649 = vpop.f32.mrf.mxu0
    %v1650 = vadd.f32 0.0, %v1649
    %v1651 = vpop.f32.mrf.mxu0
    %v1652 = vadd.f32 0.0, %v1651
    %1653 = vmatmul.bf16.gmra.mxu0 %v978
    %v1654 = vpop.f32.mrf.mxu0
    %v1655 = vadd.f32 0.0, %v1654
    %v1656 = vpop.f32.mrf.mxu0
    %v1657 = vadd.f32 0.0, %v1656
    %1658 = vmatmul.bf16.gmra.mxu0 %v980
    %v1659 = vpop.f32.mrf.mxu0
    %v1660 = vadd.f32 0.0, %v1659
    %v1661 = vpop.f32.mrf.mxu0
    %v1662 = vadd.f32 0.0, %v1661
    %1663 = vmatmul.bf16.gmra.mxu0 %v982
    %v1664 = vpop.f32.mrf.mxu0
    %v1665 = vadd.f32 0.0, %v1664
    %v1666 = vpop.f32.mrf.mxu0
    %v1667 = vadd.f32 0.0, %v1666
    %1668 = vmatmul.bf16.gmra.mxu0 %v984
    %v1669 = vpop.f32.mrf.mxu0
    %v1670 = vadd.f32 0.0, %v1669
    %v1671 = vpop.f32.mrf.mxu0
    %v1672 = vadd.f32 0.0, %v1671
    %1673 = vmatmul.bf16.gmra.mxu0 %v986
    %v1674 = vpop.f32.mrf.mxu0
    %v1675 = vadd.f32 0.0, %v1674
    %v1676 = vpop.f32.mrf.mxu0
    %v1677 = vadd.f32 0.0, %v1676
    %1678 = vmatmul.bf16.gmra.mxu0 %v988
    %v1679 = vpop.f32.mrf.mxu0
    %v1680 = vadd.f32 0.0, %v1679
    %v1681 = vpop.f32.mrf.mxu0
    %v1682 = vadd.f32 0.0, %v1681
    %1683 = vmatmul.bf16.gmra.mxu0 %v990
    %v1684 = vpop.f32.mrf.mxu0
    %v1685 = vadd.f32 0.0, %v1684
    %v1686 = vpop.f32.mrf.mxu0
    %v1687 = vadd.f32 0.0, %v1686
    %1688 = vmatmul.bf16.gmra.mxu0 %v992
    %v1689 = vpop.f32.mrf.mxu0
    %v1690 = vadd.f32 0.0, %v1689
    %v1691 = vpop.f32.mrf.mxu0
    %v1692 = vadd.f32 0.0, %v1691
    %1693 = vmatmul.bf16.gmra.mxu0 %v994
    %v1694 = vpop.f32.mrf.mxu0
    %v1695 = vadd.f32 0.0, %v1694
    %v1696 = vpop.f32.mrf.mxu0
    %v1697 = vadd.f32 0.0, %v1696
    %1698 = vmatmul.bf16.gmra.mxu0 %v996
    %v1699 = vpop.f32.mrf.mxu0
    %v1700 = vadd.f32 0.0, %v1699
    %v1701 = vpop.f32.mrf.mxu0
    %v1702 = vadd.f32 0.0, %v1701
    %1703 = vmatmul.bf16.gmra.mxu0 %v998
    %v1704 = vpop.f32.mrf.mxu0
    %v1705 = vadd.f32 0.0, %v1704
    %v1706 = vpop.f32.mrf.mxu0
    %v1707 = vadd.f32 0.0, %v1706
    %1708 = vmatmul.bf16.gmra.mxu0 %v1000
    %v1709 = vpop.f32.mrf.mxu0
    %v1710 = vadd.f32 0.0, %v1709
    %v1711 = vpop.f32.mrf.mxu0
    %v1712 = vadd.f32 0.0, %v1711
    %1713 = vmatmul.bf16.gmra.mxu0 %v1002
    %v1714 = vpop.f32.mrf.mxu0
    %v1715 = vadd.f32 0.0, %v1714
    %v1716 = vpop.f32.mrf.mxu0
    %v1717 = vadd.f32 0.0, %v1716
    %1718 = vmatmul.bf16.gmra.mxu0 %v1004
    %v1719 = vpop.f32.mrf.mxu0
    %v1720 = vadd.f32 0.0, %v1719
    %v1721 = vpop.f32.mrf.mxu0
    %v1722 = vadd.f32 0.0, %v1721
    %1723 = vmatmul.bf16.gmra.mxu0 %v1006
    %v1724 = vpop.f32.mrf.mxu0
    %v1725 = vadd.f32 0.0, %v1724
    %v1726 = vpop.f32.mrf.mxu0
    %v1727 = vadd.f32 0.0, %v1726
    %1728 = vmatmul.bf16.gmra.mxu0 %v1008
    %v1729 = vpop.f32.mrf.mxu0
    %v1730 = vadd.f32 0.0, %v1729
    %v1731 = vpop.f32.mrf.mxu0
    %v1732 = vadd.f32 0.0, %v1731
    %1733 = vmatmul.bf16.gmra.mxu0 %v1010
    %v1734 = vpop.f32.mrf.mxu0
    %v1735 = vadd.f32 0.0, %v1734
    %v1736 = vpop.f32.mrf.mxu0
    %v1737 = vadd.f32 0.0, %v1736
    %1738 = vmatmul.bf16.gmra.mxu0 %v1012
    %v1739 = vpop.f32.mrf.mxu0
    %v1740 = vadd.f32 0.0, %v1739
    %v1741 = vpop.f32.mrf.mxu0
    %v1742 = vadd.f32 0.0, %v1741
    %1743 = vmatmul.bf16.gmra.mxu0 %v1014
    %v1744 = vpop.f32.mrf.mxu0
    %v1745 = vadd.f32 0.0, %v1744
    %v1746 = vpop.f32.mrf.mxu0
    %v1747 = vadd.f32 0.0, %v1746
    %1748 = vmatmul.bf16.gmra.mxu0 %v1016
    %v1749 = vpop.f32.mrf.mxu0
    %v1750 = vadd.f32 0.0, %v1749
    %v1751 = vpop.f32.mrf.mxu0
    %v1752 = vadd.f32 0.0, %v1751
    %1753 = vmatmul.bf16.gmra.mxu0 %v1018
    %v1754 = vpop.f32.mrf.mxu0
    %v1755 = vadd.f32 0.0, %v1754
    %v1756 = vpop.f32.mrf.mxu0
    %v1757 = vadd.f32 0.0, %v1756
    %1758 = vmatmul.bf16.gmra.mxu0 %v1020
    %v1759 = vpop.f32.mrf.mxu0
    %v1760 = vadd.f32 0.0, %v1759
    %v1761 = vpop.f32.mrf.mxu0
    %v1762 = vadd.f32 0.0, %v1761
    %1763 = vmatmul.bf16.gmra.mxu0 %v1022
    %v1764 = vpop.f32.mrf.mxu0
    %v1765 = vadd.f32 0.0, %v1764
    %v1766 = vpop.f32.mrf.mxu0
    %v1767 = vadd.f32 0.0, %v1766
    %1768 = vdwg.mxu0
    %1769 = vmatpush.bf16.msra.mxu0 %v1498
    %1770 = vmatpush.bf16.msra.mxu0 %v1492
    %1771 = vmatpush.bf16.msra.mxu0 %v1486
    %1772 = vmatpush.bf16.msra.mxu0 %v1480
    %1773 = vmatpush.bf16.msra.mxu0 %v1474
    %1774 = vmatpush.bf16.msra.mxu0 %v1468
    %1775 = vmatpush.bf16.msra.mxu0 %v1462
    %1776 = vmatpush.bf16.msra.mxu0 %v1456
    %1777 = vmatmul.bf16.gmra.mxu0 %v961
    %v1778 = vpop.f32.mrf.mxu0
    %v1779 = vadd.f32 %v1610, %v1778
    %v1780 = vpop.f32.mrf.mxu0
    %v1781 = vadd.f32 %v1612, %v1780
    %1782 = vmatmul.bf16.gmra.mxu0 %v963
    %v1783 = vpop.f32.mrf.mxu0
    %v1784 = vadd.f32 %v1615, %v1783
    %v1785 = vpop.f32.mrf.mxu0
    %v1786 = vadd.f32 %v1617, %v1785
    %1787 = vmatmul.bf16.gmra.mxu0 %v965
    %v1788 = vpop.f32.mrf.mxu0
    %v1789 = vadd.f32 %v1620, %v1788
    %v1790 = vpop.f32.mrf.mxu0
    %v1791 = vadd.f32 %v1622, %v1790
    %1792 = vmatmul.bf16.gmra.mxu0 %v967
    %v1793 = vpop.f32.mrf.mxu0
    %v1794 = vadd.f32 %v1625, %v1793
    %v1795 = vpop.f32.mrf.mxu0
    %v1796 = vadd.f32 %v1627, %v1795
    %1797 = vmatmul.bf16.gmra.mxu0 %v969
    %v1798 = vpop.f32.mrf.mxu0
    %v1799 = vadd.f32 %v1630, %v1798
    %v1800 = vpop.f32.mrf.mxu0
    %v1801 = vadd.f32 %v1632, %v1800
    %1802 = vmatmul.bf16.gmra.mxu0 %v971
    %v1803 = vpop.f32.mrf.mxu0
    %v1804 = vadd.f32 %v1635, %v1803
    %v1805 = vpop.f32.mrf.mxu0
    %v1806 = vadd.f32 %v1637, %v1805
    %1807 = vmatmul.bf16.gmra.mxu0 %v973
    %v1808 = vpop.f32.mrf.mxu0
    %v1809 = vadd.f32 %v1640, %v1808
    %v1810 = vpop.f32.mrf.mxu0
    %v1811 = vadd.f32 %v1642, %v1810
    %1812 = vmatmul.bf16.gmra.mxu0 %v975
    %v1813 = vpop.f32.mrf.mxu0
    %v1814 = vadd.f32 %v1645, %v1813
    %v1815 = vpop.f32.mrf.mxu0
    %v1816 = vadd.f32 %v1647, %v1815
    %1817 = vmatmul.bf16.gmra.mxu0 %v977
    %v1818 = vpop.f32.mrf.mxu0
    %v1819 = vadd.f32 %v1650, %v1818
    %v1820 = vpop.f32.mrf.mxu0
    %v1821 = vadd.f32 %v1652, %v1820
    %1822 = vmatmul.bf16.gmra.mxu0 %v979
    %v1823 = vpop.f32.mrf.mxu0
    %v1824 = vadd.f32 %v1655, %v1823
    %v1825 = vpop.f32.mrf.mxu0
    %v1826 = vadd.f32 %v1657, %v1825
    %1827 = vmatmul.bf16.gmra.mxu0 %v981
    %v1828 = vpop.f32.mrf.mxu0
    %v1829 = vadd.f32 %v1660, %v1828
    %v1830 = vpop.f32.mrf.mxu0
    %v1831 = vadd.f32 %v1662, %v1830
    %1832 = vmatmul.bf16.gmra.mxu0 %v983
    %v1833 = vpop.f32.mrf.mxu0
    %v1834 = vadd.f32 %v1665, %v1833
    %v1835 = vpop.f32.mrf.mxu0
    %v1836 = vadd.f32 %v1667, %v1835
    %1837 = vmatmul.bf16.gmra.mxu0 %v985
    %v1838 = vpop.f32.mrf.mxu0
    %v1839 = vadd.f32 %v1670, %v1838
    %v1840 = vpop.f32.mrf.mxu0
    %v1841 = vadd.f32 %v1672, %v1840
    %1842 = vmatmul.bf16.gmra.mxu0 %v987
    %v1843 = vpop.f32.mrf.mxu0
    %v1844 = vadd.f32 %v1675, %v1843
    %v1845 = vpop.f32.mrf.mxu0
    %v1846 = vadd.f32 %v1677, %v1845
    %1847 = vmatmul.bf16.gmra.mxu0 %v989
    %v1848 = vpop.f32.mrf.mxu0
    %v1849 = vadd.f32 %v1680, %v1848
    %v1850 = vpop.f32.mrf.mxu0
    %v1851 = vadd.f32 %v1682, %v1850
    %1852 = vmatmul.bf16.gmra.mxu0 %v991
    %v1853 = vpop.f32.mrf.mxu0
    %v1854 = vadd.f32 %v1685, %v1853
    %v1855 = vpop.f32.mrf.mxu0
    %v1856 = vadd.f32 %v1687, %v1855
    %1857 = vmatmul.bf16.gmra.mxu0 %v993
    %v1858 = vpop.f32.mrf.mxu0
    %v1859 = vadd.f32 %v1690, %v1858
    %v1860 = vpop.f32.mrf.mxu0
    %v1861 = vadd.f32 %v1692, %v1860
    %1862 = vmatmul.bf16.gmra.mxu0 %v995
    %v1863 = vpop.f32.mrf.mxu0
    %v1864 = vadd.f32 %v1695, %v1863
    %v1865 = vpop.f32.mrf.mxu0
    %v1866 = vadd.f32 %v1697, %v1865
    %1867 = vmatmul.bf16.gmra.mxu0 %v997
    %v1868 = vpop.f32.mrf.mxu0
    %v1869 = vadd.f32 %v1700, %v1868
    %v1870 = vpop.f32.mrf.mxu0
    %v1871 = vadd.f32 %v1702, %v1870
    %1872 = vmatmul.bf16.gmra.mxu0 %v999
    %v1873 = vpop.f32.mrf.mxu0
    %v1874 = vadd.f32 %v1705, %v1873
    %v1875 = vpop.f32.mrf.mxu0
    %v1876 = vadd.f32 %v1707, %v1875
    %1877 = vmatmul.bf16.gmra.mxu0 %v1001
    %v1878 = vpop.f32.mrf.mxu0
    %v1879 = vadd.f32 %v1710, %v1878
    %v1880 = vpop.f32.mrf.mxu0
    %v1881 = vadd.f32 %v1712, %v1880
    %1882 = vmatmul.bf16.gmra.mxu0 %v1003
    %v1883 = vpop.f32.mrf.mxu0
    %v1884 = vadd.f32 %v1715, %v1883
    %v1885 = vpop.f32.mrf.mxu0
    %v1886 = vadd.f32 %v1717, %v1885
    %1887 = vmatmul.bf16.gmra.mxu0 %v1005
    %v1888 = vpop.f32.mrf.mxu0
    %v1889 = vadd.f32 %v1720, %v1888
    %v1890 = vpop.f32.mrf.mxu0
    %v1891 = vadd.f32 %v1722, %v1890
    %1892 = vmatmul.bf16.gmra.mxu0 %v1007
    %v1893 = vpop.f32.mrf.mxu0
    %v1894 = vadd.f32 %v1725, %v1893
    %v1895 = vpop.f32.mrf.mxu0
    %v1896 = vadd.f32 %v1727, %v1895
    %1897 = vmatmul.bf16.gmra.mxu0 %v1009
    %v1898 = vpop.f32.mrf.mxu0
    %v1899 = vadd.f32 %v1730, %v1898
    %v1900 = vpop.f32.mrf.mxu0
    %v1901 = vadd.f32 %v1732, %v1900
    %1902 = vmatmul.bf16.gmra.mxu0 %v1011
    %v1903 = vpop.f32.mrf.mxu0
    %v1904 = vadd.f32 %v1735, %v1903
    %v1905 = vpop.f32.mrf.mxu0
    %v1906 = vadd.f32 %v1737, %v1905
    %1907 = vmatmul.bf16.gmra.mxu0 %v1013
    %v1908 = vpop.f32.mrf.mxu0
    %v1909 = vadd.f32 %v1740, %v1908
    %v1910 = vpop.f32.mrf.mxu0
    %v1911 = vadd.f32 %v1742, %v1910
    %1912 = vmatmul.bf16.gmra.mxu0 %v1015
    %v1913 = vpop.f32.mrf.mxu0
    %v1914 = vadd.f32 %v1745, %v1913
    %v1915 = vpop.f32.mrf.mxu0
    %v1916 = vadd.f32 %v1747, %v1915
    %1917 = vmatmul.bf16.gmra.mxu0 %v1017
    %v1918 = vpop.f32.mrf.mxu0
    %v1919 = vadd.f32 %v1750, %v1918
    %v1920 = vpop.f32.mrf.mxu0
    %v1921 = vadd.f32 %v1752, %v1920
    %1922 = vmatmul.bf16.gmra.mxu0 %v1019
    %v1923 = vpop.f32.mrf.mxu0
    %v1924 = vadd.f32 %v1755, %v1923
    %v1925 = vpop.f32.mrf.mxu0
    %v1926 = vadd.f32 %v1757, %v1925
    %1927 = vmatmul.bf16.gmra.mxu0 %v1021
    %v1928 = vpop.f32.mrf.mxu0
    %v1929 = vadd.f32 %v1760, %v1928
    %v1930 = vpop.f32.mrf.mxu0
    %v1931 = vadd.f32 %v1762, %v1930
    %1932 = vmatmul.bf16.gmra.mxu0 %v1023
    %v1933 = vpop.f32.mrf.mxu0
    %v1934 = vadd.f32 %v1765, %v1933
    %v1935 = vpop.f32.mrf.mxu0
    %v1936 = vadd.f32 %v1767, %v1935
    %1937 = vdwg.mxu0
    %1938 = vmatpush.bf16.msra.mxu0 %v1451
    %1939 = vmatpush.bf16.msra.mxu0 %v1445
    %1940 = vmatpush.bf16.msra.mxu0 %v1439
    %1941 = vmatpush.bf16.msra.mxu0 %v1433
    %1942 = vmatpush.bf16.msra.mxu0 %v1427
    %1943 = vmatpush.bf16.msra.mxu0 %v1421
    %1944 = vmatpush.bf16.msra.mxu0 %v1415
    %1945 = vmatpush.bf16.msra.mxu0 %v1409
    %1946 = vmatmul.bf16.gmra.mxu0 %v960
    %v1947 = vpop.f32.mrf.mxu0
    %v1948 = vadd.f32 0.0, %v1947
    %v1949 = vpop.f32.mrf.mxu0
    %v1950 = vadd.f32 0.0, %v1949
    %1951 = vmatmul.bf16.gmra.mxu0 %v962
    %v1952 = vpop.f32.mrf.mxu0
    %v1953 = vadd.f32 0.0, %v1952
    %v1954 = vpop.f32.mrf.mxu0
    %v1955 = vadd.f32 0.0, %v1954
    %1956 = vmatmul.bf16.gmra.mxu0 %v964
    %v1957 = vpop.f32.mrf.mxu0
    %v1958 = vadd.f32 0.0, %v1957
    %v1959 = vpop.f32.mrf.mxu0
    %v1960 = vadd.f32 0.0, %v1959
    %1961 = vmatmul.bf16.gmra.mxu0 %v966
    %v1962 = vpop.f32.mrf.mxu0
    %v1963 = vadd.f32 0.0, %v1962
    %v1964 = vpop.f32.mrf.mxu0
    %v1965 = vadd.f32 0.0, %v1964
    %1966 = vmatmul.bf16.gmra.mxu0 %v968
    %v1967 = vpop.f32.mrf.mxu0
    %v1968 = vadd.f32 0.0, %v1967
    %v1969 = vpop.f32.mrf.mxu0
    %v1970 = vadd.f32 0.0, %v1969
    %1971 = vmatmul.bf16.gmra.mxu0 %v970
    %v1972 = vpop.f32.mrf.mxu0
    %v1973 = vadd.f32 0.0, %v1972
    %v1974 = vpop.f32.mrf.mxu0
    %v1975 = vadd.f32 0.0, %v1974
    %1976 = vmatmul.bf16.gmra.mxu0 %v972
    %v1977 = vpop.f32.mrf.mxu0
    %v1978 = vadd.f32 0.0, %v1977
    %v1979 = vpop.f32.mrf.mxu0
    %v1980 = vadd.f32 0.0, %v1979
    %1981 = vmatmul.bf16.gmra.mxu0 %v974
    %v1982 = vpop.f32.mrf.mxu0
    %v1983 = vadd.f32 0.0, %v1982
    %v1984 = vpop.f32.mrf.mxu0
    %v1985 = vadd.f32 0.0, %v1984
    %1986 = vmatmul.bf16.gmra.mxu0 %v976
    %v1987 = vpop.f32.mrf.mxu0
    %v1988 = vadd.f32 0.0, %v1987
    %v1989 = vpop.f32.mrf.mxu0
    %v1990 = vadd.f32 0.0, %v1989
    %1991 = vmatmul.bf16.gmra.mxu0 %v978
    %v1992 = vpop.f32.mrf.mxu0
    %v1993 = vadd.f32 0.0, %v1992
    %v1994 = vpop.f32.mrf.mxu0
    %v1995 = vadd.f32 0.0, %v1994
    %1996 = vmatmul.bf16.gmra.mxu0 %v980
    %v1997 = vpop.f32.mrf.mxu0
    %v1998 = vadd.f32 0.0, %v1997
    %v1999 = vpop.f32.mrf.mxu0
    %v2000 = vadd.f32 0.0, %v1999
    %2001 = vmatmul.bf16.gmra.mxu0 %v982
    %v2002 = vpop.f32.mrf.mxu0
    %v2003 = vadd.f32 0.0, %v2002
    %v2004 = vpop.f32.mrf.mxu0
    %v2005 = vadd.f32 0.0, %v2004
    %2006 = vmatmul.bf16.gmra.mxu0 %v984
    %v2007 = vpop.f32.mrf.mxu0
    %v2008 = vadd.f32 0.0, %v2007
    %v2009 = vpop.f32.mrf.mxu0
    %v2010 = vadd.f32 0.0, %v2009
    %2011 = vmatmul.bf16.gmra.mxu0 %v986
    %v2012 = vpop.f32.mrf.mxu0
    %v2013 = vadd.f32 0.0, %v2012
    %v2014 = vpop.f32.mrf.mxu0
    %v2015 = vadd.f32 0.0, %v2014
    %2016 = vmatmul.bf16.gmra.mxu0 %v988
    %v2017 = vpop.f32.mrf.mxu0
    %v2018 = vadd.f32 0.0, %v2017
    %v2019 = vpop.f32.mrf.mxu0
    %v2020 = vadd.f32 0.0, %v2019
    %2021 = vmatmul.bf16.gmra.mxu0 %v990
    %v2022 = vpop.f32.mrf.mxu0
    %v2023 = vadd.f32 0.0, %v2022
    %v2024 = vpop.f32.mrf.mxu0
    %v2025 = vadd.f32 0.0, %v2024
    %2026 = vmatmul.bf16.gmra.mxu0 %v992
    %v2027 = vpop.f32.mrf.mxu0
    %v2028 = vadd.f32 0.0, %v2027
    %v2029 = vpop.f32.mrf.mxu0
    %v2030 = vadd.f32 0.0, %v2029
    %2031 = vmatmul.bf16.gmra.mxu0 %v994
    %v2032 = vpop.f32.mrf.mxu0
    %v2033 = vadd.f32 0.0, %v2032
    %v2034 = vpop.f32.mrf.mxu0
    %v2035 = vadd.f32 0.0, %v2034
    %2036 = vmatmul.bf16.gmra.mxu0 %v996
    %v2037 = vpop.f32.mrf.mxu0
    %v2038 = vadd.f32 0.0, %v2037
    %v2039 = vpop.f32.mrf.mxu0
    %v2040 = vadd.f32 0.0, %v2039
    %2041 = vmatmul.bf16.gmra.mxu0 %v998
    %v2042 = vpop.f32.mrf.mxu0
    %v2043 = vadd.f32 0.0, %v2042
    %v2044 = vpop.f32.mrf.mxu0
    %v2045 = vadd.f32 0.0, %v2044
    %2046 = vmatmul.bf16.gmra.mxu0 %v1000
    %v2047 = vpop.f32.mrf.mxu0
    %v2048 = vadd.f32 0.0, %v2047
    %v2049 = vpop.f32.mrf.mxu0
    %v2050 = vadd.f32 0.0, %v2049
    %2051 = vmatmul.bf16.gmra.mxu0 %v1002
    %v2052 = vpop.f32.mrf.mxu0
    %v2053 = vadd.f32 0.0, %v2052
    %v2054 = vpop.f32.mrf.mxu0
    %v2055 = vadd.f32 0.0, %v2054
    %2056 = vmatmul.bf16.gmra.mxu0 %v1004
    %v2057 = vpop.f32.mrf.mxu0
    %v2058 = vadd.f32 0.0, %v2057
    %v2059 = vpop.f32.mrf.mxu0
    %v2060 = vadd.f32 0.0, %v2059
    %2061 = vmatmul.bf16.gmra.mxu0 %v1006
    %v2062 = vpop.f32.mrf.mxu0
    %v2063 = vadd.f32 0.0, %v2062
    %v2064 = vpop.f32.mrf.mxu0
    %v2065 = vadd.f32 0.0, %v2064
    %2066 = vmatmul.bf16.gmra.mxu0 %v1008
    %v2067 = vpop.f32.mrf.mxu0
    %v2068 = vadd.f32 0.0, %v2067
    %v2069 = vpop.f32.mrf.mxu0
    %v2070 = vadd.f32 0.0, %v2069
    %2071 = vmatmul.bf16.gmra.mxu0 %v1010
    %v2072 = vpop.f32.mrf.mxu0
    %v2073 = vadd.f32 0.0, %v2072
    %v2074 = vpop.f32.mrf.mxu0
    %v2075 = vadd.f32 0.0, %v2074
    %2076 = vmatmul.bf16.gmra.mxu0 %v1012
    %v2077 = vpop.f32.mrf.mxu0
    %v2078 = vadd.f32 0.0, %v2077
    %v2079 = vpop.f32.mrf.mxu0
    %v2080 = vadd.f32 0.0, %v2079
    %2081 = vmatmul.bf16.gmra.mxu0 %v1014
    %v2082 = vpop.f32.mrf.mxu0
    %v2083 = vadd.f32 0.0, %v2082
    %v2084 = vpop.f32.mrf.mxu0
    %v2085 = vadd.f32 0.0, %v2084
    %2086 = vmatmul.bf16.gmra.mxu0 %v1016
    %v2087 = vpop.f32.mrf.mxu0
    %v2088 = vadd.f32 0.0, %v2087
    %v2089 = vpop.f32.mrf.mxu0
    %v2090 = vadd.f32 0.0, %v2089
    %2091 = vmatmul.bf16.gmra.mxu0 %v1018
    %v2092 = vpop.f32.mrf.mxu0
    %v2093 = vadd.f32 0.0, %v2092
    %v2094 = vpop.f32.mrf.mxu0
    %v2095 = vadd.f32 0.0, %v2094
    %2096 = vmatmul.bf16.gmra.mxu0 %v1020
    %v2097 = vpop.f32.mrf.mxu0
    %v2098 = vadd.f32 0.0, %v2097
    %v2099 = vpop.f32.mrf.mxu0
    %v2100 = vadd.f32 0.0, %v2099
    %2101 = vmatmul.bf16.gmra.mxu0 %v1022
    %v2102 = vpop.f32.mrf.mxu0
    %v2103 = vadd.f32 0.0, %v2102
    %v2104 = vpop.f32.mrf.mxu0
    %v2105 = vadd.f32 0.0, %v2104
    %2106 = vdwg.mxu0
    %2107 = vmatpush.bf16.msra.mxu0 %v1499
    %2108 = vmatpush.bf16.msra.mxu0 %v1493
    %2109 = vmatpush.bf16.msra.mxu0 %v1487
    %2110 = vmatpush.bf16.msra.mxu0 %v1481
    %2111 = vmatpush.bf16.msra.mxu0 %v1475
    %2112 = vmatpush.bf16.msra.mxu0 %v1469
    %2113 = vmatpush.bf16.msra.mxu0 %v1463
    %2114 = vmatpush.bf16.msra.mxu0 %v1457
    %2115 = vmatmul.bf16.gmra.mxu0 %v961
    %v2116 = vpop.f32.mrf.mxu0
    %v2117 = vadd.f32 %v1948, %v2116
    %v2118 = vpop.f32.mrf.mxu0
    %v2119 = vadd.f32 %v1950, %v2118
    %2120 = vmatmul.bf16.gmra.mxu0 %v963
    %v2121 = vpop.f32.mrf.mxu0
    %v2122 = vadd.f32 %v1953, %v2121
    %v2123 = vpop.f32.mrf.mxu0
    %v2124 = vadd.f32 %v1955, %v2123
    %2125 = vmatmul.bf16.gmra.mxu0 %v965
    %v2126 = vpop.f32.mrf.mxu0
    %v2127 = vadd.f32 %v1958, %v2126
    %v2128 = vpop.f32.mrf.mxu0
    %v2129 = vadd.f32 %v1960, %v2128
    %2130 = vmatmul.bf16.gmra.mxu0 %v967
    %v2131 = vpop.f32.mrf.mxu0
    %v2132 = vadd.f32 %v1963, %v2131
    %v2133 = vpop.f32.mrf.mxu0
    %v2134 = vadd.f32 %v1965, %v2133
    %2135 = vmatmul.bf16.gmra.mxu0 %v969
    %v2136 = vpop.f32.mrf.mxu0
    %v2137 = vadd.f32 %v1968, %v2136
    %v2138 = vpop.f32.mrf.mxu0
    %v2139 = vadd.f32 %v1970, %v2138
    %2140 = vmatmul.bf16.gmra.mxu0 %v971
    %v2141 = vpop.f32.mrf.mxu0
    %v2142 = vadd.f32 %v1973, %v2141
    %v2143 = vpop.f32.mrf.mxu0
    %v2144 = vadd.f32 %v1975, %v2143
    %2145 = vmatmul.bf16.gmra.mxu0 %v973
    %v2146 = vpop.f32.mrf.mxu0
    %v2147 = vadd.f32 %v1978, %v2146
    %v2148 = vpop.f32.mrf.mxu0
    %v2149 = vadd.f32 %v1980, %v2148
    %2150 = vmatmul.bf16.gmra.mxu0 %v975
    %v2151 = vpop.f32.mrf.mxu0
    %v2152 = vadd.f32 %v1983, %v2151
    %v2153 = vpop.f32.mrf.mxu0
    %v2154 = vadd.f32 %v1985, %v2153
    %2155 = vmatmul.bf16.gmra.mxu0 %v977
    %v2156 = vpop.f32.mrf.mxu0
    %v2157 = vadd.f32 %v1988, %v2156
    %v2158 = vpop.f32.mrf.mxu0
    %v2159 = vadd.f32 %v1990, %v2158
    %2160 = vmatmul.bf16.gmra.mxu0 %v979
    %v2161 = vpop.f32.mrf.mxu0
    %v2162 = vadd.f32 %v1993, %v2161
    %v2163 = vpop.f32.mrf.mxu0
    %v2164 = vadd.f32 %v1995, %v2163
    %2165 = vmatmul.bf16.gmra.mxu0 %v981
    %v2166 = vpop.f32.mrf.mxu0
    %v2167 = vadd.f32 %v1998, %v2166
    %v2168 = vpop.f32.mrf.mxu0
    %v2169 = vadd.f32 %v2000, %v2168
    %2170 = vmatmul.bf16.gmra.mxu0 %v983
    %v2171 = vpop.f32.mrf.mxu0
    %v2172 = vadd.f32 %v2003, %v2171
    %v2173 = vpop.f32.mrf.mxu0
    %v2174 = vadd.f32 %v2005, %v2173
    %2175 = vmatmul.bf16.gmra.mxu0 %v985
    %v2176 = vpop.f32.mrf.mxu0
    %v2177 = vadd.f32 %v2008, %v2176
    %v2178 = vpop.f32.mrf.mxu0
    %v2179 = vadd.f32 %v2010, %v2178
    %2180 = vmatmul.bf16.gmra.mxu0 %v987
    %v2181 = vpop.f32.mrf.mxu0
    %v2182 = vadd.f32 %v2013, %v2181
    %v2183 = vpop.f32.mrf.mxu0
    %v2184 = vadd.f32 %v2015, %v2183
    %2185 = vmatmul.bf16.gmra.mxu0 %v989
    %v2186 = vpop.f32.mrf.mxu0
    %v2187 = vadd.f32 %v2018, %v2186
    %v2188 = vpop.f32.mrf.mxu0
    %v2189 = vadd.f32 %v2020, %v2188
    %2190 = vmatmul.bf16.gmra.mxu0 %v991
    %v2191 = vpop.f32.mrf.mxu0
    %v2192 = vadd.f32 %v2023, %v2191
    %v2193 = vpop.f32.mrf.mxu0
    %v2194 = vadd.f32 %v2025, %v2193
    %2195 = vmatmul.bf16.gmra.mxu0 %v993
    %v2196 = vpop.f32.mrf.mxu0
    %v2197 = vadd.f32 %v2028, %v2196
    %v2198 = vpop.f32.mrf.mxu0
    %v2199 = vadd.f32 %v2030, %v2198
    %2200 = vmatmul.bf16.gmra.mxu0 %v995
    %v2201 = vpop.f32.mrf.mxu0
    %v2202 = vadd.f32 %v2033, %v2201
    %v2203 = vpop.f32.mrf.mxu0
    %v2204 = vadd.f32 %v2035, %v2203
    %2205 = vmatmul.bf16.gmra.mxu0 %v997
    %v2206 = vpop.f32.mrf.mxu0
    %v2207 = vadd.f32 %v2038, %v2206
    %v2208 = vpop.f32.mrf.mxu0
    %v2209 = vadd.f32 %v2040, %v2208
    %2210 = vmatmul.bf16.gmra.mxu0 %v999
    %v2211 = vpop.f32.mrf.mxu0
    %v2212 = vadd.f32 %v2043, %v2211
    %v2213 = vpop.f32.mrf.mxu0
    %v2214 = vadd.f32 %v2045, %v2213
    %2215 = vmatmul.bf16.gmra.mxu0 %v1001
    %v2216 = vpop.f32.mrf.mxu0
    %v2217 = vadd.f32 %v2048, %v2216
    %v2218 = vpop.f32.mrf.mxu0
    %v2219 = vadd.f32 %v2050, %v2218
    %2220 = vmatmul.bf16.gmra.mxu0 %v1003
    %v2221 = vpop.f32.mrf.mxu0
    %v2222 = vadd.f32 %v2053, %v2221
    %v2223 = vpop.f32.mrf.mxu0
    %v2224 = vadd.f32 %v2055, %v2223
    %2225 = vmatmul.bf16.gmra.mxu0 %v1005
    %v2226 = vpop.f32.mrf.mxu0
    %v2227 = vadd.f32 %v2058, %v2226
    %v2228 = vpop.f32.mrf.mxu0
    %v2229 = vadd.f32 %v2060, %v2228
    %2230 = vmatmul.bf16.gmra.mxu0 %v1007
    %v2231 = vpop.f32.mrf.mxu0
    %v2232 = vadd.f32 %v2063, %v2231
    %v2233 = vpop.f32.mrf.mxu0
    %v2234 = vadd.f32 %v2065, %v2233
    %2235 = vmatmul.bf16.gmra.mxu0 %v1009
    %v2236 = vpop.f32.mrf.mxu0
    %v2237 = vadd.f32 %v2068, %v2236
    %v2238 = vpop.f32.mrf.mxu0
    %v2239 = vadd.f32 %v2070, %v2238
    %2240 = vmatmul.bf16.gmra.mxu0 %v1011
    %v2241 = vpop.f32.mrf.mxu0
    %v2242 = vadd.f32 %v2073, %v2241
    %v2243 = vpop.f32.mrf.mxu0
    %v2244 = vadd.f32 %v2075, %v2243
    %2245 = vmatmul.bf16.gmra.mxu0 %v1013
    %v2246 = vpop.f32.mrf.mxu0
    %v2247 = vadd.f32 %v2078, %v2246
    %v2248 = vpop.f32.mrf.mxu0
    %v2249 = vadd.f32 %v2080, %v2248
    %2250 = vmatmul.bf16.gmra.mxu0 %v1015
    %v2251 = vpop.f32.mrf.mxu0
    %v2252 = vadd.f32 %v2083, %v2251
    %v2253 = vpop.f32.mrf.mxu0
    %v2254 = vadd.f32 %v2085, %v2253
    %2255 = vmatmul.bf16.gmra.mxu0 %v1017
    %v2256 = vpop.f32.mrf.mxu0
    %v2257 = vadd.f32 %v2088, %v2256
    %v2258 = vpop.f32.mrf.mxu0
    %v2259 = vadd.f32 %v2090, %v2258
    %2260 = vmatmul.bf16.gmra.mxu0 %v1019
    %v2261 = vpop.f32.mrf.mxu0
    %v2262 = vadd.f32 %v2093, %v2261
    %v2263 = vpop.f32.mrf.mxu0
    %v2264 = vadd.f32 %v2095, %v2263
    %2265 = vmatmul.bf16.gmra.mxu0 %v1021
    %v2266 = vpop.f32.mrf.mxu0
    %v2267 = vadd.f32 %v2098, %v2266
    %v2268 = vpop.f32.mrf.mxu0
    %v2269 = vadd.f32 %v2100, %v2268
    %2270 = vmatmul.bf16.gmra.mxu0 %v1023
    %v2271 = vpop.f32.mrf.mxu0
    %v2272 = vadd.f32 %v2103, %v2271
    %v2273 = vpop.f32.mrf.mxu0
    %v2274 = vadd.f32 %v2105, %v2273
    %2275 = vdwg.mxu0
    %2276 = vmatpush.bf16.msra.mxu0 %v1452
    %2277 = vmatpush.bf16.msra.mxu0 %v1446
    %2278 = vmatpush.bf16.msra.mxu0 %v1440
    %2279 = vmatpush.bf16.msra.mxu0 %v1434
    %2280 = vmatpush.bf16.msra.mxu0 %v1428
    %2281 = vmatpush.bf16.msra.mxu0 %v1422
    %2282 = vmatpush.bf16.msra.mxu0 %v1416
    %2283 = vmatpush.bf16.msra.mxu0 %v1410
    %2284 = vmatmul.bf16.gmra.mxu0 %v960
    %v2285 = vpop.f32.mrf.mxu0
    %v2286 = vadd.f32 0.0, %v2285
    %v2287 = vpop.f32.mrf.mxu0
    %v2288 = vadd.f32 0.0, %v2287
    %2289 = vmatmul.bf16.gmra.mxu0 %v962
    %v2290 = vpop.f32.mrf.mxu0
    %v2291 = vadd.f32 0.0, %v2290
    %v2292 = vpop.f32.mrf.mxu0
    %v2293 = vadd.f32 0.0, %v2292
    %2294 = vmatmul.bf16.gmra.mxu0 %v964
    %v2295 = vpop.f32.mrf.mxu0
    %v2296 = vadd.f32 0.0, %v2295
    %v2297 = vpop.f32.mrf.mxu0
    %v2298 = vadd.f32 0.0, %v2297
    %2299 = vmatmul.bf16.gmra.mxu0 %v966
    %v2300 = vpop.f32.mrf.mxu0
    %v2301 = vadd.f32 0.0, %v2300
    %v2302 = vpop.f32.mrf.mxu0
    %v2303 = vadd.f32 0.0, %v2302
    %2304 = vmatmul.bf16.gmra.mxu0 %v968
    %v2305 = vpop.f32.mrf.mxu0
    %v2306 = vadd.f32 0.0, %v2305
    %v2307 = vpop.f32.mrf.mxu0
    %v2308 = vadd.f32 0.0, %v2307
    %2309 = vmatmul.bf16.gmra.mxu0 %v970
    %v2310 = vpop.f32.mrf.mxu0
    %v2311 = vadd.f32 0.0, %v2310
    %v2312 = vpop.f32.mrf.mxu0
    %v2313 = vadd.f32 0.0, %v2312
    %2314 = vmatmul.bf16.gmra.mxu0 %v972
    %v2315 = vpop.f32.mrf.mxu0
    %v2316 = vadd.f32 0.0, %v2315
    %v2317 = vpop.f32.mrf.mxu0
    %v2318 = vadd.f32 0.0, %v2317
    %2319 = vmatmul.bf16.gmra.mxu0 %v974
    %v2320 = vpop.f32.mrf.mxu0
    %v2321 = vadd.f32 0.0, %v2320
    %v2322 = vpop.f32.mrf.mxu0
    %v2323 = vadd.f32 0.0, %v2322
    %2324 = vmatmul.bf16.gmra.mxu0 %v976
    %v2325 = vpop.f32.mrf.mxu0
    %v2326 = vadd.f32 0.0, %v2325
    %v2327 = vpop.f32.mrf.mxu0
    %v2328 = vadd.f32 0.0, %v2327
    %2329 = vmatmul.bf16.gmra.mxu0 %v978
    %v2330 = vpop.f32.mrf.mxu0
    %v2331 = vadd.f32 0.0, %v2330
    %v2332 = vpop.f32.mrf.mxu0
    %v2333 = vadd.f32 0.0, %v2332
    %2334 = vmatmul.bf16.gmra.mxu0 %v980
    %v2335 = vpop.f32.mrf.mxu0
    %v2336 = vadd.f32 0.0, %v2335
    %v2337 = vpop.f32.mrf.mxu0
    %v2338 = vadd.f32 0.0, %v2337
    %2339 = vmatmul.bf16.gmra.mxu0 %v982
    %v2340 = vpop.f32.mrf.mxu0
    %v2341 = vadd.f32 0.0, %v2340
    %v2342 = vpop.f32.mrf.mxu0
    %v2343 = vadd.f32 0.0, %v2342
    %2344 = vmatmul.bf16.gmra.mxu0 %v984
    %v2345 = vpop.f32.mrf.mxu0
    %v2346 = vadd.f32 0.0, %v2345
    %v2347 = vpop.f32.mrf.mxu0
    %v2348 = vadd.f32 0.0, %v2347
    %2349 = vmatmul.bf16.gmra.mxu0 %v986
    %v2350 = vpop.f32.mrf.mxu0
    %v2351 = vadd.f32 0.0, %v2350
    %v2352 = vpop.f32.mrf.mxu0
    %v2353 = vadd.f32 0.0, %v2352
    %2354 = vmatmul.bf16.gmra.mxu0 %v988
    %v2355 = vpop.f32.mrf.mxu0
    %v2356 = vadd.f32 0.0, %v2355
    %v2357 = vpop.f32.mrf.mxu0
    %v2358 = vadd.f32 0.0, %v2357
    %2359 = vmatmul.bf16.gmra.mxu0 %v990
    %v2360 = vpop.f32.mrf.mxu0
    %v2361 = vadd.f32 0.0, %v2360
    %v2362 = vpop.f32.mrf.mxu0
    %v2363 = vadd.f32 0.0, %v2362
    %2364 = vmatmul.bf16.gmra.mxu0 %v992
    %v2365 = vpop.f32.mrf.mxu0
    %v2366 = vadd.f32 0.0, %v2365
    %v2367 = vpop.f32.mrf.mxu0
    %v2368 = vadd.f32 0.0, %v2367
    %2369 = vmatmul.bf16.gmra.mxu0 %v994
    %v2370 = vpop.f32.mrf.mxu0
    %v2371 = vadd.f32 0.0, %v2370
    %v2372 = vpop.f32.mrf.mxu0
    %v2373 = vadd.f32 0.0, %v2372
    %2374 = vmatmul.bf16.gmra.mxu0 %v996
    %v2375 = vpop.f32.mrf.mxu0
    %v2376 = vadd.f32 0.0, %v2375
    %v2377 = vpop.f32.mrf.mxu0
    %v2378 = vadd.f32 0.0, %v2377
    %2379 = vmatmul.bf16.gmra.mxu0 %v998
    %v2380 = vpop.f32.mrf.mxu0
    %v2381 = vadd.f32 0.0, %v2380
    %v2382 = vpop.f32.mrf.mxu0
    %v2383 = vadd.f32 0.0, %v2382
    %2384 = vmatmul.bf16.gmra.mxu0 %v1000
    %v2385 = vpop.f32.mrf.mxu0
    %v2386 = vadd.f32 0.0, %v2385
    %v2387 = vpop.f32.mrf.mxu0
    %v2388 = vadd.f32 0.0, %v2387
    %2389 = vmatmul.bf16.gmra.mxu0 %v1002
    %v2390 = vpop.f32.mrf.mxu0
    %v2391 = vadd.f32 0.0, %v2390
    %v2392 = vpop.f32.mrf.mxu0
    %v2393 = vadd.f32 0.0, %v2392
    %2394 = vmatmul.bf16.gmra.mxu0 %v1004
    %v2395 = vpop.f32.mrf.mxu0
    %v2396 = vadd.f32 0.0, %v2395
    %v2397 = vpop.f32.mrf.mxu0
    %v2398 = vadd.f32 0.0, %v2397
    %2399 = vmatmul.bf16.gmra.mxu0 %v1006
    %v2400 = vpop.f32.mrf.mxu0
    %v2401 = vadd.f32 0.0, %v2400
    %v2402 = vpop.f32.mrf.mxu0
    %v2403 = vadd.f32 0.0, %v2402
    %2404 = vmatmul.bf16.gmra.mxu0 %v1008
    %v2405 = vpop.f32.mrf.mxu0
    %v2406 = vadd.f32 0.0, %v2405
    %v2407 = vpop.f32.mrf.mxu0
    %v2408 = vadd.f32 0.0, %v2407
    %2409 = vmatmul.bf16.gmra.mxu0 %v1010
    %v2410 = vpop.f32.mrf.mxu0
    %v2411 = vadd.f32 0.0, %v2410
    %v2412 = vpop.f32.mrf.mxu0
    %v2413 = vadd.f32 0.0, %v2412
    %2414 = vmatmul.bf16.gmra.mxu0 %v1012
    %v2415 = vpop.f32.mrf.mxu0
    %v2416 = vadd.f32 0.0, %v2415
    %v2417 = vpop.f32.mrf.mxu0
    %v2418 = vadd.f32 0.0, %v2417
    %2419 = vmatmul.bf16.gmra.mxu0 %v1014
    %v2420 = vpop.f32.mrf.mxu0
    %v2421 = vadd.f32 0.0, %v2420
    %v2422 = vpop.f32.mrf.mxu0
    %v2423 = vadd.f32 0.0, %v2422
    %2424 = vmatmul.bf16.gmra.mxu0 %v1016
    %v2425 = vpop.f32.mrf.mxu0
    %v2426 = vadd.f32 0.0, %v2425
    %v2427 = vpop.f32.mrf.mxu0
    %v2428 = vadd.f32 0.0, %v2427
    %2429 = vmatmul.bf16.gmra.mxu0 %v1018
    %v2430 = vpop.f32.mrf.mxu0
    %v2431 = vadd.f32 0.0, %v2430
    %v2432 = vpop.f32.mrf.mxu0
    %v2433 = vadd.f32 0.0, %v2432
    %2434 = vmatmul.bf16.gmra.mxu0 %v1020
    %v2435 = vpop.f32.mrf.mxu0
    %v2436 = vadd.f32 0.0, %v2435
    %v2437 = vpop.f32.mrf.mxu0
    %v2438 = vadd.f32 0.0, %v2437
    %2439 = vmatmul.bf16.gmra.mxu0 %v1022
    %v2440 = vpop.f32.mrf.mxu0
    %v2441 = vadd.f32 0.0, %v2440
    %v2442 = vpop.f32.mrf.mxu0
    %v2443 = vadd.f32 0.0, %v2442
    %2444 = vdwg.mxu0
    %2445 = vmatpush.bf16.msra.mxu0 %v1500
    %2446 = vmatpush.bf16.msra.mxu0 %v1494
    %2447 = vmatpush.bf16.msra.mxu0 %v1488
    %2448 = vmatpush.bf16.msra.mxu0 %v1482
    %2449 = vmatpush.bf16.msra.mxu0 %v1476
    %2450 = vmatpush.bf16.msra.mxu0 %v1470
    %2451 = vmatpush.bf16.msra.mxu0 %v1464
    %2452 = vmatpush.bf16.msra.mxu0 %v1458
    %2453 = vmatmul.bf16.gmra.mxu0 %v961
    %v2454 = vpop.f32.mrf.mxu0
    %v2455 = vadd.f32 %v2286, %v2454
    %v2456 = vpop.f32.mrf.mxu0
    %v2457 = vadd.f32 %v2288, %v2456
    %2458 = vmatmul.bf16.gmra.mxu0 %v963
    %v2459 = vpop.f32.mrf.mxu0
    %v2460 = vadd.f32 %v2291, %v2459
    %v2461 = vpop.f32.mrf.mxu0
    %v2462 = vadd.f32 %v2293, %v2461
    %2463 = vmatmul.bf16.gmra.mxu0 %v965
    %v2464 = vpop.f32.mrf.mxu0
    %v2465 = vadd.f32 %v2296, %v2464
    %v2466 = vpop.f32.mrf.mxu0
    %v2467 = vadd.f32 %v2298, %v2466
    %2468 = vmatmul.bf16.gmra.mxu0 %v967
    %v2469 = vpop.f32.mrf.mxu0
    %v2470 = vadd.f32 %v2301, %v2469
    %v2471 = vpop.f32.mrf.mxu0
    %v2472 = vadd.f32 %v2303, %v2471
    %2473 = vmatmul.bf16.gmra.mxu0 %v969
    %v2474 = vpop.f32.mrf.mxu0
    %v2475 = vadd.f32 %v2306, %v2474
    %v2476 = vpop.f32.mrf.mxu0
    %v2477 = vadd.f32 %v2308, %v2476
    %2478 = vmatmul.bf16.gmra.mxu0 %v971
    %v2479 = vpop.f32.mrf.mxu0
    %v2480 = vadd.f32 %v2311, %v2479
    %v2481 = vpop.f32.mrf.mxu0
    %v2482 = vadd.f32 %v2313, %v2481
    %2483 = vmatmul.bf16.gmra.mxu0 %v973
    %v2484 = vpop.f32.mrf.mxu0
    %v2485 = vadd.f32 %v2316, %v2484
    %v2486 = vpop.f32.mrf.mxu0
    %v2487 = vadd.f32 %v2318, %v2486
    %2488 = vmatmul.bf16.gmra.mxu0 %v975
    %v2489 = vpop.f32.mrf.mxu0
    %v2490 = vadd.f32 %v2321, %v2489
    %v2491 = vpop.f32.mrf.mxu0
    %v2492 = vadd.f32 %v2323, %v2491
    %2493 = vmatmul.bf16.gmra.mxu0 %v977
    %v2494 = vpop.f32.mrf.mxu0
    %v2495 = vadd.f32 %v2326, %v2494
    %v2496 = vpop.f32.mrf.mxu0
    %v2497 = vadd.f32 %v2328, %v2496
    %2498 = vmatmul.bf16.gmra.mxu0 %v979
    %v2499 = vpop.f32.mrf.mxu0
    %v2500 = vadd.f32 %v2331, %v2499
    %v2501 = vpop.f32.mrf.mxu0
    %v2502 = vadd.f32 %v2333, %v2501
    %2503 = vmatmul.bf16.gmra.mxu0 %v981
    %v2504 = vpop.f32.mrf.mxu0
    %v2505 = vadd.f32 %v2336, %v2504
    %v2506 = vpop.f32.mrf.mxu0
    %v2507 = vadd.f32 %v2338, %v2506
    %2508 = vmatmul.bf16.gmra.mxu0 %v983
    %v2509 = vpop.f32.mrf.mxu0
    %v2510 = vadd.f32 %v2341, %v2509
    %v2511 = vpop.f32.mrf.mxu0
    %v2512 = vadd.f32 %v2343, %v2511
    %2513 = vmatmul.bf16.gmra.mxu0 %v985
    %v2514 = vpop.f32.mrf.mxu0
    %v2515 = vadd.f32 %v2346, %v2514
    %v2516 = vpop.f32.mrf.mxu0
    %v2517 = vadd.f32 %v2348, %v2516
    %2518 = vmatmul.bf16.gmra.mxu0 %v987
    %v2519 = vpop.f32.mrf.mxu0
    %v2520 = vadd.f32 %v2351, %v2519
    %v2521 = vpop.f32.mrf.mxu0
    %v2522 = vadd.f32 %v2353, %v2521
    %2523 = vmatmul.bf16.gmra.mxu0 %v989
    %v2524 = vpop.f32.mrf.mxu0
    %v2525 = vadd.f32 %v2356, %v2524
    %v2526 = vpop.f32.mrf.mxu0
    %v2527 = vadd.f32 %v2358, %v2526
    %2528 = vmatmul.bf16.gmra.mxu0 %v991
    %v2529 = vpop.f32.mrf.mxu0
    %v2530 = vadd.f32 %v2361, %v2529
    %v2531 = vpop.f32.mrf.mxu0
    %v2532 = vadd.f32 %v2363, %v2531
    %2533 = vmatmul.bf16.gmra.mxu0 %v993
    %v2534 = vpop.f32.mrf.mxu0
    %v2535 = vadd.f32 %v2366, %v2534
    %v2536 = vpop.f32.mrf.mxu0
    %v2537 = vadd.f32 %v2368, %v2536
    %2538 = vmatmul.bf16.gmra.mxu0 %v995
    %v2539 = vpop.f32.mrf.mxu0
    %v2540 = vadd.f32 %v2371, %v2539
    %v2541 = vpop.f32.mrf.mxu0
    %v2542 = vadd.f32 %v2373, %v2541
    %2543 = vmatmul.bf16.gmra.mxu0 %v997
    %v2544 = vpop.f32.mrf.mxu0
    %v2545 = vadd.f32 %v2376, %v2544
    %v2546 = vpop.f32.mrf.mxu0
    %v2547 = vadd.f32 %v2378, %v2546
    %2548 = vmatmul.bf16.gmra.mxu0 %v999
    %v2549 = vpop.f32.mrf.mxu0
    %v2550 = vadd.f32 %v2381, %v2549
    %v2551 = vpop.f32.mrf.mxu0
    %v2552 = vadd.f32 %v2383, %v2551
    %2553 = vmatmul.bf16.gmra.mxu0 %v1001
    %v2554 = vpop.f32.mrf.mxu0
    %v2555 = vadd.f32 %v2386, %v2554
    %v2556 = vpop.f32.mrf.mxu0
    %v2557 = vadd.f32 %v2388, %v2556
    %2558 = vmatmul.bf16.gmra.mxu0 %v1003
    %v2559 = vpop.f32.mrf.mxu0
    %v2560 = vadd.f32 %v2391, %v2559
    %v2561 = vpop.f32.mrf.mxu0
    %v2562 = vadd.f32 %v2393, %v2561
    %2563 = vmatmul.bf16.gmra.mxu0 %v1005
    %v2564 = vpop.f32.mrf.mxu0
    %v2565 = vadd.f32 %v2396, %v2564
    %v2566 = vpop.f32.mrf.mxu0
    %v2567 = vadd.f32 %v2398, %v2566
    %2568 = vmatmul.bf16.gmra.mxu0 %v1007
    %v2569 = vpop.f32.mrf.mxu0
    %v2570 = vadd.f32 %v2401, %v2569
    %v2571 = vpop.f32.mrf.mxu0
    %v2572 = vadd.f32 %v2403, %v2571
    %2573 = vmatmul.bf16.gmra.mxu0 %v1009
    %v2574 = vpop.f32.mrf.mxu0
    %v2575 = vadd.f32 %v2406, %v2574
    %v2576 = vpop.f32.mrf.mxu0
    %v2577 = vadd.f32 %v2408, %v2576
    %2578 = vmatmul.bf16.gmra.mxu0 %v1011
    %v2579 = vpop.f32.mrf.mxu0
    %v2580 = vadd.f32 %v2411, %v2579
    %v2581 = vpop.f32.mrf.mxu0
    %v2582 = vadd.f32 %v2413, %v2581
    %2583 = vmatmul.bf16.gmra.mxu0 %v1013
    %v2584 = vpop.f32.mrf.mxu0
    %v2585 = vadd.f32 %v2416, %v2584
    %v2586 = vpop.f32.mrf.mxu0
    %v2587 = vadd.f32 %v2418, %v2586
    %2588 = vmatmul.bf16.gmra.mxu0 %v1015
    %v2589 = vpop.f32.mrf.mxu0
    %v2590 = vadd.f32 %v2421, %v2589
    %v2591 = vpop.f32.mrf.mxu0
    %v2592 = vadd.f32 %v2423, %v2591
    %2593 = vmatmul.bf16.gmra.mxu0 %v1017
    %v2594 = vpop.f32.mrf.mxu0
    %v2595 = vadd.f32 %v2426, %v2594
    %v2596 = vpop.f32.mrf.mxu0
    %v2597 = vadd.f32 %v2428, %v2596
    %2598 = vmatmul.bf16.gmra.mxu0 %v1019
    %v2599 = vpop.f32.mrf.mxu0
    %v2600 = vadd.f32 %v2431, %v2599
    %v2601 = vpop.f32.mrf.mxu0
    %v2602 = vadd.f32 %v2433, %v2601
    %2603 = vmatmul.bf16.gmra.mxu0 %v1021
    %v2604 = vpop.f32.mrf.mxu0
    %v2605 = vadd.f32 %v2436, %v2604
    %v2606 = vpop.f32.mrf.mxu0
    %v2607 = vadd.f32 %v2438, %v2606
    %2608 = vmatmul.bf16.gmra.mxu0 %v1023
    %v2609 = vpop.f32.mrf.mxu0
    %v2610 = vadd.f32 %v2441, %v2609
    %v2611 = vpop.f32.mrf.mxu0
    %v2612 = vadd.f32 %v2443, %v2611
    %2613 = vdwg.mxu0
    %2614 = vmatpush.bf16.msra.mxu0 %v1453
    %2615 = vmatpush.bf16.msra.mxu0 %v1447
    %2616 = vmatpush.bf16.msra.mxu0 %v1441
    %2617 = vmatpush.bf16.msra.mxu0 %v1435
    %2618 = vmatpush.bf16.msra.mxu0 %v1429
    %2619 = vmatpush.bf16.msra.mxu0 %v1423
    %2620 = vmatpush.bf16.msra.mxu0 %v1417
    %2621 = vmatpush.bf16.msra.mxu0 %v1411
    %2622 = vmatmul.bf16.gmra.mxu0 %v960
    %v2623 = vpop.f32.mrf.mxu0
    %v2624 = vadd.f32 0.0, %v2623
    %v2625 = vpop.f32.mrf.mxu0
    %v2626 = vadd.f32 0.0, %v2625
    %2627 = vmatmul.bf16.gmra.mxu0 %v962
    %v2628 = vpop.f32.mrf.mxu0
    %v2629 = vadd.f32 0.0, %v2628
    %v2630 = vpop.f32.mrf.mxu0
    %v2631 = vadd.f32 0.0, %v2630
    %2632 = vmatmul.bf16.gmra.mxu0 %v964
    %v2633 = vpop.f32.mrf.mxu0
    %v2634 = vadd.f32 0.0, %v2633
    %v2635 = vpop.f32.mrf.mxu0
    %v2636 = vadd.f32 0.0, %v2635
    %2637 = vmatmul.bf16.gmra.mxu0 %v966
    %v2638 = vpop.f32.mrf.mxu0
    %v2639 = vadd.f32 0.0, %v2638
    %v2640 = vpop.f32.mrf.mxu0
    %v2641 = vadd.f32 0.0, %v2640
    %2642 = vmatmul.bf16.gmra.mxu0 %v968
    %v2643 = vpop.f32.mrf.mxu0
    %v2644 = vadd.f32 0.0, %v2643
    %v2645 = vpop.f32.mrf.mxu0
    %v2646 = vadd.f32 0.0, %v2645
    %2647 = vmatmul.bf16.gmra.mxu0 %v970
    %v2648 = vpop.f32.mrf.mxu0
    %v2649 = vadd.f32 0.0, %v2648
    %v2650 = vpop.f32.mrf.mxu0
    %v2651 = vadd.f32 0.0, %v2650
    %2652 = vmatmul.bf16.gmra.mxu0 %v972
    %v2653 = vpop.f32.mrf.mxu0
    %v2654 = vadd.f32 0.0, %v2653
    %v2655 = vpop.f32.mrf.mxu0
    %v2656 = vadd.f32 0.0, %v2655
    %2657 = vmatmul.bf16.gmra.mxu0 %v974
    %v2658 = vpop.f32.mrf.mxu0
    %v2659 = vadd.f32 0.0, %v2658
    %v2660 = vpop.f32.mrf.mxu0
    %v2661 = vadd.f32 0.0, %v2660
    %2662 = vmatmul.bf16.gmra.mxu0 %v976
    %v2663 = vpop.f32.mrf.mxu0
    %v2664 = vadd.f32 0.0, %v2663
    %v2665 = vpop.f32.mrf.mxu0
    %v2666 = vadd.f32 0.0, %v2665
    %2667 = vmatmul.bf16.gmra.mxu0 %v978
    %v2668 = vpop.f32.mrf.mxu0
    %v2669 = vadd.f32 0.0, %v2668
    %v2670 = vpop.f32.mrf.mxu0
    %v2671 = vadd.f32 0.0, %v2670
    %2672 = vmatmul.bf16.gmra.mxu0 %v980
    %v2673 = vpop.f32.mrf.mxu0
    %v2674 = vadd.f32 0.0, %v2673
    %v2675 = vpop.f32.mrf.mxu0
    %v2676 = vadd.f32 0.0, %v2675
    %2677 = vmatmul.bf16.gmra.mxu0 %v982
    %v2678 = vpop.f32.mrf.mxu0
    %v2679 = vadd.f32 0.0, %v2678
    %v2680 = vpop.f32.mrf.mxu0
    %v2681 = vadd.f32 0.0, %v2680
    %2682 = vmatmul.bf16.gmra.mxu0 %v984
    %v2683 = vpop.f32.mrf.mxu0
    %v2684 = vadd.f32 0.0, %v2683
    %v2685 = vpop.f32.mrf.mxu0
    %v2686 = vadd.f32 0.0, %v2685
    %2687 = vmatmul.bf16.gmra.mxu0 %v986
    %v2688 = vpop.f32.mrf.mxu0
    %v2689 = vadd.f32 0.0, %v2688
    %v2690 = vpop.f32.mrf.mxu0
    %v2691 = vadd.f32 0.0, %v2690
    %2692 = vmatmul.bf16.gmra.mxu0 %v988
    %v2693 = vpop.f32.mrf.mxu0
    %v2694 = vadd.f32 0.0, %v2693
    %v2695 = vpop.f32.mrf.mxu0
    %v2696 = vadd.f32 0.0, %v2695
    %2697 = vmatmul.bf16.gmra.mxu0 %v990
    %v2698 = vpop.f32.mrf.mxu0
    %v2699 = vadd.f32 0.0, %v2698
    %v2700 = vpop.f32.mrf.mxu0
    %v2701 = vadd.f32 0.0, %v2700
    %2702 = vmatmul.bf16.gmra.mxu0 %v992
    %v2703 = vpop.f32.mrf.mxu0
    %v2704 = vadd.f32 0.0, %v2703
    %v2705 = vpop.f32.mrf.mxu0
    %v2706 = vadd.f32 0.0, %v2705
    %2707 = vmatmul.bf16.gmra.mxu0 %v994
    %v2708 = vpop.f32.mrf.mxu0
    %v2709 = vadd.f32 0.0, %v2708
    %v2710 = vpop.f32.mrf.mxu0
    %v2711 = vadd.f32 0.0, %v2710
    %2712 = vmatmul.bf16.gmra.mxu0 %v996
    %v2713 = vpop.f32.mrf.mxu0
    %v2714 = vadd.f32 0.0, %v2713
    %v2715 = vpop.f32.mrf.mxu0
    %v2716 = vadd.f32 0.0, %v2715
    %2717 = vmatmul.bf16.gmra.mxu0 %v998
    %v2718 = vpop.f32.mrf.mxu0
    %v2719 = vadd.f32 0.0, %v2718
    %v2720 = vpop.f32.mrf.mxu0
    %v2721 = vadd.f32 0.0, %v2720
    %2722 = vmatmul.bf16.gmra.mxu0 %v1000
    %v2723 = vpop.f32.mrf.mxu0
    %v2724 = vadd.f32 0.0, %v2723
    %v2725 = vpop.f32.mrf.mxu0
    %v2726 = vadd.f32 0.0, %v2725
    %2727 = vmatmul.bf16.gmra.mxu0 %v1002
    %v2728 = vpop.f32.mrf.mxu0
    %v2729 = vadd.f32 0.0, %v2728
    %v2730 = vpop.f32.mrf.mxu0
    %v2731 = vadd.f32 0.0, %v2730
    %2732 = vmatmul.bf16.gmra.mxu0 %v1004
    %v2733 = vpop.f32.mrf.mxu0
    %v2734 = vadd.f32 0.0, %v2733
    %v2735 = vpop.f32.mrf.mxu0
    %v2736 = vadd.f32 0.0, %v2735
    %2737 = vmatmul.bf16.gmra.mxu0 %v1006
    %v2738 = vpop.f32.mrf.mxu0
    %v2739 = vadd.f32 0.0, %v2738
    %v2740 = vpop.f32.mrf.mxu0
    %v2741 = vadd.f32 0.0, %v2740
    %2742 = vmatmul.bf16.gmra.mxu0 %v1008
    %v2743 = vpop.f32.mrf.mxu0
    %v2744 = vadd.f32 0.0, %v2743
    %v2745 = vpop.f32.mrf.mxu0
    %v2746 = vadd.f32 0.0, %v2745
    %2747 = vmatmul.bf16.gmra.mxu0 %v1010
    %v2748 = vpop.f32.mrf.mxu0
    %v2749 = vadd.f32 0.0, %v2748
    %v2750 = vpop.f32.mrf.mxu0
    %v2751 = vadd.f32 0.0, %v2750
    %2752 = vmatmul.bf16.gmra.mxu0 %v1012
    %v2753 = vpop.f32.mrf.mxu0
    %v2754 = vadd.f32 0.0, %v2753
    %v2755 = vpop.f32.mrf.mxu0
    %v2756 = vadd.f32 0.0, %v2755
    %2757 = vmatmul.bf16.gmra.mxu0 %v1014
    %v2758 = vpop.f32.mrf.mxu0
    %v2759 = vadd.f32 0.0, %v2758
    %v2760 = vpop.f32.mrf.mxu0
    %v2761 = vadd.f32 0.0, %v2760
    %2762 = vmatmul.bf16.gmra.mxu0 %v1016
    %v2763 = vpop.f32.mrf.mxu0
    %v2764 = vadd.f32 0.0, %v2763
    %v2765 = vpop.f32.mrf.mxu0
    %v2766 = vadd.f32 0.0, %v2765
    %2767 = vmatmul.bf16.gmra.mxu0 %v1018
    %v2768 = vpop.f32.mrf.mxu0
    %v2769 = vadd.f32 0.0, %v2768
    %v2770 = vpop.f32.mrf.mxu0
    %v2771 = vadd.f32 0.0, %v2770
    %2772 = vmatmul.bf16.gmra.mxu0 %v1020
    %v2773 = vpop.f32.mrf.mxu0
    %v2774 = vadd.f32 0.0, %v2773
    %v2775 = vpop.f32.mrf.mxu0
    %v2776 = vadd.f32 0.0, %v2775
    %2777 = vmatmul.bf16.gmra.mxu0 %v1022
    %v2778 = vpop.f32.mrf.mxu0
    %v2779 = vadd.f32 0.0, %v2778
    %v2780 = vpop.f32.mrf.mxu0
    %v2781 = vadd.f32 0.0, %v2780
    %2782 = vdwg.mxu0
    %2783 = vmatpush.bf16.msra.mxu0 %v1501
    %2784 = vmatpush.bf16.msra.mxu0 %v1495
    %2785 = vmatpush.bf16.msra.mxu0 %v1489
    %2786 = vmatpush.bf16.msra.mxu0 %v1483
    %2787 = vmatpush.bf16.msra.mxu0 %v1477
    %2788 = vmatpush.bf16.msra.mxu0 %v1471
    %2789 = vmatpush.bf16.msra.mxu0 %v1465
    %2790 = vmatpush.bf16.msra.mxu0 %v1459
    %2791 = vmatmul.bf16.gmra.mxu0 %v961
    %v2792 = vpop.f32.mrf.mxu0
    %v2793 = vadd.f32 %v2624, %v2792
    %v2794 = vpop.f32.mrf.mxu0
    %v2795 = vadd.f32 %v2626, %v2794
    %2796 = vmatmul.bf16.gmra.mxu0 %v963
    %v2797 = vpop.f32.mrf.mxu0
    %v2798 = vadd.f32 %v2629, %v2797
    %v2799 = vpop.f32.mrf.mxu0
    %v2800 = vadd.f32 %v2631, %v2799
    %2801 = vmatmul.bf16.gmra.mxu0 %v965
    %v2802 = vpop.f32.mrf.mxu0
    %v2803 = vadd.f32 %v2634, %v2802
    %v2804 = vpop.f32.mrf.mxu0
    %v2805 = vadd.f32 %v2636, %v2804
    %2806 = vmatmul.bf16.gmra.mxu0 %v967
    %v2807 = vpop.f32.mrf.mxu0
    %v2808 = vadd.f32 %v2639, %v2807
    %v2809 = vpop.f32.mrf.mxu0
    %v2810 = vadd.f32 %v2641, %v2809
    %2811 = vmatmul.bf16.gmra.mxu0 %v969
    %v2812 = vpop.f32.mrf.mxu0
    %v2813 = vadd.f32 %v2644, %v2812
    %v2814 = vpop.f32.mrf.mxu0
    %v2815 = vadd.f32 %v2646, %v2814
    %2816 = vmatmul.bf16.gmra.mxu0 %v971
    %v2817 = vpop.f32.mrf.mxu0
    %v2818 = vadd.f32 %v2649, %v2817
    %v2819 = vpop.f32.mrf.mxu0
    %v2820 = vadd.f32 %v2651, %v2819
    %2821 = vmatmul.bf16.gmra.mxu0 %v973
    %v2822 = vpop.f32.mrf.mxu0
    %v2823 = vadd.f32 %v2654, %v2822
    %v2824 = vpop.f32.mrf.mxu0
    %v2825 = vadd.f32 %v2656, %v2824
    %2826 = vmatmul.bf16.gmra.mxu0 %v975
    %v2827 = vpop.f32.mrf.mxu0
    %v2828 = vadd.f32 %v2659, %v2827
    %v2829 = vpop.f32.mrf.mxu0
    %v2830 = vadd.f32 %v2661, %v2829
    %2831 = vmatmul.bf16.gmra.mxu0 %v977
    %v2832 = vpop.f32.mrf.mxu0
    %v2833 = vadd.f32 %v2664, %v2832
    %v2834 = vpop.f32.mrf.mxu0
    %v2835 = vadd.f32 %v2666, %v2834
    %2836 = vmatmul.bf16.gmra.mxu0 %v979
    %v2837 = vpop.f32.mrf.mxu0
    %v2838 = vadd.f32 %v2669, %v2837
    %v2839 = vpop.f32.mrf.mxu0
    %v2840 = vadd.f32 %v2671, %v2839
    %2841 = vmatmul.bf16.gmra.mxu0 %v981
    %v2842 = vpop.f32.mrf.mxu0
    %v2843 = vadd.f32 %v2674, %v2842
    %v2844 = vpop.f32.mrf.mxu0
    %v2845 = vadd.f32 %v2676, %v2844
    %2846 = vmatmul.bf16.gmra.mxu0 %v983
    %v2847 = vpop.f32.mrf.mxu0
    %v2848 = vadd.f32 %v2679, %v2847
    %v2849 = vpop.f32.mrf.mxu0
    %v2850 = vadd.f32 %v2681, %v2849
    %2851 = vmatmul.bf16.gmra.mxu0 %v985
    %v2852 = vpop.f32.mrf.mxu0
    %v2853 = vadd.f32 %v2684, %v2852
    %v2854 = vpop.f32.mrf.mxu0
    %v2855 = vadd.f32 %v2686, %v2854
    %2856 = vmatmul.bf16.gmra.mxu0 %v987
    %v2857 = vpop.f32.mrf.mxu0
    %v2858 = vadd.f32 %v2689, %v2857
    %v2859 = vpop.f32.mrf.mxu0
    %v2860 = vadd.f32 %v2691, %v2859
    %2861 = vmatmul.bf16.gmra.mxu0 %v989
    %v2862 = vpop.f32.mrf.mxu0
    %v2863 = vadd.f32 %v2694, %v2862
    %v2864 = vpop.f32.mrf.mxu0
    %v2865 = vadd.f32 %v2696, %v2864
    %2866 = vmatmul.bf16.gmra.mxu0 %v991
    %v2867 = vpop.f32.mrf.mxu0
    %v2868 = vadd.f32 %v2699, %v2867
    %v2869 = vpop.f32.mrf.mxu0
    %v2870 = vadd.f32 %v2701, %v2869
    %2871 = vmatmul.bf16.gmra.mxu0 %v993
    %v2872 = vpop.f32.mrf.mxu0
    %v2873 = vadd.f32 %v2704, %v2872
    %v2874 = vpop.f32.mrf.mxu0
    %v2875 = vadd.f32 %v2706, %v2874
    %2876 = vmatmul.bf16.gmra.mxu0 %v995
    %v2877 = vpop.f32.mrf.mxu0
    %v2878 = vadd.f32 %v2709, %v2877
    %v2879 = vpop.f32.mrf.mxu0
    %v2880 = vadd.f32 %v2711, %v2879
    %2881 = vmatmul.bf16.gmra.mxu0 %v997
    %v2882 = vpop.f32.mrf.mxu0
    %v2883 = vadd.f32 %v2714, %v2882
    %v2884 = vpop.f32.mrf.mxu0
    %v2885 = vadd.f32 %v2716, %v2884
    %2886 = vmatmul.bf16.gmra.mxu0 %v999
    %v2887 = vpop.f32.mrf.mxu0
    %v2888 = vadd.f32 %v2719, %v2887
    %v2889 = vpop.f32.mrf.mxu0
    %v2890 = vadd.f32 %v2721, %v2889
    %2891 = vmatmul.bf16.gmra.mxu0 %v1001
    %v2892 = vpop.f32.mrf.mxu0
    %v2893 = vadd.f32 %v2724, %v2892
    %v2894 = vpop.f32.mrf.mxu0
    %v2895 = vadd.f32 %v2726, %v2894
    %2896 = vmatmul.bf16.gmra.mxu0 %v1003
    %v2897 = vpop.f32.mrf.mxu0
    %v2898 = vadd.f32 %v2729, %v2897
    %v2899 = vpop.f32.mrf.mxu0
    %v2900 = vadd.f32 %v2731, %v2899
    %2901 = vmatmul.bf16.gmra.mxu0 %v1005
    %v2902 = vpop.f32.mrf.mxu0
    %v2903 = vadd.f32 %v2734, %v2902
    %v2904 = vpop.f32.mrf.mxu0
    %v2905 = vadd.f32 %v2736, %v2904
    %2906 = vmatmul.bf16.gmra.mxu0 %v1007
    %v2907 = vpop.f32.mrf.mxu0
    %v2908 = vadd.f32 %v2739, %v2907
    %v2909 = vpop.f32.mrf.mxu0
    %v2910 = vadd.f32 %v2741, %v2909
    %2911 = vmatmul.bf16.gmra.mxu0 %v1009
    %v2912 = vpop.f32.mrf.mxu0
    %v2913 = vadd.f32 %v2744, %v2912
    %v2914 = vpop.f32.mrf.mxu0
    %v2915 = vadd.f32 %v2746, %v2914
    %2916 = vmatmul.bf16.gmra.mxu0 %v1011
    %v2917 = vpop.f32.mrf.mxu0
    %v2918 = vadd.f32 %v2749, %v2917
    %v2919 = vpop.f32.mrf.mxu0
    %v2920 = vadd.f32 %v2751, %v2919
    %2921 = vmatmul.bf16.gmra.mxu0 %v1013
    %v2922 = vpop.f32.mrf.mxu0
    %v2923 = vadd.f32 %v2754, %v2922
    %v2924 = vpop.f32.mrf.mxu0
    %v2925 = vadd.f32 %v2756, %v2924
    %2926 = vmatmul.bf16.gmra.mxu0 %v1015
    %v2927 = vpop.f32.mrf.mxu0
    %v2928 = vadd.f32 %v2759, %v2927
    %v2929 = vpop.f32.mrf.mxu0
    %v2930 = vadd.f32 %v2761, %v2929
    %2931 = vmatmul.bf16.gmra.mxu0 %v1017
    %v2932 = vpop.f32.mrf.mxu0
    %v2933 = vadd.f32 %v2764, %v2932
    %v2934 = vpop.f32.mrf.mxu0
    %v2935 = vadd.f32 %v2766, %v2934
    %2936 = vmatmul.bf16.gmra.mxu0 %v1019
    %v2937 = vpop.f32.mrf.mxu0
    %v2938 = vadd.f32 %v2769, %v2937
    %v2939 = vpop.f32.mrf.mxu0
    %v2940 = vadd.f32 %v2771, %v2939
    %2941 = vmatmul.bf16.gmra.mxu0 %v1021
    %v2942 = vpop.f32.mrf.mxu0
    %v2943 = vadd.f32 %v2774, %v2942
    %v2944 = vpop.f32.mrf.mxu0
    %v2945 = vadd.f32 %v2776, %v2944
    %2946 = vmatmul.bf16.gmra.mxu0 %v1023
    %v2947 = vpop.f32.mrf.mxu0
    %v2948 = vadd.f32 %v2779, %v2947
    %v2949 = vpop.f32.mrf.mxu0
    %v2950 = vadd.f32 %v2781, %v2949
    %2951 = vdwg.mxu0
    %2952 = vmatpush.bf16.msra.mxu0 %v1454
    %2953 = vmatpush.bf16.msra.mxu0 %v1448
    %2954 = vmatpush.bf16.msra.mxu0 %v1442
    %2955 = vmatpush.bf16.msra.mxu0 %v1436
    %2956 = vmatpush.bf16.msra.mxu0 %v1430
    %2957 = vmatpush.bf16.msra.mxu0 %v1424
    %2958 = vmatpush.bf16.msra.mxu0 %v1418
    %2959 = vmatpush.bf16.msra.mxu0 %v1412
    %2960 = vmatmul.bf16.gmra.mxu0 %v960
    %v2961 = vpop.f32.mrf.mxu0
    %v2962 = vadd.f32 0.0, %v2961
    %v2963 = vpop.f32.mrf.mxu0
    %v2964 = vadd.f32 0.0, %v2963
    %2965 = vmatmul.bf16.gmra.mxu0 %v962
    %v2966 = vpop.f32.mrf.mxu0
    %v2967 = vadd.f32 0.0, %v2966
    %v2968 = vpop.f32.mrf.mxu0
    %v2969 = vadd.f32 0.0, %v2968
    %2970 = vmatmul.bf16.gmra.mxu0 %v964
    %v2971 = vpop.f32.mrf.mxu0
    %v2972 = vadd.f32 0.0, %v2971
    %v2973 = vpop.f32.mrf.mxu0
    %v2974 = vadd.f32 0.0, %v2973
    %2975 = vmatmul.bf16.gmra.mxu0 %v966
    %v2976 = vpop.f32.mrf.mxu0
    %v2977 = vadd.f32 0.0, %v2976
    %v2978 = vpop.f32.mrf.mxu0
    %v2979 = vadd.f32 0.0, %v2978
    %2980 = vmatmul.bf16.gmra.mxu0 %v968
    %v2981 = vpop.f32.mrf.mxu0
    %v2982 = vadd.f32 0.0, %v2981
    %v2983 = vpop.f32.mrf.mxu0
    %v2984 = vadd.f32 0.0, %v2983
    %2985 = vmatmul.bf16.gmra.mxu0 %v970
    %v2986 = vpop.f32.mrf.mxu0
    %v2987 = vadd.f32 0.0, %v2986
    %v2988 = vpop.f32.mrf.mxu0
    %v2989 = vadd.f32 0.0, %v2988
    %2990 = vmatmul.bf16.gmra.mxu0 %v972
    %v2991 = vpop.f32.mrf.mxu0
    %v2992 = vadd.f32 0.0, %v2991
    %v2993 = vpop.f32.mrf.mxu0
    %v2994 = vadd.f32 0.0, %v2993
    %2995 = vmatmul.bf16.gmra.mxu0 %v974
    %v2996 = vpop.f32.mrf.mxu0
    %v2997 = vadd.f32 0.0, %v2996
    %v2998 = vpop.f32.mrf.mxu0
    %v2999 = vadd.f32 0.0, %v2998
    %3000 = vmatmul.bf16.gmra.mxu0 %v976
    %v3001 = vpop.f32.mrf.mxu0
    %v3002 = vadd.f32 0.0, %v3001
    %v3003 = vpop.f32.mrf.mxu0
    %v3004 = vadd.f32 0.0, %v3003
    %3005 = vmatmul.bf16.gmra.mxu0 %v978
    %v3006 = vpop.f32.mrf.mxu0
    %v3007 = vadd.f32 0.0, %v3006
    %v3008 = vpop.f32.mrf.mxu0
    %v3009 = vadd.f32 0.0, %v3008
    %3010 = vmatmul.bf16.gmra.mxu0 %v980
    %v3011 = vpop.f32.mrf.mxu0
    %v3012 = vadd.f32 0.0, %v3011
    %v3013 = vpop.f32.mrf.mxu0
    %v3014 = vadd.f32 0.0, %v3013
    %3015 = vmatmul.bf16.gmra.mxu0 %v982
    %v3016 = vpop.f32.mrf.mxu0
    %v3017 = vadd.f32 0.0, %v3016
    %v3018 = vpop.f32.mrf.mxu0
    %v3019 = vadd.f32 0.0, %v3018
    %3020 = vmatmul.bf16.gmra.mxu0 %v984
    %v3021 = vpop.f32.mrf.mxu0
    %v3022 = vadd.f32 0.0, %v3021
    %v3023 = vpop.f32.mrf.mxu0
    %v3024 = vadd.f32 0.0, %v3023
    %3025 = vmatmul.bf16.gmra.mxu0 %v986
    %v3026 = vpop.f32.mrf.mxu0
    %v3027 = vadd.f32 0.0, %v3026
    %v3028 = vpop.f32.mrf.mxu0
    %v3029 = vadd.f32 0.0, %v3028
    %3030 = vmatmul.bf16.gmra.mxu0 %v988
    %v3031 = vpop.f32.mrf.mxu0
    %v3032 = vadd.f32 0.0, %v3031
    %v3033 = vpop.f32.mrf.mxu0
    %v3034 = vadd.f32 0.0, %v3033
    %3035 = vmatmul.bf16.gmra.mxu0 %v990
    %v3036 = vpop.f32.mrf.mxu0
    %v3037 = vadd.f32 0.0, %v3036
    %v3038 = vpop.f32.mrf.mxu0
    %v3039 = vadd.f32 0.0, %v3038
    %3040 = vmatmul.bf16.gmra.mxu0 %v992
    %v3041 = vpop.f32.mrf.mxu0
    %v3042 = vadd.f32 0.0, %v3041
    %v3043 = vpop.f32.mrf.mxu0
    %v3044 = vadd.f32 0.0, %v3043
    %3045 = vmatmul.bf16.gmra.mxu0 %v994
    %v3046 = vpop.f32.mrf.mxu0
    %v3047 = vadd.f32 0.0, %v3046
    %v3048 = vpop.f32.mrf.mxu0
    %v3049 = vadd.f32 0.0, %v3048
    %3050 = vmatmul.bf16.gmra.mxu0 %v996
    %v3051 = vpop.f32.mrf.mxu0
    %v3052 = vadd.f32 0.0, %v3051
    %v3053 = vpop.f32.mrf.mxu0
    %v3054 = vadd.f32 0.0, %v3053
    %3055 = vmatmul.bf16.gmra.mxu0 %v998
    %v3056 = vpop.f32.mrf.mxu0
    %v3057 = vadd.f32 0.0, %v3056
    %v3058 = vpop.f32.mrf.mxu0
    %v3059 = vadd.f32 0.0, %v3058
    %3060 = vmatmul.bf16.gmra.mxu0 %v1000
    %v3061 = vpop.f32.mrf.mxu0
    %v3062 = vadd.f32 0.0, %v3061
    %v3063 = vpop.f32.mrf.mxu0
    %v3064 = vadd.f32 0.0, %v3063
    %3065 = vmatmul.bf16.gmra.mxu0 %v1002
    %v3066 = vpop.f32.mrf.mxu0
    %v3067 = vadd.f32 0.0, %v3066
    %v3068 = vpop.f32.mrf.mxu0
    %v3069 = vadd.f32 0.0, %v3068
    %3070 = vmatmul.bf16.gmra.mxu0 %v1004
    %v3071 = vpop.f32.mrf.mxu0
    %v3072 = vadd.f32 0.0, %v3071
    %v3073 = vpop.f32.mrf.mxu0
    %v3074 = vadd.f32 0.0, %v3073
    %3075 = vmatmul.bf16.gmra.mxu0 %v1006
    %v3076 = vpop.f32.mrf.mxu0
    %v3077 = vadd.f32 0.0, %v3076
    %v3078 = vpop.f32.mrf.mxu0
    %v3079 = vadd.f32 0.0, %v3078
    %3080 = vmatmul.bf16.gmra.mxu0 %v1008
    %v3081 = vpop.f32.mrf.mxu0
    %v3082 = vadd.f32 0.0, %v3081
    %v3083 = vpop.f32.mrf.mxu0
    %v3084 = vadd.f32 0.0, %v3083
    %3085 = vmatmul.bf16.gmra.mxu0 %v1010
    %v3086 = vpop.f32.mrf.mxu0
    %v3087 = vadd.f32 0.0, %v3086
    %v3088 = vpop.f32.mrf.mxu0
    %v3089 = vadd.f32 0.0, %v3088
    %3090 = vmatmul.bf16.gmra.mxu0 %v1012
    %v3091 = vpop.f32.mrf.mxu0
    %v3092 = vadd.f32 0.0, %v3091
    %v3093 = vpop.f32.mrf.mxu0
    %v3094 = vadd.f32 0.0, %v3093
    %3095 = vmatmul.bf16.gmra.mxu0 %v1014
    %v3096 = vpop.f32.mrf.mxu0
    %v3097 = vadd.f32 0.0, %v3096
    %v3098 = vpop.f32.mrf.mxu0
    %v3099 = vadd.f32 0.0, %v3098
    %3100 = vmatmul.bf16.gmra.mxu0 %v1016
    %v3101 = vpop.f32.mrf.mxu0
    %v3102 = vadd.f32 0.0, %v3101
    %v3103 = vpop.f32.mrf.mxu0
    %v3104 = vadd.f32 0.0, %v3103
    %3105 = vmatmul.bf16.gmra.mxu0 %v1018
    %v3106 = vpop.f32.mrf.mxu0
    %v3107 = vadd.f32 0.0, %v3106
    %v3108 = vpop.f32.mrf.mxu0
    %v3109 = vadd.f32 0.0, %v3108
    %3110 = vmatmul.bf16.gmra.mxu0 %v1020
    %v3111 = vpop.f32.mrf.mxu0
    %v3112 = vadd.f32 0.0, %v3111
    %v3113 = vpop.f32.mrf.mxu0
    %v3114 = vadd.f32 0.0, %v3113
    %3115 = vmatmul.bf16.gmra.mxu0 %v1022
    %v3116 = vpop.f32.mrf.mxu0
    %v3117 = vadd.f32 0.0, %v3116
    %v3118 = vpop.f32.mrf.mxu0
    %v3119 = vadd.f32 0.0, %v3118
    %3120 = vdwg.mxu0
    %3121 = vmatpush.bf16.msra.mxu0 %v1502
    %3122 = vmatpush.bf16.msra.mxu0 %v1496
    %3123 = vmatpush.bf16.msra.mxu0 %v1490
    %3124 = vmatpush.bf16.msra.mxu0 %v1484
    %3125 = vmatpush.bf16.msra.mxu0 %v1478
    %3126 = vmatpush.bf16.msra.mxu0 %v1472
    %3127 = vmatpush.bf16.msra.mxu0 %v1466
    %3128 = vmatpush.bf16.msra.mxu0 %v1460
    %3129 = vmatmul.bf16.gmra.mxu0 %v961
    %v3130 = vpop.f32.mrf.mxu0
    %v3131 = vadd.f32 %v2962, %v3130
    %v3132 = vpop.f32.mrf.mxu0
    %v3133 = vadd.f32 %v2964, %v3132
    %3134 = vmatmul.bf16.gmra.mxu0 %v963
    %v3135 = vpop.f32.mrf.mxu0
    %v3136 = vadd.f32 %v2967, %v3135
    %v3137 = vpop.f32.mrf.mxu0
    %v3138 = vadd.f32 %v2969, %v3137
    %3139 = vmatmul.bf16.gmra.mxu0 %v965
    %v3140 = vpop.f32.mrf.mxu0
    %v3141 = vadd.f32 %v2972, %v3140
    %v3142 = vpop.f32.mrf.mxu0
    %v3143 = vadd.f32 %v2974, %v3142
    %3144 = vmatmul.bf16.gmra.mxu0 %v967
    %v3145 = vpop.f32.mrf.mxu0
    %v3146 = vadd.f32 %v2977, %v3145
    %v3147 = vpop.f32.mrf.mxu0
    %v3148 = vadd.f32 %v2979, %v3147
    %3149 = vmatmul.bf16.gmra.mxu0 %v969
    %v3150 = vpop.f32.mrf.mxu0
    %v3151 = vadd.f32 %v2982, %v3150
    %v3152 = vpop.f32.mrf.mxu0
    %v3153 = vadd.f32 %v2984, %v3152
    %3154 = vmatmul.bf16.gmra.mxu0 %v971
    %v3155 = vpop.f32.mrf.mxu0
    %v3156 = vadd.f32 %v2987, %v3155
    %v3157 = vpop.f32.mrf.mxu0
    %v3158 = vadd.f32 %v2989, %v3157
    %3159 = vmatmul.bf16.gmra.mxu0 %v973
    %v3160 = vpop.f32.mrf.mxu0
    %v3161 = vadd.f32 %v2992, %v3160
    %v3162 = vpop.f32.mrf.mxu0
    %v3163 = vadd.f32 %v2994, %v3162
    %3164 = vmatmul.bf16.gmra.mxu0 %v975
    %v3165 = vpop.f32.mrf.mxu0
    %v3166 = vadd.f32 %v2997, %v3165
    %v3167 = vpop.f32.mrf.mxu0
    %v3168 = vadd.f32 %v2999, %v3167
    %3169 = vmatmul.bf16.gmra.mxu0 %v977
    %v3170 = vpop.f32.mrf.mxu0
    %v3171 = vadd.f32 %v3002, %v3170
    %v3172 = vpop.f32.mrf.mxu0
    %v3173 = vadd.f32 %v3004, %v3172
    %3174 = vmatmul.bf16.gmra.mxu0 %v979
    %v3175 = vpop.f32.mrf.mxu0
    %v3176 = vadd.f32 %v3007, %v3175
    %v3177 = vpop.f32.mrf.mxu0
    %v3178 = vadd.f32 %v3009, %v3177
    %3179 = vmatmul.bf16.gmra.mxu0 %v981
    %v3180 = vpop.f32.mrf.mxu0
    %v3181 = vadd.f32 %v3012, %v3180
    %v3182 = vpop.f32.mrf.mxu0
    %v3183 = vadd.f32 %v3014, %v3182
    %3184 = vmatmul.bf16.gmra.mxu0 %v983
    %v3185 = vpop.f32.mrf.mxu0
    %v3186 = vadd.f32 %v3017, %v3185
    %v3187 = vpop.f32.mrf.mxu0
    %v3188 = vadd.f32 %v3019, %v3187
    %3189 = vmatmul.bf16.gmra.mxu0 %v985
    %v3190 = vpop.f32.mrf.mxu0
    %v3191 = vadd.f32 %v3022, %v3190
    %v3192 = vpop.f32.mrf.mxu0
    %v3193 = vadd.f32 %v3024, %v3192
    %3194 = vmatmul.bf16.gmra.mxu0 %v987
    %v3195 = vpop.f32.mrf.mxu0
    %v3196 = vadd.f32 %v3027, %v3195
    %v3197 = vpop.f32.mrf.mxu0
    %v3198 = vadd.f32 %v3029, %v3197
    %3199 = vmatmul.bf16.gmra.mxu0 %v989
    %v3200 = vpop.f32.mrf.mxu0
    %v3201 = vadd.f32 %v3032, %v3200
    %v3202 = vpop.f32.mrf.mxu0
    %v3203 = vadd.f32 %v3034, %v3202
    %3204 = vmatmul.bf16.gmra.mxu0 %v991
    %v3205 = vpop.f32.mrf.mxu0
    %v3206 = vadd.f32 %v3037, %v3205
    %v3207 = vpop.f32.mrf.mxu0
    %v3208 = vadd.f32 %v3039, %v3207
    %3209 = vmatmul.bf16.gmra.mxu0 %v993
    %v3210 = vpop.f32.mrf.mxu0
    %v3211 = vadd.f32 %v3042, %v3210
    %v3212 = vpop.f32.mrf.mxu0
    %v3213 = vadd.f32 %v3044, %v3212
    %3214 = vmatmul.bf16.gmra.mxu0 %v995
    %v3215 = vpop.f32.mrf.mxu0
    %v3216 = vadd.f32 %v3047, %v3215
    %v3217 = vpop.f32.mrf.mxu0
    %v3218 = vadd.f32 %v3049, %v3217
    %3219 = vmatmul.bf16.gmra.mxu0 %v997
    %v3220 = vpop.f32.mrf.mxu0
    %v3221 = vadd.f32 %v3052, %v3220
    %v3222 = vpop.f32.mrf.mxu0
    %v3223 = vadd.f32 %v3054, %v3222
    %3224 = vmatmul.bf16.gmra.mxu0 %v999
    %v3225 = vpop.f32.mrf.mxu0
    %v3226 = vadd.f32 %v3057, %v3225
    %v3227 = vpop.f32.mrf.mxu0
    %v3228 = vadd.f32 %v3059, %v3227
    %3229 = vmatmul.bf16.gmra.mxu0 %v1001
    %v3230 = vpop.f32.mrf.mxu0
    %v3231 = vadd.f32 %v3062, %v3230
    %v3232 = vpop.f32.mrf.mxu0
    %v3233 = vadd.f32 %v3064, %v3232
    %3234 = vmatmul.bf16.gmra.mxu0 %v1003
    %v3235 = vpop.f32.mrf.mxu0
    %v3236 = vadd.f32 %v3067, %v3235
    %v3237 = vpop.f32.mrf.mxu0
    %v3238 = vadd.f32 %v3069, %v3237
    %3239 = vmatmul.bf16.gmra.mxu0 %v1005
    %v3240 = vpop.f32.mrf.mxu0
    %v3241 = vadd.f32 %v3072, %v3240
    %v3242 = vpop.f32.mrf.mxu0
    %v3243 = vadd.f32 %v3074, %v3242
    %3244 = vmatmul.bf16.gmra.mxu0 %v1007
    %v3245 = vpop.f32.mrf.mxu0
    %v3246 = vadd.f32 %v3077, %v3245
    %v3247 = vpop.f32.mrf.mxu0
    %v3248 = vadd.f32 %v3079, %v3247
    %3249 = vmatmul.bf16.gmra.mxu0 %v1009
    %v3250 = vpop.f32.mrf.mxu0
    %v3251 = vadd.f32 %v3082, %v3250
    %v3252 = vpop.f32.mrf.mxu0
    %v3253 = vadd.f32 %v3084, %v3252
    %3254 = vmatmul.bf16.gmra.mxu0 %v1011
    %v3255 = vpop.f32.mrf.mxu0
    %v3256 = vadd.f32 %v3087, %v3255
    %v3257 = vpop.f32.mrf.mxu0
    %v3258 = vadd.f32 %v3089, %v3257
    %3259 = vmatmul.bf16.gmra.mxu0 %v1013
    %v3260 = vpop.f32.mrf.mxu0
    %v3261 = vadd.f32 %v3092, %v3260
    %v3262 = vpop.f32.mrf.mxu0
    %v3263 = vadd.f32 %v3094, %v3262
    %3264 = vmatmul.bf16.gmra.mxu0 %v1015
    %v3265 = vpop.f32.mrf.mxu0
    %v3266 = vadd.f32 %v3097, %v3265
    %v3267 = vpop.f32.mrf.mxu0
    %v3268 = vadd.f32 %v3099, %v3267
    %3269 = vmatmul.bf16.gmra.mxu0 %v1017
    %v3270 = vpop.f32.mrf.mxu0
    %v3271 = vadd.f32 %v3102, %v3270
    %v3272 = vpop.f32.mrf.mxu0
    %v3273 = vadd.f32 %v3104, %v3272
    %3274 = vmatmul.bf16.gmra.mxu0 %v1019
    %v3275 = vpop.f32.mrf.mxu0
    %v3276 = vadd.f32 %v3107, %v3275
    %v3277 = vpop.f32.mrf.mxu0
    %v3278 = vadd.f32 %v3109, %v3277
    %3279 = vmatmul.bf16.gmra.mxu0 %v1021
    %v3280 = vpop.f32.mrf.mxu0
    %v3281 = vadd.f32 %v3112, %v3280
    %v3282 = vpop.f32.mrf.mxu0
    %v3283 = vadd.f32 %v3114, %v3282
    %3284 = vmatmul.bf16.gmra.mxu0 %v1023
    %v3285 = vpop.f32.mrf.mxu0
    %v3286 = vadd.f32 %v3117, %v3285
    %v3287 = vpop.f32.mrf.mxu0
    %v3288 = vadd.f32 %v3119, %v3287
    %3289 = vdwg.mxu0
    %3290 = vmatpush.bf16.msra.mxu0 %v1455
    %3291 = vmatpush.bf16.msra.mxu0 %v1449
    %3292 = vmatpush.bf16.msra.mxu0 %v1443
    %3293 = vmatpush.bf16.msra.mxu0 %v1437
    %3294 = vmatpush.bf16.msra.mxu0 %v1431
    %3295 = vmatpush.bf16.msra.mxu0 %v1425
    %3296 = vmatpush.bf16.msra.mxu0 %v1419
    %3297 = vmatpush.bf16.msra.mxu0 %v1413
    %3298 = vmatmul.bf16.gmra.mxu0 %v960
    %v3299 = vpop.f32.mrf.mxu0
    %v3300 = vadd.f32 0.0, %v3299
    %v3301 = vpop.f32.mrf.mxu0
    %v3302 = vadd.f32 0.0, %v3301
    %3303 = vmatmul.bf16.gmra.mxu0 %v962
    %v3304 = vpop.f32.mrf.mxu0
    %v3305 = vadd.f32 0.0, %v3304
    %v3306 = vpop.f32.mrf.mxu0
    %v3307 = vadd.f32 0.0, %v3306
    %3308 = vmatmul.bf16.gmra.mxu0 %v964
    %v3309 = vpop.f32.mrf.mxu0
    %v3310 = vadd.f32 0.0, %v3309
    %v3311 = vpop.f32.mrf.mxu0
    %v3312 = vadd.f32 0.0, %v3311
    %3313 = vmatmul.bf16.gmra.mxu0 %v966
    %v3314 = vpop.f32.mrf.mxu0
    %v3315 = vadd.f32 0.0, %v3314
    %v3316 = vpop.f32.mrf.mxu0
    %v3317 = vadd.f32 0.0, %v3316
    %3318 = vmatmul.bf16.gmra.mxu0 %v968
    %v3319 = vpop.f32.mrf.mxu0
    %v3320 = vadd.f32 0.0, %v3319
    %v3321 = vpop.f32.mrf.mxu0
    %v3322 = vadd.f32 0.0, %v3321
    %3323 = vmatmul.bf16.gmra.mxu0 %v970
    %v3324 = vpop.f32.mrf.mxu0
    %v3325 = vadd.f32 0.0, %v3324
    %v3326 = vpop.f32.mrf.mxu0
    %v3327 = vadd.f32 0.0, %v3326
    %3328 = vmatmul.bf16.gmra.mxu0 %v972
    %v3329 = vpop.f32.mrf.mxu0
    %v3330 = vadd.f32 0.0, %v3329
    %v3331 = vpop.f32.mrf.mxu0
    %v3332 = vadd.f32 0.0, %v3331
    %3333 = vmatmul.bf16.gmra.mxu0 %v974
    %v3334 = vpop.f32.mrf.mxu0
    %v3335 = vadd.f32 0.0, %v3334
    %v3336 = vpop.f32.mrf.mxu0
    %v3337 = vadd.f32 0.0, %v3336
    %3338 = vmatmul.bf16.gmra.mxu0 %v976
    %v3339 = vpop.f32.mrf.mxu0
    %v3340 = vadd.f32 0.0, %v3339
    %v3341 = vpop.f32.mrf.mxu0
    %v3342 = vadd.f32 0.0, %v3341
    %3343 = vmatmul.bf16.gmra.mxu0 %v978
    %v3344 = vpop.f32.mrf.mxu0
    %v3345 = vadd.f32 0.0, %v3344
    %v3346 = vpop.f32.mrf.mxu0
    %v3347 = vadd.f32 0.0, %v3346
    %3348 = vmatmul.bf16.gmra.mxu0 %v980
    %v3349 = vpop.f32.mrf.mxu0
    %v3350 = vadd.f32 0.0, %v3349
    %v3351 = vpop.f32.mrf.mxu0
    %v3352 = vadd.f32 0.0, %v3351
    %3353 = vmatmul.bf16.gmra.mxu0 %v982
    %v3354 = vpop.f32.mrf.mxu0
    %v3355 = vadd.f32 0.0, %v3354
    %v3356 = vpop.f32.mrf.mxu0
    %v3357 = vadd.f32 0.0, %v3356
    %3358 = vmatmul.bf16.gmra.mxu0 %v984
    %v3359 = vpop.f32.mrf.mxu0
    %v3360 = vadd.f32 0.0, %v3359
    %v3361 = vpop.f32.mrf.mxu0
    %v3362 = vadd.f32 0.0, %v3361
    %3363 = vmatmul.bf16.gmra.mxu0 %v986
    %v3364 = vpop.f32.mrf.mxu0
    %v3365 = vadd.f32 0.0, %v3364
    %v3366 = vpop.f32.mrf.mxu0
    %v3367 = vadd.f32 0.0, %v3366
    %3368 = vmatmul.bf16.gmra.mxu0 %v988
    %v3369 = vpop.f32.mrf.mxu0
    %v3370 = vadd.f32 0.0, %v3369
    %v3371 = vpop.f32.mrf.mxu0
    %v3372 = vadd.f32 0.0, %v3371
    %3373 = vmatmul.bf16.gmra.mxu0 %v990
    %v3374 = vpop.f32.mrf.mxu0
    %v3375 = vadd.f32 0.0, %v3374
    %v3376 = vpop.f32.mrf.mxu0
    %v3377 = vadd.f32 0.0, %v3376
    %3378 = vmatmul.bf16.gmra.mxu0 %v992
    %v3379 = vpop.f32.mrf.mxu0
    %v3380 = vadd.f32 0.0, %v3379
    %v3381 = vpop.f32.mrf.mxu0
    %v3382 = vadd.f32 0.0, %v3381
    %3383 = vmatmul.bf16.gmra.mxu0 %v994
    %v3384 = vpop.f32.mrf.mxu0
    %v3385 = vadd.f32 0.0, %v3384
    %v3386 = vpop.f32.mrf.mxu0
    %v3387 = vadd.f32 0.0, %v3386
    %3388 = vmatmul.bf16.gmra.mxu0 %v996
    %v3389 = vpop.f32.mrf.mxu0
    %v3390 = vadd.f32 0.0, %v3389
    %v3391 = vpop.f32.mrf.mxu0
    %v3392 = vadd.f32 0.0, %v3391
    %3393 = vmatmul.bf16.gmra.mxu0 %v998
    %v3394 = vpop.f32.mrf.mxu0
    %v3395 = vadd.f32 0.0, %v3394
    %v3396 = vpop.f32.mrf.mxu0
    %v3397 = vadd.f32 0.0, %v3396
    %3398 = vmatmul.bf16.gmra.mxu0 %v1000
    %v3399 = vpop.f32.mrf.mxu0
    %v3400 = vadd.f32 0.0, %v3399
    %v3401 = vpop.f32.mrf.mxu0
    %v3402 = vadd.f32 0.0, %v3401
    %3403 = vmatmul.bf16.gmra.mxu0 %v1002
    %v3404 = vpop.f32.mrf.mxu0
    %v3405 = vadd.f32 0.0, %v3404
    %v3406 = vpop.f32.mrf.mxu0
    %v3407 = vadd.f32 0.0, %v3406
    %3408 = vmatmul.bf16.gmra.mxu0 %v1004
    %v3409 = vpop.f32.mrf.mxu0
    %v3410 = vadd.f32 0.0, %v3409
    %v3411 = vpop.f32.mrf.mxu0
    %v3412 = vadd.f32 0.0, %v3411
    %3413 = vmatmul.bf16.gmra.mxu0 %v1006
    %v3414 = vpop.f32.mrf.mxu0
    %v3415 = vadd.f32 0.0, %v3414
    %v3416 = vpop.f32.mrf.mxu0
    %v3417 = vadd.f32 0.0, %v3416
    %3418 = vmatmul.bf16.gmra.mxu0 %v1008
    %v3419 = vpop.f32.mrf.mxu0
    %v3420 = vadd.f32 0.0, %v3419
    %v3421 = vpop.f32.mrf.mxu0
    %v3422 = vadd.f32 0.0, %v3421
    %3423 = vmatmul.bf16.gmra.mxu0 %v1010
    %v3424 = vpop.f32.mrf.mxu0
    %v3425 = vadd.f32 0.0, %v3424
    %v3426 = vpop.f32.mrf.mxu0
    %v3427 = vadd.f32 0.0, %v3426
    %3428 = vmatmul.bf16.gmra.mxu0 %v1012
    %v3429 = vpop.f32.mrf.mxu0
    %v3430 = vadd.f32 0.0, %v3429
    %v3431 = vpop.f32.mrf.mxu0
    %v3432 = vadd.f32 0.0, %v3431
    %3433 = vmatmul.bf16.gmra.mxu0 %v1014
    %v3434 = vpop.f32.mrf.mxu0
    %v3435 = vadd.f32 0.0, %v3434
    %v3436 = vpop.f32.mrf.mxu0
    %v3437 = vadd.f32 0.0, %v3436
    %3438 = vmatmul.bf16.gmra.mxu0 %v1016
    %v3439 = vpop.f32.mrf.mxu0
    %v3440 = vadd.f32 0.0, %v3439
    %v3441 = vpop.f32.mrf.mxu0
    %v3442 = vadd.f32 0.0, %v3441
    %3443 = vmatmul.bf16.gmra.mxu0 %v1018
    %v3444 = vpop.f32.mrf.mxu0
    %v3445 = vadd.f32 0.0, %v3444
    %v3446 = vpop.f32.mrf.mxu0
    %v3447 = vadd.f32 0.0, %v3446
    %3448 = vmatmul.bf16.gmra.mxu0 %v1020
    %v3449 = vpop.f32.mrf.mxu0
    %v3450 = vadd.f32 0.0, %v3449
    %v3451 = vpop.f32.mrf.mxu0
    %v3452 = vadd.f32 0.0, %v3451
    %3453 = vmatmul.bf16.gmra.mxu0 %v1022
    %v3454 = vpop.f32.mrf.mxu0
    %v3455 = vadd.f32 0.0, %v3454
    %v3456 = vpop.f32.mrf.mxu0
    %v3457 = vadd.f32 0.0, %v3456
    %3458 = vdwg.mxu0
    %3459 = vmatpush.bf16.msra.mxu0 %v1503
    %3460 = vmatpush.bf16.msra.mxu0 %v1497
    %3461 = vmatpush.bf16.msra.mxu0 %v1491
    %3462 = vmatpush.bf16.msra.mxu0 %v1485
    %3463 = vmatpush.bf16.msra.mxu0 %v1479
    %3464 = vmatpush.bf16.msra.mxu0 %v1473
    %3465 = vmatpush.bf16.msra.mxu0 %v1467
    %3466 = vmatpush.bf16.msra.mxu0 %v1461
    %3467 = vmatmul.bf16.gmra.mxu0 %v961
    %v3468 = vpop.f32.mrf.mxu0
    %v3469 = vadd.f32 %v3300, %v3468
    %v3470 = vpop.f32.mrf.mxu0
    %v3471 = vadd.f32 %v3302, %v3470
    %3472 = vmatmul.bf16.gmra.mxu0 %v963
    %v3473 = vpop.f32.mrf.mxu0
    %v3474 = vadd.f32 %v3305, %v3473
    %v3475 = vpop.f32.mrf.mxu0
    %v3476 = vadd.f32 %v3307, %v3475
    %3477 = vmatmul.bf16.gmra.mxu0 %v965
    %v3478 = vpop.f32.mrf.mxu0
    %v3479 = vadd.f32 %v3310, %v3478
    %v3480 = vpop.f32.mrf.mxu0
    %v3481 = vadd.f32 %v3312, %v3480
    %3482 = vmatmul.bf16.gmra.mxu0 %v967
    %v3483 = vpop.f32.mrf.mxu0
    %v3484 = vadd.f32 %v3315, %v3483
    %v3485 = vpop.f32.mrf.mxu0
    %v3486 = vadd.f32 %v3317, %v3485
    %3487 = vmatmul.bf16.gmra.mxu0 %v969
    %v3488 = vpop.f32.mrf.mxu0
    %v3489 = vadd.f32 %v3320, %v3488
    %v3490 = vpop.f32.mrf.mxu0
    %v3491 = vadd.f32 %v3322, %v3490
    %3492 = vmatmul.bf16.gmra.mxu0 %v971
    %v3493 = vpop.f32.mrf.mxu0
    %v3494 = vadd.f32 %v3325, %v3493
    %v3495 = vpop.f32.mrf.mxu0
    %v3496 = vadd.f32 %v3327, %v3495
    %3497 = vmatmul.bf16.gmra.mxu0 %v973
    %v3498 = vpop.f32.mrf.mxu0
    %v3499 = vadd.f32 %v3330, %v3498
    %v3500 = vpop.f32.mrf.mxu0
    %v3501 = vadd.f32 %v3332, %v3500
    %3502 = vmatmul.bf16.gmra.mxu0 %v975
    %v3503 = vpop.f32.mrf.mxu0
    %v3504 = vadd.f32 %v3335, %v3503
    %v3505 = vpop.f32.mrf.mxu0
    %v3506 = vadd.f32 %v3337, %v3505
    %3507 = vmatmul.bf16.gmra.mxu0 %v977
    %v3508 = vpop.f32.mrf.mxu0
    %v3509 = vadd.f32 %v3340, %v3508
    %v3510 = vpop.f32.mrf.mxu0
    %v3511 = vadd.f32 %v3342, %v3510
    %3512 = vmatmul.bf16.gmra.mxu0 %v979
    %v3513 = vpop.f32.mrf.mxu0
    %v3514 = vadd.f32 %v3345, %v3513
    %v3515 = vpop.f32.mrf.mxu0
    %v3516 = vadd.f32 %v3347, %v3515
    %3517 = vmatmul.bf16.gmra.mxu0 %v981
    %v3518 = vpop.f32.mrf.mxu0
    %v3519 = vadd.f32 %v3350, %v3518
    %v3520 = vpop.f32.mrf.mxu0
    %v3521 = vadd.f32 %v3352, %v3520
    %3522 = vmatmul.bf16.gmra.mxu0 %v983
    %v3523 = vpop.f32.mrf.mxu0
    %v3524 = vadd.f32 %v3355, %v3523
    %v3525 = vpop.f32.mrf.mxu0
    %v3526 = vadd.f32 %v3357, %v3525
    %3527 = vmatmul.bf16.gmra.mxu0 %v985
    %v3528 = vpop.f32.mrf.mxu0
    %v3529 = vadd.f32 %v3360, %v3528
    %v3530 = vpop.f32.mrf.mxu0
    %v3531 = vadd.f32 %v3362, %v3530
    %3532 = vmatmul.bf16.gmra.mxu0 %v987
    %v3533 = vpop.f32.mrf.mxu0
    %v3534 = vadd.f32 %v3365, %v3533
    %v3535 = vpop.f32.mrf.mxu0
    %v3536 = vadd.f32 %v3367, %v3535
    %3537 = vmatmul.bf16.gmra.mxu0 %v989
    %v3538 = vpop.f32.mrf.mxu0
    %v3539 = vadd.f32 %v3370, %v3538
    %v3540 = vpop.f32.mrf.mxu0
    %v3541 = vadd.f32 %v3372, %v3540
    %3542 = vmatmul.bf16.gmra.mxu0 %v991
    %v3543 = vpop.f32.mrf.mxu0
    %v3544 = vadd.f32 %v3375, %v3543
    %v3545 = vpop.f32.mrf.mxu0
    %v3546 = vadd.f32 %v3377, %v3545
    %3547 = vmatmul.bf16.gmra.mxu0 %v993
    %v3548 = vpop.f32.mrf.mxu0
    %v3549 = vadd.f32 %v3380, %v3548
    %v3550 = vpop.f32.mrf.mxu0
    %v3551 = vadd.f32 %v3382, %v3550
    %3552 = vmatmul.bf16.gmra.mxu0 %v995
    %v3553 = vpop.f32.mrf.mxu0
    %v3554 = vadd.f32 %v3385, %v3553
    %v3555 = vpop.f32.mrf.mxu0
    %v3556 = vadd.f32 %v3387, %v3555
    %3557 = vmatmul.bf16.gmra.mxu0 %v997
    %v3558 = vpop.f32.mrf.mxu0
    %v3559 = vadd.f32 %v3390, %v3558
    %v3560 = vpop.f32.mrf.mxu0
    %v3561 = vadd.f32 %v3392, %v3560
    %3562 = vmatmul.bf16.gmra.mxu0 %v999
    %v3563 = vpop.f32.mrf.mxu0
    %v3564 = vadd.f32 %v3395, %v3563
    %v3565 = vpop.f32.mrf.mxu0
    %v3566 = vadd.f32 %v3397, %v3565
    %3567 = vmatmul.bf16.gmra.mxu0 %v1001
    %v3568 = vpop.f32.mrf.mxu0
    %v3569 = vadd.f32 %v3400, %v3568
    %v3570 = vpop.f32.mrf.mxu0
    %v3571 = vadd.f32 %v3402, %v3570
    %3572 = vmatmul.bf16.gmra.mxu0 %v1003
    %v3573 = vpop.f32.mrf.mxu0
    %v3574 = vadd.f32 %v3405, %v3573
    %v3575 = vpop.f32.mrf.mxu0
    %v3576 = vadd.f32 %v3407, %v3575
    %3577 = vmatmul.bf16.gmra.mxu0 %v1005
    %v3578 = vpop.f32.mrf.mxu0
    %v3579 = vadd.f32 %v3410, %v3578
    %v3580 = vpop.f32.mrf.mxu0
    %v3581 = vadd.f32 %v3412, %v3580
    %3582 = vmatmul.bf16.gmra.mxu0 %v1007
    %v3583 = vpop.f32.mrf.mxu0
    %v3584 = vadd.f32 %v3415, %v3583
    %v3585 = vpop.f32.mrf.mxu0
    %v3586 = vadd.f32 %v3417, %v3585
    %3587 = vmatmul.bf16.gmra.mxu0 %v1009
    %v3588 = vpop.f32.mrf.mxu0
    %v3589 = vadd.f32 %v3420, %v3588
    %v3590 = vpop.f32.mrf.mxu0
    %v3591 = vadd.f32 %v3422, %v3590
    %3592 = vmatmul.bf16.gmra.mxu0 %v1011
    %v3593 = vpop.f32.mrf.mxu0
    %v3594 = vadd.f32 %v3425, %v3593
    %v3595 = vpop.f32.mrf.mxu0
    %v3596 = vadd.f32 %v3427, %v3595
    %3597 = vmatmul.bf16.gmra.mxu0 %v1013
    %v3598 = vpop.f32.mrf.mxu0
    %v3599 = vadd.f32 %v3430, %v3598
    %v3600 = vpop.f32.mrf.mxu0
    %v3601 = vadd.f32 %v3432, %v3600
    %3602 = vmatmul.bf16.gmra.mxu0 %v1015
    %v3603 = vpop.f32.mrf.mxu0
    %v3604 = vadd.f32 %v3435, %v3603
    %v3605 = vpop.f32.mrf.mxu0
    %v3606 = vadd.f32 %v3437, %v3605
    %3607 = vmatmul.bf16.gmra.mxu0 %v1017
    %v3608 = vpop.f32.mrf.mxu0
    %v3609 = vadd.f32 %v3440, %v3608
    %v3610 = vpop.f32.mrf.mxu0
    %v3611 = vadd.f32 %v3442, %v3610
    %3612 = vmatmul.bf16.gmra.mxu0 %v1019
    %v3613 = vpop.f32.mrf.mxu0
    %v3614 = vadd.f32 %v3445, %v3613
    %v3615 = vpop.f32.mrf.mxu0
    %v3616 = vadd.f32 %v3447, %v3615
    %3617 = vmatmul.bf16.gmra.mxu0 %v1021
    %v3618 = vpop.f32.mrf.mxu0
    %v3619 = vadd.f32 %v3450, %v3618
    %v3620 = vpop.f32.mrf.mxu0
    %v3621 = vadd.f32 %v3452, %v3620
    %3622 = vmatmul.bf16.gmra.mxu0 %v1023
    %v3623 = vpop.f32.mrf.mxu0
    %v3624 = vadd.f32 %v3455, %v3623
    %v3625 = vpop.f32.mrf.mxu0
    %v3626 = vadd.f32 %v3457, %v3625
    %3627 = vdwg.mxu0
    %v3628 = vadd.f32 %v448, %v1779
    %v3629 = vadd.f32 %v449, %v2117
    %v3630 = vadd.f32 %v450, %v2455
    %v3631 = vadd.f32 %v451, %v2793
    %v3632 = vadd.f32 %v452, %v3131
    %v3633 = vadd.f32 %v453, %v3469
    %v3634 = vadd.f32 %v454, %v1781
    %v3635 = vadd.f32 %v455, %v2119
    %v3636 = vadd.f32 %v456, %v2457
    %v3637 = vadd.f32 %v457, %v2795
    %v3638 = vadd.f32 %v458, %v3133
    %v3639 = vadd.f32 %v459, %v3471
    %v3640 = vadd.f32 %v460, %v1784
    %v3641 = vadd.f32 %v461, %v2122
    %v3642 = vadd.f32 %v462, %v2460
    %v3643 = vadd.f32 %v463, %v2798
    %v3644 = vadd.f32 %v464, %v3136
    %v3645 = vadd.f32 %v465, %v3474
    %v3646 = vadd.f32 %v466, %v1786
    %v3647 = vadd.f32 %v467, %v2124
    %v3648 = vadd.f32 %v468, %v2462
    %v3649 = vadd.f32 %v469, %v2800
    %v3650 = vadd.f32 %v470, %v3138
    %v3651 = vadd.f32 %v471, %v3476
    %v3652 = vadd.f32 %v472, %v1789
    %v3653 = vadd.f32 %v473, %v2127
    %v3654 = vadd.f32 %v474, %v2465
    %v3655 = vadd.f32 %v475, %v2803
    %v3656 = vadd.f32 %v476, %v3141
    %v3657 = vadd.f32 %v477, %v3479
    %v3658 = vadd.f32 %v478, %v1791
    %v3659 = vadd.f32 %v479, %v2129
    %v3660 = vadd.f32 %v480, %v2467
    %v3661 = vadd.f32 %v481, %v2805
    %v3662 = vadd.f32 %v482, %v3143
    %v3663 = vadd.f32 %v483, %v3481
    %v3664 = vadd.f32 %v484, %v1794
    %v3665 = vadd.f32 %v485, %v2132
    %v3666 = vadd.f32 %v486, %v2470
    %v3667 = vadd.f32 %v487, %v2808
    %v3668 = vadd.f32 %v488, %v3146
    %v3669 = vadd.f32 %v489, %v3484
    %v3670 = vadd.f32 %v490, %v1796
    %v3671 = vadd.f32 %v491, %v2134
    %v3672 = vadd.f32 %v492, %v2472
    %v3673 = vadd.f32 %v493, %v2810
    %v3674 = vadd.f32 %v494, %v3148
    %v3675 = vadd.f32 %v495, %v3486
    %v3676 = vadd.f32 %v496, %v1799
    %v3677 = vadd.f32 %v497, %v2137
    %v3678 = vadd.f32 %v498, %v2475
    %v3679 = vadd.f32 %v499, %v2813
    %v3680 = vadd.f32 %v500, %v3151
    %v3681 = vadd.f32 %v501, %v3489
    %v3682 = vadd.f32 %v502, %v1801
    %v3683 = vadd.f32 %v503, %v2139
    %v3684 = vadd.f32 %v504, %v2477
    %v3685 = vadd.f32 %v505, %v2815
    %v3686 = vadd.f32 %v506, %v3153
    %v3687 = vadd.f32 %v507, %v3491
    %v3688 = vadd.f32 %v508, %v1804
    %v3689 = vadd.f32 %v509, %v2142
    %v3690 = vadd.f32 %v510, %v2480
    %v3691 = vadd.f32 %v511, %v2818
    %v3692 = vadd.f32 %v512, %v3156
    %v3693 = vadd.f32 %v513, %v3494
    %v3694 = vadd.f32 %v514, %v1806
    %v3695 = vadd.f32 %v515, %v2144
    %v3696 = vadd.f32 %v516, %v2482
    %v3697 = vadd.f32 %v517, %v2820
    %v3698 = vadd.f32 %v518, %v3158
    %v3699 = vadd.f32 %v519, %v3496
    %v3700 = vadd.f32 %v520, %v1809
    %v3701 = vadd.f32 %v521, %v2147
    %v3702 = vadd.f32 %v522, %v2485
    %v3703 = vadd.f32 %v523, %v2823
    %v3704 = vadd.f32 %v524, %v3161
    %v3705 = vadd.f32 %v525, %v3499
    %v3706 = vadd.f32 %v526, %v1811
    %v3707 = vadd.f32 %v527, %v2149
    %v3708 = vadd.f32 %v528, %v2487
    %v3709 = vadd.f32 %v529, %v2825
    %v3710 = vadd.f32 %v530, %v3163
    %v3711 = vadd.f32 %v531, %v3501
    %v3712 = vadd.f32 %v532, %v1814
    %v3713 = vadd.f32 %v533, %v2152
    %v3714 = vadd.f32 %v534, %v2490
    %v3715 = vadd.f32 %v535, %v2828
    %v3716 = vadd.f32 %v536, %v3166
    %v3717 = vadd.f32 %v537, %v3504
    %v3718 = vadd.f32 %v538, %v1816
    %v3719 = vadd.f32 %v539, %v2154
    %v3720 = vadd.f32 %v540, %v2492
    %v3721 = vadd.f32 %v541, %v2830
    %v3722 = vadd.f32 %v542, %v3168
    %v3723 = vadd.f32 %v543, %v3506
    %v3724 = vadd.f32 %v544, %v1819
    %v3725 = vadd.f32 %v545, %v2157
    %v3726 = vadd.f32 %v546, %v2495
    %v3727 = vadd.f32 %v547, %v2833
    %v3728 = vadd.f32 %v548, %v3171
    %v3729 = vadd.f32 %v549, %v3509
    %v3730 = vadd.f32 %v550, %v1821
    %v3731 = vadd.f32 %v551, %v2159
    %v3732 = vadd.f32 %v552, %v2497
    %v3733 = vadd.f32 %v553, %v2835
    %v3734 = vadd.f32 %v554, %v3173
    %v3735 = vadd.f32 %v555, %v3511
    %v3736 = vadd.f32 %v556, %v1824
    %v3737 = vadd.f32 %v557, %v2162
    %v3738 = vadd.f32 %v558, %v2500
    %v3739 = vadd.f32 %v559, %v2838
    %v3740 = vadd.f32 %v560, %v3176
    %v3741 = vadd.f32 %v561, %v3514
    %v3742 = vadd.f32 %v562, %v1826
    %v3743 = vadd.f32 %v563, %v2164
    %v3744 = vadd.f32 %v564, %v2502
    %v3745 = vadd.f32 %v565, %v2840
    %v3746 = vadd.f32 %v566, %v3178
    %v3747 = vadd.f32 %v567, %v3516
    %v3748 = vadd.f32 %v568, %v1829
    %v3749 = vadd.f32 %v569, %v2167
    %v3750 = vadd.f32 %v570, %v2505
    %v3751 = vadd.f32 %v571, %v2843
    %v3752 = vadd.f32 %v572, %v3181
    %v3753 = vadd.f32 %v573, %v3519
    %v3754 = vadd.f32 %v574, %v1831
    %v3755 = vadd.f32 %v575, %v2169
    %v3756 = vadd.f32 %v576, %v2507
    %v3757 = vadd.f32 %v577, %v2845
    %v3758 = vadd.f32 %v578, %v3183
    %v3759 = vadd.f32 %v579, %v3521
    %v3760 = vadd.f32 %v580, %v1834
    %v3761 = vadd.f32 %v581, %v2172
    %v3762 = vadd.f32 %v582, %v2510
    %v3763 = vadd.f32 %v583, %v2848
    %v3764 = vadd.f32 %v584, %v3186
    %v3765 = vadd.f32 %v585, %v3524
    %v3766 = vadd.f32 %v586, %v1836
    %v3767 = vadd.f32 %v587, %v2174
    %v3768 = vadd.f32 %v588, %v2512
    %v3769 = vadd.f32 %v589, %v2850
    %v3770 = vadd.f32 %v590, %v3188
    %v3771 = vadd.f32 %v591, %v3526
    %v3772 = vadd.f32 %v592, %v1839
    %v3773 = vadd.f32 %v593, %v2177
    %v3774 = vadd.f32 %v594, %v2515
    %v3775 = vadd.f32 %v595, %v2853
    %v3776 = vadd.f32 %v596, %v3191
    %v3777 = vadd.f32 %v597, %v3529
    %v3778 = vadd.f32 %v598, %v1841
    %v3779 = vadd.f32 %v599, %v2179
    %v3780 = vadd.f32 %v600, %v2517
    %v3781 = vadd.f32 %v601, %v2855
    %v3782 = vadd.f32 %v602, %v3193
    %v3783 = vadd.f32 %v603, %v3531
    %v3784 = vadd.f32 %v604, %v1844
    %v3785 = vadd.f32 %v605, %v2182
    %v3786 = vadd.f32 %v606, %v2520
    %v3787 = vadd.f32 %v607, %v2858
    %v3788 = vadd.f32 %v608, %v3196
    %v3789 = vadd.f32 %v609, %v3534
    %v3790 = vadd.f32 %v610, %v1846
    %v3791 = vadd.f32 %v611, %v2184
    %v3792 = vadd.f32 %v612, %v2522
    %v3793 = vadd.f32 %v613, %v2860
    %v3794 = vadd.f32 %v614, %v3198
    %v3795 = vadd.f32 %v615, %v3536
    %v3796 = vadd.f32 %v616, %v1849
    %v3797 = vadd.f32 %v617, %v2187
    %v3798 = vadd.f32 %v618, %v2525
    %v3799 = vadd.f32 %v619, %v2863
    %v3800 = vadd.f32 %v620, %v3201
    %v3801 = vadd.f32 %v621, %v3539
    %v3802 = vadd.f32 %v622, %v1851
    %v3803 = vadd.f32 %v623, %v2189
    %v3804 = vadd.f32 %v624, %v2527
    %v3805 = vadd.f32 %v625, %v2865
    %v3806 = vadd.f32 %v626, %v3203
    %v3807 = vadd.f32 %v627, %v3541
    %v3808 = vadd.f32 %v628, %v1854
    %v3809 = vadd.f32 %v629, %v2192
    %v3810 = vadd.f32 %v630, %v2530
    %v3811 = vadd.f32 %v631, %v2868
    %v3812 = vadd.f32 %v632, %v3206
    %v3813 = vadd.f32 %v633, %v3544
    %v3814 = vadd.f32 %v634, %v1856
    %v3815 = vadd.f32 %v635, %v2194
    %v3816 = vadd.f32 %v636, %v2532
    %v3817 = vadd.f32 %v637, %v2870
    %v3818 = vadd.f32 %v638, %v3208
    %v3819 = vadd.f32 %v639, %v3546
    %v3820 = vadd.f32 %v640, %v1859
    %v3821 = vadd.f32 %v641, %v2197
    %v3822 = vadd.f32 %v642, %v2535
    %v3823 = vadd.f32 %v643, %v2873
    %v3824 = vadd.f32 %v644, %v3211
    %v3825 = vadd.f32 %v645, %v3549
    %v3826 = vadd.f32 %v646, %v1861
    %v3827 = vadd.f32 %v647, %v2199
    %v3828 = vadd.f32 %v648, %v2537
    %v3829 = vadd.f32 %v649, %v2875
    %v3830 = vadd.f32 %v650, %v3213
    %v3831 = vadd.f32 %v651, %v3551
    %v3832 = vadd.f32 %v652, %v1864
    %v3833 = vadd.f32 %v653, %v2202
    %v3834 = vadd.f32 %v654, %v2540
    %v3835 = vadd.f32 %v655, %v2878
    %v3836 = vadd.f32 %v656, %v3216
    %v3837 = vadd.f32 %v657, %v3554
    %v3838 = vadd.f32 %v658, %v1866
    %v3839 = vadd.f32 %v659, %v2204
    %v3840 = vadd.f32 %v660, %v2542
    %v3841 = vadd.f32 %v661, %v2880
    %v3842 = vadd.f32 %v662, %v3218
    %v3843 = vadd.f32 %v663, %v3556
    %v3844 = vadd.f32 %v664, %v1869
    %v3845 = vadd.f32 %v665, %v2207
    %v3846 = vadd.f32 %v666, %v2545
    %v3847 = vadd.f32 %v667, %v2883
    %v3848 = vadd.f32 %v668, %v3221
    %v3849 = vadd.f32 %v669, %v3559
    %v3850 = vadd.f32 %v670, %v1871
    %v3851 = vadd.f32 %v671, %v2209
    %v3852 = vadd.f32 %v672, %v2547
    %v3853 = vadd.f32 %v673, %v2885
    %v3854 = vadd.f32 %v674, %v3223
    %v3855 = vadd.f32 %v675, %v3561
    %v3856 = vadd.f32 %v676, %v1874
    %v3857 = vadd.f32 %v677, %v2212
    %v3858 = vadd.f32 %v678, %v2550
    %v3859 = vadd.f32 %v679, %v2888
    %v3860 = vadd.f32 %v680, %v3226
    %v3861 = vadd.f32 %v681, %v3564
    %v3862 = vadd.f32 %v682, %v1876
    %v3863 = vadd.f32 %v683, %v2214
    %v3864 = vadd.f32 %v684, %v2552
    %v3865 = vadd.f32 %v685, %v2890
    %v3866 = vadd.f32 %v686, %v3228
    %v3867 = vadd.f32 %v687, %v3566
    %v3868 = vadd.f32 %v688, %v1879
    %v3869 = vadd.f32 %v689, %v2217
    %v3870 = vadd.f32 %v690, %v2555
    %v3871 = vadd.f32 %v691, %v2893
    %v3872 = vadd.f32 %v692, %v3231
    %v3873 = vadd.f32 %v693, %v3569
    %v3874 = vadd.f32 %v694, %v1881
    %v3875 = vadd.f32 %v695, %v2219
    %v3876 = vadd.f32 %v696, %v2557
    %v3877 = vadd.f32 %v697, %v2895
    %v3878 = vadd.f32 %v698, %v3233
    %v3879 = vadd.f32 %v699, %v3571
    %v3880 = vadd.f32 %v700, %v1884
    %v3881 = vadd.f32 %v701, %v2222
    %v3882 = vadd.f32 %v702, %v2560
    %v3883 = vadd.f32 %v703, %v2898
    %v3884 = vadd.f32 %v704, %v3236
    %v3885 = vadd.f32 %v705, %v3574
    %v3886 = vadd.f32 %v706, %v1886
    %v3887 = vadd.f32 %v707, %v2224
    %v3888 = vadd.f32 %v708, %v2562
    %v3889 = vadd.f32 %v709, %v2900
    %v3890 = vadd.f32 %v710, %v3238
    %v3891 = vadd.f32 %v711, %v3576
    %v3892 = vadd.f32 %v712, %v1889
    %v3893 = vadd.f32 %v713, %v2227
    %v3894 = vadd.f32 %v714, %v2565
    %v3895 = vadd.f32 %v715, %v2903
    %v3896 = vadd.f32 %v716, %v3241
    %v3897 = vadd.f32 %v717, %v3579
    %v3898 = vadd.f32 %v718, %v1891
    %v3899 = vadd.f32 %v719, %v2229
    %v3900 = vadd.f32 %v720, %v2567
    %v3901 = vadd.f32 %v721, %v2905
    %v3902 = vadd.f32 %v722, %v3243
    %v3903 = vadd.f32 %v723, %v3581
    %v3904 = vadd.f32 %v724, %v1894
    %v3905 = vadd.f32 %v725, %v2232
    %v3906 = vadd.f32 %v726, %v2570
    %v3907 = vadd.f32 %v727, %v2908
    %v3908 = vadd.f32 %v728, %v3246
    %v3909 = vadd.f32 %v729, %v3584
    %v3910 = vadd.f32 %v730, %v1896
    %v3911 = vadd.f32 %v731, %v2234
    %v3912 = vadd.f32 %v732, %v2572
    %v3913 = vadd.f32 %v733, %v2910
    %v3914 = vadd.f32 %v734, %v3248
    %v3915 = vadd.f32 %v735, %v3586
    %v3916 = vadd.f32 %v736, %v1899
    %v3917 = vadd.f32 %v737, %v2237
    %v3918 = vadd.f32 %v738, %v2575
    %v3919 = vadd.f32 %v739, %v2913
    %v3920 = vadd.f32 %v740, %v3251
    %v3921 = vadd.f32 %v741, %v3589
    %v3922 = vadd.f32 %v742, %v1901
    %v3923 = vadd.f32 %v743, %v2239
    %v3924 = vadd.f32 %v744, %v2577
    %v3925 = vadd.f32 %v745, %v2915
    %v3926 = vadd.f32 %v746, %v3253
    %v3927 = vadd.f32 %v747, %v3591
    %v3928 = vadd.f32 %v748, %v1904
    %v3929 = vadd.f32 %v749, %v2242
    %v3930 = vadd.f32 %v750, %v2580
    %v3931 = vadd.f32 %v751, %v2918
    %v3932 = vadd.f32 %v752, %v3256
    %v3933 = vadd.f32 %v753, %v3594
    %v3934 = vadd.f32 %v754, %v1906
    %v3935 = vadd.f32 %v755, %v2244
    %v3936 = vadd.f32 %v756, %v2582
    %v3937 = vadd.f32 %v757, %v2920
    %v3938 = vadd.f32 %v758, %v3258
    %v3939 = vadd.f32 %v759, %v3596
    %v3940 = vadd.f32 %v760, %v1909
    %v3941 = vadd.f32 %v761, %v2247
    %v3942 = vadd.f32 %v762, %v2585
    %v3943 = vadd.f32 %v763, %v2923
    %v3944 = vadd.f32 %v764, %v3261
    %v3945 = vadd.f32 %v765, %v3599
    %v3946 = vadd.f32 %v766, %v1911
    %v3947 = vadd.f32 %v767, %v2249
    %v3948 = vadd.f32 %v768, %v2587
    %v3949 = vadd.f32 %v769, %v2925
    %v3950 = vadd.f32 %v770, %v3263
    %v3951 = vadd.f32 %v771, %v3601
    %v3952 = vadd.f32 %v772, %v1914
    %v3953 = vadd.f32 %v773, %v2252
    %v3954 = vadd.f32 %v774, %v2590
    %v3955 = vadd.f32 %v775, %v2928
    %v3956 = vadd.f32 %v776, %v3266
    %v3957 = vadd.f32 %v777, %v3604
    %v3958 = vadd.f32 %v778, %v1916
    %v3959 = vadd.f32 %v779, %v2254
    %v3960 = vadd.f32 %v780, %v2592
    %v3961 = vadd.f32 %v781, %v2930
    %v3962 = vadd.f32 %v782, %v3268
    %v3963 = vadd.f32 %v783, %v3606
    %v3964 = vadd.f32 %v784, %v1919
    %v3965 = vadd.f32 %v785, %v2257
    %v3966 = vadd.f32 %v786, %v2595
    %v3967 = vadd.f32 %v787, %v2933
    %v3968 = vadd.f32 %v788, %v3271
    %v3969 = vadd.f32 %v789, %v3609
    %v3970 = vadd.f32 %v790, %v1921
    %v3971 = vadd.f32 %v791, %v2259
    %v3972 = vadd.f32 %v792, %v2597
    %v3973 = vadd.f32 %v793, %v2935
    %v3974 = vadd.f32 %v794, %v3273
    %v3975 = vadd.f32 %v795, %v3611
    %v3976 = vadd.f32 %v796, %v1924
    %v3977 = vadd.f32 %v797, %v2262
    %v3978 = vadd.f32 %v798, %v2600
    %v3979 = vadd.f32 %v799, %v2938
    %v3980 = vadd.f32 %v800, %v3276
    %v3981 = vadd.f32 %v801, %v3614
    %v3982 = vadd.f32 %v802, %v1926
    %v3983 = vadd.f32 %v803, %v2264
    %v3984 = vadd.f32 %v804, %v2602
    %v3985 = vadd.f32 %v805, %v2940
    %v3986 = vadd.f32 %v806, %v3278
    %v3987 = vadd.f32 %v807, %v3616
    %v3988 = vadd.f32 %v808, %v1929
    %v3989 = vadd.f32 %v809, %v2267
    %v3990 = vadd.f32 %v810, %v2605
    %v3991 = vadd.f32 %v811, %v2943
    %v3992 = vadd.f32 %v812, %v3281
    %v3993 = vadd.f32 %v813, %v3619
    %v3994 = vadd.f32 %v814, %v1931
    %v3995 = vadd.f32 %v815, %v2269
    %v3996 = vadd.f32 %v816, %v2607
    %v3997 = vadd.f32 %v817, %v2945
    %v3998 = vadd.f32 %v818, %v3283
    %v3999 = vadd.f32 %v819, %v3621
    %v4000 = vadd.f32 %v820, %v1934
    %v4001 = vadd.f32 %v821, %v2272
    %v4002 = vadd.f32 %v822, %v2610
    %v4003 = vadd.f32 %v823, %v2948
    %v4004 = vadd.f32 %v824, %v3286
    %v4005 = vadd.f32 %v825, %v3624
    %v4006 = vadd.f32 %v826, %v1936
    %v4007 = vadd.f32 %v827, %v2274
    %v4008 = vadd.f32 %v828, %v2612
    %v4009 = vadd.f32 %v829, %v2950
    %v4010 = vadd.f32 %v830, %v3288
    %v4011 = vadd.f32 %v831, %v3626
    %4012 = vst [vmem:[#allocation2] sm:$0xff] %v3628
    %4013 = vst [vmem:[#allocation2 + $0x8] sm:$0xff] %v3629
    %4014 = vst [vmem:[#allocation2 + $0x10] sm:$0xff] %v3630
    %4015 = vst [vmem:[#allocation2 + $0x18] sm:$0xff] %v3631
    %4016 = vst [vmem:[#allocation2 + $0x20] sm:$0xff] %v3632
    %4017 = vst [vmem:[#allocation2 + $0x28] sm:$0xff] %v3633
    %4018 = vst [vmem:[#allocation2 + $0x30] sm:$0xff] %v3634
    %4019 = vst [vmem:[#allocation2 + $0x38] sm:$0xff] %v3635
    %4020 = vst [vmem:[#allocation2 + $0x40] sm:$0xff] %v3636
    %4021 = vst [vmem:[#allocation2 + $0x48] sm:$0xff] %v3637
    %4022 = vst [vmem:[#allocation2 + $0x50] sm:$0xff] %v3638
    %4023 = vst [vmem:[#allocation2 + $0x58] sm:$0xff] %v3639
    %4024 = vst [vmem:[#allocation2 + $0x60] sm:$0xff] %v3640
    %4025 = vst [vmem:[#allocation2 + $0x68] sm:$0xff] %v3641
    %4026 = vst [vmem:[#allocation2 + $0x70] sm:$0xff] %v3642
    %4027 = vst [vmem:[#allocation2 + $0x78] sm:$0xff] %v3643
    %4028 = vst [vmem:[#allocation2 + $0x80] sm:$0xff] %v3644
    %4029 = vst [vmem:[#allocation2 + $0x88] sm:$0xff] %v3645
    %4030 = vst [vmem:[#allocation2 + $0x90] sm:$0xff] %v3646
    %4031 = vst [vmem:[#allocation2 + $0x98] sm:$0xff] %v3647
    %4032 = vst [vmem:[#allocation2 + $0xa0] sm:$0xff] %v3648
    %4033 = vst [vmem:[#allocation2 + $0xa8] sm:$0xff] %v3649
    %4034 = vst [vmem:[#allocation2 + $0xb0] sm:$0xff] %v3650
    %4035 = vst [vmem:[#allocation2 + $0xb8] sm:$0xff] %v3651
    %4036 = vst [vmem:[#allocation2 + $0xc0] sm:$0xff] %v3652
    %4037 = vst [vmem:[#allocation2 + $0xc8] sm:$0xff] %v3653
    %4038 = vst [vmem:[#allocation2 + $0xd0] sm:$0xff] %v3654
    %4039 = vst [vmem:[#allocation2 + $0xd8] sm:$0xff] %v3655
    %4040 = vst [vmem:[#allocation2 + $0xe0] sm:$0xff] %v3656
    %4041 = vst [vmem:[#allocation2 + $0xe8] sm:$0xff] %v3657
    %4042 = vst [vmem:[#allocation2 + $0xf0] sm:$0xff] %v3658
    %4043 = vst [vmem:[#allocation2 + $0xf8] sm:$0xff] %v3659
    %4044 = vst [vmem:[#allocation2 + $0x100] sm:$0xff] %v3660
    %4045 = vst [vmem:[#allocation2 + $0x108] sm:$0xff] %v3661
    %4046 = vst [vmem:[#allocation2 + $0x110] sm:$0xff] %v3662
    %4047 = vst [vmem:[#allocation2 + $0x118] sm:$0xff] %v3663
    %4048 = vst [vmem:[#allocation2 + $0x120] sm:$0xff] %v3664
    %4049 = vst [vmem:[#allocation2 + $0x128] sm:$0xff] %v3665
    %4050 = vst [vmem:[#allocation2 + $0x130] sm:$0xff] %v3666
    %4051 = vst [vmem:[#allocation2 + $0x138] sm:$0xff] %v3667
    %4052 = vst [vmem:[#allocation2 + $0x140] sm:$0xff] %v3668
    %4053 = vst [vmem:[#allocation2 + $0x148] sm:$0xff] %v3669
    %4054 = vst [vmem:[#allocation2 + $0x150] sm:$0xff] %v3670
    %4055 = vst [vmem:[#allocation2 + $0x158] sm:$0xff] %v3671
    %4056 = vst [vmem:[#allocation2 + $0x160] sm:$0xff] %v3672
    %4057 = vst [vmem:[#allocation2 + $0x168] sm:$0xff] %v3673
    %4058 = vst [vmem:[#allocation2 + $0x170] sm:$0xff] %v3674
    %4059 = vst [vmem:[#allocation2 + $0x178] sm:$0xff] %v3675
    %4060 = vst [vmem:[#allocation2 + $0x180] sm:$0xff] %v3676
    %4061 = vst [vmem:[#allocation2 + $0x188] sm:$0xff] %v3677
    %4062 = vst [vmem:[#allocation2 + $0x190] sm:$0xff] %v3678
    %4063 = vst [vmem:[#allocation2 + $0x198] sm:$0xff] %v3679
    %4064 = vst [vmem:[#allocation2 + $0x1a0] sm:$0xff] %v3680
    %4065 = vst [vmem:[#allocation2 + $0x1a8] sm:$0xff] %v3681
    %4066 = vst [vmem:[#allocation2 + $0x1b0] sm:$0xff] %v3682
    %4067 = vst [vmem:[#allocation2 + $0x1b8] sm:$0xff] %v3683
    %4068 = vst [vmem:[#allocation2 + $0x1c0] sm:$0xff] %v3684
    %4069 = vst [vmem:[#allocation2 + $0x1c8] sm:$0xff] %v3685
    %4070 = vst [vmem:[#allocation2 + $0x1d0] sm:$0xff] %v3686
    %4071 = vst [vmem:[#allocation2 + $0x1d8] sm:$0xff] %v3687
    %4072 = vst [vmem:[#allocation2 + $0x1e0] sm:$0xff] %v3688
    %4073 = vst [vmem:[#allocation2 + $0x1e8] sm:$0xff] %v3689
    %4074 = vst [vmem:[#allocation2 + $0x1f0] sm:$0xff] %v3690
    %4075 = vst [vmem:[#allocation2 + $0x1f8] sm:$0xff] %v3691
    %4076 = vst [vmem:[#allocation2 + $0x200] sm:$0xff] %v3692
    %4077 = vst [vmem:[#allocation2 + $0x208] sm:$0xff] %v3693
    %4078 = vst [vmem:[#allocation2 + $0x210] sm:$0xff] %v3694
    %4079 = vst [vmem:[#allocation2 + $0x218] sm:$0xff] %v3695
    %4080 = vst [vmem:[#allocation2 + $0x220] sm:$0xff] %v3696
    %4081 = vst [vmem:[#allocation2 + $0x228] sm:$0xff] %v3697
    %4082 = vst [vmem:[#allocation2 + $0x230] sm:$0xff] %v3698
    %4083 = vst [vmem:[#allocation2 + $0x238] sm:$0xff] %v3699
    %4084 = vst [vmem:[#allocation2 + $0x240] sm:$0xff] %v3700
    %4085 = vst [vmem:[#allocation2 + $0x248] sm:$0xff] %v3701
    %4086 = vst [vmem:[#allocation2 + $0x250] sm:$0xff] %v3702
    %4087 = vst [vmem:[#allocation2 + $0x258] sm:$0xff] %v3703
    %4088 = vst [vmem:[#allocation2 + $0x260] sm:$0xff] %v3704
    %4089 = vst [vmem:[#allocation2 + $0x268] sm:$0xff] %v3705
    %4090 = vst [vmem:[#allocation2 + $0x270] sm:$0xff] %v3706
    %4091 = vst [vmem:[#allocation2 + $0x278] sm:$0xff] %v3707
    %4092 = vst [vmem:[#allocation2 + $0x280] sm:$0xff] %v3708
    %4093 = vst [vmem:[#allocation2 + $0x288] sm:$0xff] %v3709
    %4094 = vst [vmem:[#allocation2 + $0x290] sm:$0xff] %v3710
    %4095 = vst [vmem:[#allocation2 + $0x298] sm:$0xff] %v3711
    %4096 = vst [vmem:[#allocation2 + $0x2a0] sm:$0xff] %v3712
    %4097 = vst [vmem:[#allocation2 + $0x2a8] sm:$0xff] %v3713
    %4098 = vst [vmem:[#allocation2 + $0x2b0] sm:$0xff] %v3714
    %4099 = vst [vmem:[#allocation2 + $0x2b8] sm:$0xff] %v3715
    %4100 = vst [vmem:[#allocation2 + $0x2c0] sm:$0xff] %v3716
    %4101 = vst [vmem:[#allocation2 + $0x2c8] sm:$0xff] %v3717
    %4102 = vst [vmem:[#allocation2 + $0x2d0] sm:$0xff] %v3718
    %4103 = vst [vmem:[#allocation2 + $0x2d8] sm:$0xff] %v3719
    %4104 = vst [vmem:[#allocation2 + $0x2e0] sm:$0xff] %v3720
    %4105 = vst [vmem:[#allocation2 + $0x2e8] sm:$0xff] %v3721
    %4106 = vst [vmem:[#allocation2 + $0x2f0] sm:$0xff] %v3722
    %4107 = vst [vmem:[#allocation2 + $0x2f8] sm:$0xff] %v3723
    %4108 = vst [vmem:[#allocation2 + $0x300] sm:$0xff] %v3724
    %4109 = vst [vmem:[#allocation2 + $0x308] sm:$0xff] %v3725
    %4110 = vst [vmem:[#allocation2 + $0x310] sm:$0xff] %v3726
    %4111 = vst [vmem:[#allocation2 + $0x318] sm:$0xff] %v3727
    %4112 = vst [vmem:[#allocation2 + $0x320] sm:$0xff] %v3728
    %4113 = vst [vmem:[#allocation2 + $0x328] sm:$0xff] %v3729
    %4114 = vst [vmem:[#allocation2 + $0x330] sm:$0xff] %v3730
    %4115 = vst [vmem:[#allocation2 + $0x338] sm:$0xff] %v3731
    %4116 = vst [vmem:[#allocation2 + $0x340] sm:$0xff] %v3732
    %4117 = vst [vmem:[#allocation2 + $0x348] sm:$0xff] %v3733
    %4118 = vst [vmem:[#allocation2 + $0x350] sm:$0xff] %v3734
    %4119 = vst [vmem:[#allocation2 + $0x358] sm:$0xff] %v3735
    %4120 = vst [vmem:[#allocation2 + $0x360] sm:$0xff] %v3736
    %4121 = vst [vmem:[#allocation2 + $0x368] sm:$0xff] %v3737
    %4122 = vst [vmem:[#allocation2 + $0x370] sm:$0xff] %v3738
    %4123 = vst [vmem:[#allocation2 + $0x378] sm:$0xff] %v3739
    %4124 = vst [vmem:[#allocation2 + $0x380] sm:$0xff] %v3740
    %4125 = vst [vmem:[#allocation2 + $0x388] sm:$0xff] %v3741
    %4126 = vst [vmem:[#allocation2 + $0x390] sm:$0xff] %v3742
    %4127 = vst [vmem:[#allocation2 + $0x398] sm:$0xff] %v3743
    %4128 = vst [vmem:[#allocation2 + $0x3a0] sm:$0xff] %v3744
    %4129 = vst [vmem:[#allocation2 + $0x3a8] sm:$0xff] %v3745
    %4130 = vst [vmem:[#allocation2 + $0x3b0] sm:$0xff] %v3746
    %4131 = vst [vmem:[#allocation2 + $0x3b8] sm:$0xff] %v3747
    %4132 = vst [vmem:[#allocation2 + $0x3c0] sm:$0xff] %v3748
    %4133 = vst [vmem:[#allocation2 + $0x3c8] sm:$0xff] %v3749
    %4134 = vst [vmem:[#allocation2 + $0x3d0] sm:$0xff] %v3750
    %4135 = vst [vmem:[#allocation2 + $0x3d8] sm:$0xff] %v3751
    %4136 = vst [vmem:[#allocation2 + $0x3e0] sm:$0xff] %v3752
    %4137 = vst [vmem:[#allocation2 + $0x3e8] sm:$0xff] %v3753
    %4138 = vst [vmem:[#allocation2 + $0x3f0] sm:$0xff] %v3754
    %4139 = vst [vmem:[#allocation2 + $0x3f8] sm:$0xff] %v3755
    %4140 = vst [vmem:[#allocation2 + $0x400] sm:$0xff] %v3756
    %4141 = vst [vmem:[#allocation2 + $0x408] sm:$0xff] %v3757
    %4142 = vst [vmem:[#allocation2 + $0x410] sm:$0xff] %v3758
    %4143 = vst [vmem:[#allocation2 + $0x418] sm:$0xff] %v3759
    %4144 = vst [vmem:[#allocation2 + $0x420] sm:$0xff] %v3760
    %4145 = vst [vmem:[#allocation2 + $0x428] sm:$0xff] %v3761
    %4146 = vst [vmem:[#allocation2 + $0x430] sm:$0xff] %v3762
    %4147 = vst [vmem:[#allocation2 + $0x438] sm:$0xff] %v3763
    %4148 = vst [vmem:[#allocation2 + $0x440] sm:$0xff] %v3764
    %4149 = vst [vmem:[#allocation2 + $0x448] sm:$0xff] %v3765
    %4150 = vst [vmem:[#allocation2 + $0x450] sm:$0xff] %v3766
    %4151 = vst [vmem:[#allocation2 + $0x458] sm:$0xff] %v3767
    %4152 = vst [vmem:[#allocation2 + $0x460] sm:$0xff] %v3768
    %4153 = vst [vmem:[#allocation2 + $0x468] sm:$0xff] %v3769
    %4154 = vst [vmem:[#allocation2 + $0x470] sm:$0xff] %v3770
    %4155 = vst [vmem:[#allocation2 + $0x478] sm:$0xff] %v3771
    %4156 = vst [vmem:[#allocation2 + $0x480] sm:$0xff] %v3772
    %4157 = vst [vmem:[#allocation2 + $0x488] sm:$0xff] %v3773
    %4158 = vst [vmem:[#allocation2 + $0x490] sm:$0xff] %v3774
    %4159 = vst [vmem:[#allocation2 + $0x498] sm:$0xff] %v3775
    %4160 = vst [vmem:[#allocation2 + $0x4a0] sm:$0xff] %v3776
    %4161 = vst [vmem:[#allocation2 + $0x4a8] sm:$0xff] %v3777
    %4162 = vst [vmem:[#allocation2 + $0x4b0] sm:$0xff] %v3778
    %4163 = vst [vmem:[#allocation2 + $0x4b8] sm:$0xff] %v3779
    %4164 = vst [vmem:[#allocation2 + $0x4c0] sm:$0xff] %v3780
    %4165 = vst [vmem:[#allocation2 + $0x4c8] sm:$0xff] %v3781
    %4166 = vst [vmem:[#allocation2 + $0x4d0] sm:$0xff] %v3782
    %4167 = vst [vmem:[#allocation2 + $0x4d8] sm:$0xff] %v3783
    %4168 = vst [vmem:[#allocation2 + $0x4e0] sm:$0xff] %v3784
    %4169 = vst [vmem:[#allocation2 + $0x4e8] sm:$0xff] %v3785
    %4170 = vst [vmem:[#allocation2 + $0x4f0] sm:$0xff] %v3786
    %4171 = vst [vmem:[#allocation2 + $0x4f8] sm:$0xff] %v3787
    %4172 = vst [vmem:[#allocation2 + $0x500] sm:$0xff] %v3788
    %4173 = vst [vmem:[#allocation2 + $0x508] sm:$0xff] %v3789
    %4174 = vst [vmem:[#allocation2 + $0x510] sm:$0xff] %v3790
    %4175 = vst [vmem:[#allocation2 + $0x518] sm:$0xff] %v3791
    %4176 = vst [vmem:[#allocation2 + $0x520] sm:$0xff] %v3792
    %4177 = vst [vmem:[#allocation2 + $0x528] sm:$0xff] %v3793
    %4178 = vst [vmem:[#allocation2 + $0x530] sm:$0xff] %v3794
    %4179 = vst [vmem:[#allocation2 + $0x538] sm:$0xff] %v3795
    %4180 = vst [vmem:[#allocation2 + $0x540] sm:$0xff] %v3796
    %4181 = vst [vmem:[#allocation2 + $0x548] sm:$0xff] %v3797
    %4182 = vst [vmem:[#allocation2 + $0x550] sm:$0xff] %v3798
    %4183 = vst [vmem:[#allocation2 + $0x558] sm:$0xff] %v3799
    %4184 = vst [vmem:[#allocation2 + $0x560] sm:$0xff] %v3800
    %4185 = vst [vmem:[#allocation2 + $0x568] sm:$0xff] %v3801
    %4186 = vst [vmem:[#allocation2 + $0x570] sm:$0xff] %v3802
    %4187 = vst [vmem:[#allocation2 + $0x578] sm:$0xff] %v3803
    %4188 = vst [vmem:[#allocation2 + $0x580] sm:$0xff] %v3804
    %4189 = vst [vmem:[#allocation2 + $0x588] sm:$0xff] %v3805
    %4190 = vst [vmem:[#allocation2 + $0x590] sm:$0xff] %v3806
    %4191 = vst [vmem:[#allocation2 + $0x598] sm:$0xff] %v3807
    %4192 = vst [vmem:[#allocation2 + $0x5a0] sm:$0xff] %v3808
    %4193 = vst [vmem:[#allocation2 + $0x5a8] sm:$0xff] %v3809
    %4194 = vst [vmem:[#allocation2 + $0x5b0] sm:$0xff] %v3810
    %4195 = vst [vmem:[#allocation2 + $0x5b8] sm:$0xff] %v3811
    %4196 = vst [vmem:[#allocation2 + $0x5c0] sm:$0xff] %v3812
    %4197 = vst [vmem:[#allocation2 + $0x5c8] sm:$0xff] %v3813
    %4198 = vst [vmem:[#allocation2 + $0x5d0] sm:$0xff] %v3814
    %4199 = vst [vmem:[#allocation2 + $0x5d8] sm:$0xff] %v3815
    %4200 = vst [vmem:[#allocation2 + $0x5e0] sm:$0xff] %v3816
    %4201 = vst [vmem:[#allocation2 + $0x5e8] sm:$0xff] %v3817
    %4202 = vst [vmem:[#allocation2 + $0x5f0] sm:$0xff] %v3818
    %4203 = vst [vmem:[#allocation2 + $0x5f8] sm:$0xff] %v3819
    %4204 = vst [vmem:[#allocation2 + $0x600] sm:$0xff] %v3820
    %4205 = vst [vmem:[#allocation2 + $0x608] sm:$0xff] %v3821
    %4206 = vst [vmem:[#allocation2 + $0x610] sm:$0xff] %v3822
    %4207 = vst [vmem:[#allocation2 + $0x618] sm:$0xff] %v3823
    %4208 = vst [vmem:[#allocation2 + $0x620] sm:$0xff] %v3824
    %4209 = vst [vmem:[#allocation2 + $0x628] sm:$0xff] %v3825
    %4210 = vst [vmem:[#allocation2 + $0x630] sm:$0xff] %v3826
    %4211 = vst [vmem:[#allocation2 + $0x638] sm:$0xff] %v3827
    %4212 = vst [vmem:[#allocation2 + $0x640] sm:$0xff] %v3828
    %4213 = vst [vmem:[#allocation2 + $0x648] sm:$0xff] %v3829
    %4214 = vst [vmem:[#allocation2 + $0x650] sm:$0xff] %v3830
    %4215 = vst [vmem:[#allocation2 + $0x658] sm:$0xff] %v3831
    %4216 = vst [vmem:[#allocation2 + $0x660] sm:$0xff] %v3832
    %4217 = vst [vmem:[#allocation2 + $0x668] sm:$0xff] %v3833
    %4218 = vst [vmem:[#allocation2 + $0x670] sm:$0xff] %v3834
    %4219 = vst [vmem:[#allocation2 + $0x678] sm:$0xff] %v3835
    %4220 = vst [vmem:[#allocation2 + $0x680] sm:$0xff] %v3836
    %4221 = vst [vmem:[#allocation2 + $0x688] sm:$0xff] %v3837
    %4222 = vst [vmem:[#allocation2 + $0x690] sm:$0xff] %v3838
    %4223 = vst [vmem:[#allocation2 + $0x698] sm:$0xff] %v3839
    %4224 = vst [vmem:[#allocation2 + $0x6a0] sm:$0xff] %v3840
    %4225 = vst [vmem:[#allocation2 + $0x6a8] sm:$0xff] %v3841
    %4226 = vst [vmem:[#allocation2 + $0x6b0] sm:$0xff] %v3842
    %4227 = vst [vmem:[#allocation2 + $0x6b8] sm:$0xff] %v3843
    %4228 = vst [vmem:[#allocation2 + $0x6c0] sm:$0xff] %v3844
    %4229 = vst [vmem:[#allocation2 + $0x6c8] sm:$0xff] %v3845
    %4230 = vst [vmem:[#allocation2 + $0x6d0] sm:$0xff] %v3846
    %4231 = vst [vmem:[#allocation2 + $0x6d8] sm:$0xff] %v3847
    %4232 = vst [vmem:[#allocation2 + $0x6e0] sm:$0xff] %v3848
    %4233 = vst [vmem:[#allocation2 + $0x6e8] sm:$0xff] %v3849
    %4234 = vst [vmem:[#allocation2 + $0x6f0] sm:$0xff] %v3850
    %4235 = vst [vmem:[#allocation2 + $0x6f8] sm:$0xff] %v3851
    %4236 = vst [vmem:[#allocation2 + $0x700] sm:$0xff] %v3852
    %4237 = vst [vmem:[#allocation2 + $0x708] sm:$0xff] %v3853
    %4238 = vst [vmem:[#allocation2 + $0x710] sm:$0xff] %v3854
    %4239 = vst [vmem:[#allocation2 + $0x718] sm:$0xff] %v3855
    %4240 = vst [vmem:[#allocation2 + $0x720] sm:$0xff] %v3856
    %4241 = vst [vmem:[#allocation2 + $0x728] sm:$0xff] %v3857
    %4242 = vst [vmem:[#allocation2 + $0x730] sm:$0xff] %v3858
    %4243 = vst [vmem:[#allocation2 + $0x738] sm:$0xff] %v3859
    %4244 = vst [vmem:[#allocation2 + $0x740] sm:$0xff] %v3860
    %4245 = vst [vmem:[#allocation2 + $0x748] sm:$0xff] %v3861
    %4246 = vst [vmem:[#allocation2 + $0x750] sm:$0xff] %v3862
    %4247 = vst [vmem:[#allocation2 + $0x758] sm:$0xff] %v3863
    %4248 = vst [vmem:[#allocation2 + $0x760] sm:$0xff] %v3864
    %4249 = vst [vmem:[#allocation2 + $0x768] sm:$0xff] %v3865
    %4250 = vst [vmem:[#allocation2 + $0x770] sm:$0xff] %v3866
    %4251 = vst [vmem:[#allocation2 + $0x778] sm:$0xff] %v3867
    %4252 = vst [vmem:[#allocation2 + $0x780] sm:$0xff] %v3868
    %4253 = vst [vmem:[#allocation2 + $0x788] sm:$0xff] %v3869
    %4254 = vst [vmem:[#allocation2 + $0x790] sm:$0xff] %v3870
    %4255 = vst [vmem:[#allocation2 + $0x798] sm:$0xff] %v3871
    %4256 = vst [vmem:[#allocation2 + $0x7a0] sm:$0xff] %v3872
    %4257 = vst [vmem:[#allocation2 + $0x7a8] sm:$0xff] %v3873
    %4258 = vst [vmem:[#allocation2 + $0x7b0] sm:$0xff] %v3874
    %4259 = vst [vmem:[#allocation2 + $0x7b8] sm:$0xff] %v3875
    %4260 = vst [vmem:[#allocation2 + $0x7c0] sm:$0xff] %v3876
    %4261 = vst [vmem:[#allocation2 + $0x7c8] sm:$0xff] %v3877
    %4262 = vst [vmem:[#allocation2 + $0x7d0] sm:$0xff] %v3878
    %4263 = vst [vmem:[#allocation2 + $0x7d8] sm:$0xff] %v3879
    %4264 = vst [vmem:[#allocation2 + $0x7e0] sm:$0xff] %v3880
    %4265 = vst [vmem:[#allocation2 + $0x7e8] sm:$0xff] %v3881
    %4266 = vst [vmem:[#allocation2 + $0x7f0] sm:$0xff] %v3882
    %4267 = vst [vmem:[#allocation2 + $0x7f8] sm:$0xff] %v3883
    %4268 = vst [vmem:[#allocation2 + $0x800] sm:$0xff] %v3884
    %4269 = vst [vmem:[#allocation2 + $0x808] sm:$0xff] %v3885
    %4270 = vst [vmem:[#allocation2 + $0x810] sm:$0xff] %v3886
    %4271 = vst [vmem:[#allocation2 + $0x818] sm:$0xff] %v3887
    %4272 = vst [vmem:[#allocation2 + $0x820] sm:$0xff] %v3888
    %4273 = vst [vmem:[#allocation2 + $0x828] sm:$0xff] %v3889
    %4274 = vst [vmem:[#allocation2 + $0x830] sm:$0xff] %v3890
    %4275 = vst [vmem:[#allocation2 + $0x838] sm:$0xff] %v3891
    %4276 = vst [vmem:[#allocation2 + $0x840] sm:$0xff] %v3892
    %4277 = vst [vmem:[#allocation2 + $0x848] sm:$0xff] %v3893
    %4278 = vst [vmem:[#allocation2 + $0x850] sm:$0xff] %v3894
    %4279 = vst [vmem:[#allocation2 + $0x858] sm:$0xff] %v3895
    %4280 = vst [vmem:[#allocation2 + $0x860] sm:$0xff] %v3896
    %4281 = vst [vmem:[#allocation2 + $0x868] sm:$0xff] %v3897
    %4282 = vst [vmem:[#allocation2 + $0x870] sm:$0xff] %v3898
    %4283 = vst [vmem:[#allocation2 + $0x878] sm:$0xff] %v3899
    %4284 = vst [vmem:[#allocation2 + $0x880] sm:$0xff] %v3900
    %4285 = vst [vmem:[#allocation2 + $0x888] sm:$0xff] %v3901
    %4286 = vst [vmem:[#allocation2 + $0x890] sm:$0xff] %v3902
    %4287 = vst [vmem:[#allocation2 + $0x898] sm:$0xff] %v3903
    %4288 = vst [vmem:[#allocation2 + $0x8a0] sm:$0xff] %v3904
    %4289 = vst [vmem:[#allocation2 + $0x8a8] sm:$0xff] %v3905
    %4290 = vst [vmem:[#allocation2 + $0x8b0] sm:$0xff] %v3906
    %4291 = vst [vmem:[#allocation2 + $0x8b8] sm:$0xff] %v3907
    %4292 = vst [vmem:[#allocation2 + $0x8c0] sm:$0xff] %v3908
    %4293 = vst [vmem:[#allocation2 + $0x8c8] sm:$0xff] %v3909
    %4294 = vst [vmem:[#allocation2 + $0x8d0] sm:$0xff] %v3910
    %4295 = vst [vmem:[#allocation2 + $0x8d8] sm:$0xff] %v3911
    %4296 = vst [vmem:[#allocation2 + $0x8e0] sm:$0xff] %v3912
    %4297 = vst [vmem:[#allocation2 + $0x8e8] sm:$0xff] %v3913
    %4298 = vst [vmem:[#allocation2 + $0x8f0] sm:$0xff] %v3914
    %4299 = vst [vmem:[#allocation2 + $0x8f8] sm:$0xff] %v3915
    %4300 = vst [vmem:[#allocation2 + $0x900] sm:$0xff] %v3916
    %4301 = vst [vmem:[#allocation2 + $0x908] sm:$0xff] %v3917
    %4302 = vst [vmem:[#allocation2 + $0x910] sm:$0xff] %v3918
    %4303 = vst [vmem:[#allocation2 + $0x918] sm:$0xff] %v3919
    %4304 = vst [vmem:[#allocation2 + $0x920] sm:$0xff] %v3920
    %4305 = vst [vmem:[#allocation2 + $0x928] sm:$0xff] %v3921
    %4306 = vst [vmem:[#allocation2 + $0x930] sm:$0xff] %v3922
    %4307 = vst [vmem:[#allocation2 + $0x938] sm:$0xff] %v3923
    %4308 = vst [vmem:[#allocation2 + $0x940] sm:$0xff] %v3924
    %4309 = vst [vmem:[#allocation2 + $0x948] sm:$0xff] %v3925
    %4310 = vst [vmem:[#allocation2 + $0x950] sm:$0xff] %v3926
    %4311 = vst [vmem:[#allocation2 + $0x958] sm:$0xff] %v3927
    %4312 = vst [vmem:[#allocation2 + $0x960] sm:$0xff] %v3928
    %4313 = vst [vmem:[#allocation2 + $0x968] sm:$0xff] %v3929
    %4314 = vst [vmem:[#allocation2 + $0x970] sm:$0xff] %v3930
    %4315 = vst [vmem:[#allocation2 + $0x978] sm:$0xff] %v3931
    %4316 = vst [vmem:[#allocation2 + $0x980] sm:$0xff] %v3932
    %4317 = vst [vmem:[#allocation2 + $0x988] sm:$0xff] %v3933
    %4318 = vst [vmem:[#allocation2 + $0x990] sm:$0xff] %v3934
    %4319 = vst [vmem:[#allocation2 + $0x998] sm:$0xff] %v3935
    %4320 = vst [vmem:[#allocation2 + $0x9a0] sm:$0xff] %v3936
    %4321 = vst [vmem:[#allocation2 + $0x9a8] sm:$0xff] %v3937
    %4322 = vst [vmem:[#allocation2 + $0x9b0] sm:$0xff] %v3938
    %4323 = vst [vmem:[#allocation2 + $0x9b8] sm:$0xff] %v3939
    %4324 = vst [vmem:[#allocation2 + $0x9c0] sm:$0xff] %v3940
    %4325 = vst [vmem:[#allocation2 + $0x9c8] sm:$0xff] %v3941
    %4326 = vst [vmem:[#allocation2 + $0x9d0] sm:$0xff] %v3942
    %4327 = vst [vmem:[#allocation2 + $0x9d8] sm:$0xff] %v3943
    %4328 = vst [vmem:[#allocation2 + $0x9e0] sm:$0xff] %v3944
    %4329 = vst [vmem:[#allocation2 + $0x9e8] sm:$0xff] %v3945
    %4330 = vst [vmem:[#allocation2 + $0x9f0] sm:$0xff] %v3946
    %4331 = vst [vmem:[#allocation2 + $0x9f8] sm:$0xff] %v3947
    %4332 = vst [vmem:[#allocation2 + $0xa00] sm:$0xff] %v3948
    %4333 = vst [vmem:[#allocation2 + $0xa08] sm:$0xff] %v3949
    %4334 = vst [vmem:[#allocation2 + $0xa10] sm:$0xff] %v3950
    %4335 = vst [vmem:[#allocation2 + $0xa18] sm:$0xff] %v3951
    %4336 = vst [vmem:[#allocation2 + $0xa20] sm:$0xff] %v3952
    %4337 = vst [vmem:[#allocation2 + $0xa28] sm:$0xff] %v3953
    %4338 = vst [vmem:[#allocation2 + $0xa30] sm:$0xff] %v3954
    %4339 = vst [vmem:[#allocation2 + $0xa38] sm:$0xff] %v3955
    %4340 = vst [vmem:[#allocation2 + $0xa40] sm:$0xff] %v3956
    %4341 = vst [vmem:[#allocation2 + $0xa48] sm:$0xff] %v3957
    %4342 = vst [vmem:[#allocation2 + $0xa50] sm:$0xff] %v3958
    %4343 = vst [vmem:[#allocation2 + $0xa58] sm:$0xff] %v3959
    %4344 = vst [vmem:[#allocation2 + $0xa60] sm:$0xff] %v3960
    %4345 = vst [vmem:[#allocation2 + $0xa68] sm:$0xff] %v3961
    %4346 = vst [vmem:[#allocation2 + $0xa70] sm:$0xff] %v3962
    %4347 = vst [vmem:[#allocation2 + $0xa78] sm:$0xff] %v3963
    %4348 = vst [vmem:[#allocation2 + $0xa80] sm:$0xff] %v3964
    %4349 = vst [vmem:[#allocation2 + $0xa88] sm:$0xff] %v3965
    %4350 = vst [vmem:[#allocation2 + $0xa90] sm:$0xff] %v3966
    %4351 = vst [vmem:[#allocation2 + $0xa98] sm:$0xff] %v3967
    %4352 = vst [vmem:[#allocation2 + $0xaa0] sm:$0xff] %v3968
    %4353 = vst [vmem:[#allocation2 + $0xaa8] sm:$0xff] %v3969
    %4354 = vst [vmem:[#allocation2 + $0xab0] sm:$0xff] %v3970
    %4355 = vst [vmem:[#allocation2 + $0xab8] sm:$0xff] %v3971
    %4356 = vst [vmem:[#allocation2 + $0xac0] sm:$0xff] %v3972
    %4357 = vst [vmem:[#allocation2 + $0xac8] sm:$0xff] %v3973
    %4358 = vst [vmem:[#allocation2 + $0xad0] sm:$0xff] %v3974
    %4359 = vst [vmem:[#allocation2 + $0xad8] sm:$0xff] %v3975
    %4360 = vst [vmem:[#allocation2 + $0xae0] sm:$0xff] %v3976
    %4361 = vst [vmem:[#allocation2 + $0xae8] sm:$0xff] %v3977
    %4362 = vst [vmem:[#allocation2 + $0xaf0] sm:$0xff] %v3978
    %4363 = vst [vmem:[#allocation2 + $0xaf8] sm:$0xff] %v3979
    %4364 = vst [vmem:[#allocation2 + $0xb00] sm:$0xff] %v3980
    %4365 = vst [vmem:[#allocation2 + $0xb08] sm:$0xff] %v3981
    %4366 = vst [vmem:[#allocation2 + $0xb10] sm:$0xff] %v3982
    %4367 = vst [vmem:[#allocation2 + $0xb18] sm:$0xff] %v3983
    %4368 = vst [vmem:[#allocation2 + $0xb20] sm:$0xff] %v3984
    %4369 = vst [vmem:[#allocation2 + $0xb28] sm:$0xff] %v3985
    %4370 = vst [vmem:[#allocation2 + $0xb30] sm:$0xff] %v3986
    %4371 = vst [vmem:[#allocation2 + $0xb38] sm:$0xff] %v3987
    %4372 = vst [vmem:[#allocation2 + $0xb40] sm:$0xff] %v3988
    %4373 = vst [vmem:[#allocation2 + $0xb48] sm:$0xff] %v3989
    %4374 = vst [vmem:[#allocation2 + $0xb50] sm:$0xff] %v3990
    %4375 = vst [vmem:[#allocation2 + $0xb58] sm:$0xff] %v3991
    %4376 = vst [vmem:[#allocation2 + $0xb60] sm:$0xff] %v3992
    %4377 = vst [vmem:[#allocation2 + $0xb68] sm:$0xff] %v3993
    %4378 = vst [vmem:[#allocation2 + $0xb70] sm:$0xff] %v3994
    %4379 = vst [vmem:[#allocation2 + $0xb78] sm:$0xff] %v3995
    %4380 = vst [vmem:[#allocation2 + $0xb80] sm:$0xff] %v3996
    %4381 = vst [vmem:[#allocation2 + $0xb88] sm:$0xff] %v3997
    %4382 = vst [vmem:[#allocation2 + $0xb90] sm:$0xff] %v3998
    %4383 = vst [vmem:[#allocation2 + $0xb98] sm:$0xff] %v3999
    %4384 = vst [vmem:[#allocation2 + $0xba0] sm:$0xff] %v4000
    %4385 = vst [vmem:[#allocation2 + $0xba8] sm:$0xff] %v4001
    %4386 = vst [vmem:[#allocation2 + $0xbb0] sm:$0xff] %v4002
    %4387 = vst [vmem:[#allocation2 + $0xbb8] sm:$0xff] %v4003
    %4388 = vst [vmem:[#allocation2 + $0xbc0] sm:$0xff] %v4004
    %4389 = vst [vmem:[#allocation2 + $0xbc8] sm:$0xff] %v4005
    %4390 = vst [vmem:[#allocation2 + $0xbd0] sm:$0xff] %v4006
    %4391 = vst [vmem:[#allocation2 + $0xbd8] sm:$0xff] %v4007
    %4392 = vst [vmem:[#allocation2 + $0xbe0] sm:$0xff] %v4008
    %4393 = vst [vmem:[#allocation2 + $0xbe8] sm:$0xff] %v4009
    %4394 = vst [vmem:[#allocation2 + $0xbf0] sm:$0xff] %v4010
    %4395 = vst [vmem:[#allocation2 + $0xbf8] sm:$0xff] %v4011
    // Predicated region
    $region30: #{tpu_custom_call.1} parent=1 // pred_check
      %p4396 = pneg %p60
    $region31: #{tpu_custom_call.1} parent=1 // pred_check_branch
      %4398 = sbr.rel (%p4396) target = $region33
    $region32: #{tpu_custom_call.1} parent=1 // pred_region
      %v4399 = vld [vmem:[#allocation2] sm:$0xff]
      %v4400 = vld [vmem:[#allocation2 + $0x8] sm:$0xff]
      %v4401 = vld [vmem:[#allocation2 + $0x10] sm:$0xff]
      %v4402 = vld [vmem:[#allocation2 + $0x18] sm:$0xff]
      %v4403 = vld [vmem:[#allocation2 + $0x20] sm:$0xff]
      %v4404 = vld [vmem:[#allocation2 + $0x28] sm:$0xff]
      %v4405 = vld [vmem:[#allocation2 + $0x30] sm:$0xff]
      %v4406 = vld [vmem:[#allocation2 + $0x38] sm:$0xff]
      %v4407 = vld [vmem:[#allocation2 + $0x40] sm:$0xff]
      %v4408 = vld [vmem:[#allocation2 + $0x48] sm:$0xff]
      %v4409 = vld [vmem:[#allocation2 + $0x50] sm:$0xff]
      %v4410 = vld [vmem:[#allocation2 + $0x58] sm:$0xff]
      %v4411 = vld [vmem:[#allocation2 + $0x60] sm:$0xff]
      %v4412 = vld [vmem:[#allocation2 + $0x68] sm:$0xff]
      %v4413 = vld [vmem:[#allocation2 + $0x70] sm:$0xff]
      %v4414 = vld [vmem:[#allocation2 + $0x78] sm:$0xff]
      %v4415 = vld [vmem:[#allocation2 + $0x80] sm:$0xff]
      %v4416 = vld [vmem:[#allocation2 + $0x88] sm:$0xff]
      %v4417 = vld [vmem:[#allocation2 + $0x90] sm:$0xff]
      %v4418 = vld [vmem:[#allocation2 + $0x98] sm:$0xff]
      %v4419 = vld [vmem:[#allocation2 + $0xa0] sm:$0xff]
      %v4420 = vld [vmem:[#allocation2 + $0xa8] sm:$0xff]
      %v4421 = vld [vmem:[#allocation2 + $0xb0] sm:$0xff]
      %v4422 = vld [vmem:[#allocation2 + $0xb8] sm:$0xff]
      %v4423 = vld [vmem:[#allocation2 + $0xc0] sm:$0xff]
      %v4424 = vld [vmem:[#allocation2 + $0xc8] sm:$0xff]
      %v4425 = vld [vmem:[#allocation2 + $0xd0] sm:$0xff]
      %v4426 = vld [vmem:[#allocation2 + $0xd8] sm:$0xff]
      %v4427 = vld [vmem:[#allocation2 + $0xe0] sm:$0xff]
      %v4428 = vld [vmem:[#allocation2 + $0xe8] sm:$0xff]
      %v4429 = vld [vmem:[#allocation2 + $0xf0] sm:$0xff]
      %v4430 = vld [vmem:[#allocation2 + $0xf8] sm:$0xff]
      %v4431 = vld [vmem:[#allocation2 + $0x100] sm:$0xff]
      %v4432 = vld [vmem:[#allocation2 + $0x108] sm:$0xff]
      %v4433 = vld [vmem:[#allocation2 + $0x110] sm:$0xff]
      %v4434 = vld [vmem:[#allocation2 + $0x118] sm:$0xff]
      %v4435 = vld [vmem:[#allocation2 + $0x120] sm:$0xff]
      %v4436 = vld [vmem:[#allocation2 + $0x128] sm:$0xff]
      %v4437 = vld [vmem:[#allocation2 + $0x130] sm:$0xff]
      %v4438 = vld [vmem:[#allocation2 + $0x138] sm:$0xff]
      %v4439 = vld [vmem:[#allocation2 + $0x140] sm:$0xff]
      %v4440 = vld [vmem:[#allocation2 + $0x148] sm:$0xff]
      %v4441 = vld [vmem:[#allocation2 + $0x150] sm:$0xff]
      %v4442 = vld [vmem:[#allocation2 + $0x158] sm:$0xff]
      %v4443 = vld [vmem:[#allocation2 + $0x160] sm:$0xff]
      %v4444 = vld [vmem:[#allocation2 + $0x168] sm:$0xff]
      %v4445 = vld [vmem:[#allocation2 + $0x170] sm:$0xff]
      %v4446 = vld [vmem:[#allocation2 + $0x178] sm:$0xff]
      %v4447 = vld [vmem:[#allocation2 + $0x180] sm:$0xff]
      %v4448 = vld [vmem:[#allocation2 + $0x188] sm:$0xff]
      %v4449 = vld [vmem:[#allocation2 + $0x190] sm:$0xff]
      %v4450 = vld [vmem:[#allocation2 + $0x198] sm:$0xff]
      %v4451 = vld [vmem:[#allocation2 + $0x1a0] sm:$0xff]
      %v4452 = vld [vmem:[#allocation2 + $0x1a8] sm:$0xff]
      %v4453 = vld [vmem:[#allocation2 + $0x1b0] sm:$0xff]
      %v4454 = vld [vmem:[#allocation2 + $0x1b8] sm:$0xff]
      %v4455 = vld [vmem:[#allocation2 + $0x1c0] sm:$0xff]
      %v4456 = vld [vmem:[#allocation2 + $0x1c8] sm:$0xff]
      %v4457 = vld [vmem:[#allocation2 + $0x1d0] sm:$0xff]
      %v4458 = vld [vmem:[#allocation2 + $0x1d8] sm:$0xff]
      %v4459 = vld [vmem:[#allocation2 + $0x1e0] sm:$0xff]
      %v4460 = vld [vmem:[#allocation2 + $0x1e8] sm:$0xff]
      %v4461 = vld [vmem:[#allocation2 + $0x1f0] sm:$0xff]
      %v4462 = vld [vmem:[#allocation2 + $0x1f8] sm:$0xff]
      %v4463 = vld [vmem:[#allocation2 + $0x200] sm:$0xff]
      %v4464 = vld [vmem:[#allocation2 + $0x208] sm:$0xff]
      %v4465 = vld [vmem:[#allocation2 + $0x210] sm:$0xff]
      %v4466 = vld [vmem:[#allocation2 + $0x218] sm:$0xff]
      %v4467 = vld [vmem:[#allocation2 + $0x220] sm:$0xff]
      %v4468 = vld [vmem:[#allocation2 + $0x228] sm:$0xff]
      %v4469 = vld [vmem:[#allocation2 + $0x230] sm:$0xff]
      %v4470 = vld [vmem:[#allocation2 + $0x238] sm:$0xff]
      %v4471 = vld [vmem:[#allocation2 + $0x240] sm:$0xff]
      %v4472 = vld [vmem:[#allocation2 + $0x248] sm:$0xff]
      %v4473 = vld [vmem:[#allocation2 + $0x250] sm:$0xff]
      %v4474 = vld [vmem:[#allocation2 + $0x258] sm:$0xff]
      %v4475 = vld [vmem:[#allocation2 + $0x260] sm:$0xff]
      %v4476 = vld [vmem:[#allocation2 + $0x268] sm:$0xff]
      %v4477 = vld [vmem:[#allocation2 + $0x270] sm:$0xff]
      %v4478 = vld [vmem:[#allocation2 + $0x278] sm:$0xff]
      %v4479 = vld [vmem:[#allocation2 + $0x280] sm:$0xff]
      %v4480 = vld [vmem:[#allocation2 + $0x288] sm:$0xff]
      %v4481 = vld [vmem:[#allocation2 + $0x290] sm:$0xff]
      %v4482 = vld [vmem:[#allocation2 + $0x298] sm:$0xff]
      %v4483 = vld [vmem:[#allocation2 + $0x2a0] sm:$0xff]
      %v4484 = vld [vmem:[#allocation2 + $0x2a8] sm:$0xff]
      %v4485 = vld [vmem:[#allocation2 + $0x2b0] sm:$0xff]
      %v4486 = vld [vmem:[#allocation2 + $0x2b8] sm:$0xff]
      %v4487 = vld [vmem:[#allocation2 + $0x2c0] sm:$0xff]
      %v4488 = vld [vmem:[#allocation2 + $0x2c8] sm:$0xff]
      %v4489 = vld [vmem:[#allocation2 + $0x2d0] sm:$0xff]
      %v4490 = vld [vmem:[#allocation2 + $0x2d8] sm:$0xff]
      %v4491 = vld [vmem:[#allocation2 + $0x2e0] sm:$0xff]
      %v4492 = vld [vmem:[#allocation2 + $0x2e8] sm:$0xff]
      %v4493 = vld [vmem:[#allocation2 + $0x2f0] sm:$0xff]
      %v4494 = vld [vmem:[#allocation2 + $0x2f8] sm:$0xff]
      %v4495 = vld [vmem:[#allocation2 + $0x300] sm:$0xff]
      %v4496 = vld [vmem:[#allocation2 + $0x308] sm:$0xff]
      %v4497 = vld [vmem:[#allocation2 + $0x310] sm:$0xff]
      %v4498 = vld [vmem:[#allocation2 + $0x318] sm:$0xff]
      %v4499 = vld [vmem:[#allocation2 + $0x320] sm:$0xff]
      %v4500 = vld [vmem:[#allocation2 + $0x328] sm:$0xff]
      %v4501 = vld [vmem:[#allocation2 + $0x330] sm:$0xff]
      %v4502 = vld [vmem:[#allocation2 + $0x338] sm:$0xff]
      %v4503 = vld [vmem:[#allocation2 + $0x340] sm:$0xff]
      %v4504 = vld [vmem:[#allocation2 + $0x348] sm:$0xff]
      %v4505 = vld [vmem:[#allocation2 + $0x350] sm:$0xff]
      %v4506 = vld [vmem:[#allocation2 + $0x358] sm:$0xff]
      %v4507 = vld [vmem:[#allocation2 + $0x360] sm:$0xff]
      %v4508 = vld [vmem:[#allocation2 + $0x368] sm:$0xff]
      %v4509 = vld [vmem:[#allocation2 + $0x370] sm:$0xff]
      %v4510 = vld [vmem:[#allocation2 + $0x378] sm:$0xff]
      %v4511 = vld [vmem:[#allocation2 + $0x380] sm:$0xff]
      %v4512 = vld [vmem:[#allocation2 + $0x388] sm:$0xff]
      %v4513 = vld [vmem:[#allocation2 + $0x390] sm:$0xff]
      %v4514 = vld [vmem:[#allocation2 + $0x398] sm:$0xff]
      %v4515 = vld [vmem:[#allocation2 + $0x3a0] sm:$0xff]
      %v4516 = vld [vmem:[#allocation2 + $0x3a8] sm:$0xff]
      %v4517 = vld [vmem:[#allocation2 + $0x3b0] sm:$0xff]
      %v4518 = vld [vmem:[#allocation2 + $0x3b8] sm:$0xff]
      %v4519 = vld [vmem:[#allocation2 + $0x3c0] sm:$0xff]
      %v4520 = vld [vmem:[#allocation2 + $0x3c8] sm:$0xff]
      %v4521 = vld [vmem:[#allocation2 + $0x3d0] sm:$0xff]
      %v4522 = vld [vmem:[#allocation2 + $0x3d8] sm:$0xff]
      %v4523 = vld [vmem:[#allocation2 + $0x3e0] sm:$0xff]
      %v4524 = vld [vmem:[#allocation2 + $0x3e8] sm:$0xff]
      %v4525 = vld [vmem:[#allocation2 + $0x3f0] sm:$0xff]
      %v4526 = vld [vmem:[#allocation2 + $0x3f8] sm:$0xff]
      %v4527 = vld [vmem:[#allocation2 + $0x400] sm:$0xff]
      %v4528 = vld [vmem:[#allocation2 + $0x408] sm:$0xff]
      %v4529 = vld [vmem:[#allocation2 + $0x410] sm:$0xff]
      %v4530 = vld [vmem:[#allocation2 + $0x418] sm:$0xff]
      %v4531 = vld [vmem:[#allocation2 + $0x420] sm:$0xff]
      %v4532 = vld [vmem:[#allocation2 + $0x428] sm:$0xff]
      %v4533 = vld [vmem:[#allocation2 + $0x430] sm:$0xff]
      %v4534 = vld [vmem:[#allocation2 + $0x438] sm:$0xff]
      %v4535 = vld [vmem:[#allocation2 + $0x440] sm:$0xff]
      %v4536 = vld [vmem:[#allocation2 + $0x448] sm:$0xff]
      %v4537 = vld [vmem:[#allocation2 + $0x450] sm:$0xff]
      %v4538 = vld [vmem:[#allocation2 + $0x458] sm:$0xff]
      %v4539 = vld [vmem:[#allocation2 + $0x460] sm:$0xff]
      %v4540 = vld [vmem:[#allocation2 + $0x468] sm:$0xff]
      %v4541 = vld [vmem:[#allocation2 + $0x470] sm:$0xff]
      %v4542 = vld [vmem:[#allocation2 + $0x478] sm:$0xff]
      %v4543 = vld [vmem:[#allocation2 + $0x480] sm:$0xff]
      %v4544 = vld [vmem:[#allocation2 + $0x488] sm:$0xff]
      %v4545 = vld [vmem:[#allocation2 + $0x490] sm:$0xff]
      %v4546 = vld [vmem:[#allocation2 + $0x498] sm:$0xff]
      %v4547 = vld [vmem:[#allocation2 + $0x4a0] sm:$0xff]
      %v4548 = vld [vmem:[#allocation2 + $0x4a8] sm:$0xff]
      %v4549 = vld [vmem:[#allocation2 + $0x4b0] sm:$0xff]
      %v4550 = vld [vmem:[#allocation2 + $0x4b8] sm:$0xff]
      %v4551 = vld [vmem:[#allocation2 + $0x4c0] sm:$0xff]
      %v4552 = vld [vmem:[#allocation2 + $0x4c8] sm:$0xff]
      %v4553 = vld [vmem:[#allocation2 + $0x4d0] sm:$0xff]
      %v4554 = vld [vmem:[#allocation2 + $0x4d8] sm:$0xff]
      %v4555 = vld [vmem:[#allocation2 + $0x4e0] sm:$0xff]
      %v4556 = vld [vmem:[#allocation2 + $0x4e8] sm:$0xff]
      %v4557 = vld [vmem:[#allocation2 + $0x4f0] sm:$0xff]
      %v4558 = vld [vmem:[#allocation2 + $0x4f8] sm:$0xff]
      %v4559 = vld [vmem:[#allocation2 + $0x500] sm:$0xff]
      %v4560 = vld [vmem:[#allocation2 + $0x508] sm:$0xff]
      %v4561 = vld [vmem:[#allocation2 + $0x510] sm:$0xff]
      %v4562 = vld [vmem:[#allocation2 + $0x518] sm:$0xff]
      %v4563 = vld [vmem:[#allocation2 + $0x520] sm:$0xff]
      %v4564 = vld [vmem:[#allocation2 + $0x528] sm:$0xff]
      %v4565 = vld [vmem:[#allocation2 + $0x530] sm:$0xff]
      %v4566 = vld [vmem:[#allocation2 + $0x538] sm:$0xff]
      %v4567 = vld [vmem:[#allocation2 + $0x540] sm:$0xff]
      %v4568 = vld [vmem:[#allocation2 + $0x548] sm:$0xff]
      %v4569 = vld [vmem:[#allocation2 + $0x550] sm:$0xff]
      %v4570 = vld [vmem:[#allocation2 + $0x558] sm:$0xff]
      %v4571 = vld [vmem:[#allocation2 + $0x560] sm:$0xff]
      %v4572 = vld [vmem:[#allocation2 + $0x568] sm:$0xff]
      %v4573 = vld [vmem:[#allocation2 + $0x570] sm:$0xff]
      %v4574 = vld [vmem:[#allocation2 + $0x578] sm:$0xff]
      %v4575 = vld [vmem:[#allocation2 + $0x580] sm:$0xff]
      %v4576 = vld [vmem:[#allocation2 + $0x588] sm:$0xff]
      %v4577 = vld [vmem:[#allocation2 + $0x590] sm:$0xff]
      %v4578 = vld [vmem:[#allocation2 + $0x598] sm:$0xff]
      %v4579 = vld [vmem:[#allocation2 + $0x5a0] sm:$0xff]
      %v4580 = vld [vmem:[#allocation2 + $0x5a8] sm:$0xff]
      %v4581 = vld [vmem:[#allocation2 + $0x5b0] sm:$0xff]
      %v4582 = vld [vmem:[#allocation2 + $0x5b8] sm:$0xff]
      %v4583 = vld [vmem:[#allocation2 + $0x5c0] sm:$0xff]
      %v4584 = vld [vmem:[#allocation2 + $0x5c8] sm:$0xff]
      %v4585 = vld [vmem:[#allocation2 + $0x5d0] sm:$0xff]
      %v4586 = vld [vmem:[#allocation2 + $0x5d8] sm:$0xff]
      %v4587 = vld [vmem:[#allocation2 + $0x5e0] sm:$0xff]
      %v4588 = vld [vmem:[#allocation2 + $0x5e8] sm:$0xff]
      %v4589 = vld [vmem:[#allocation2 + $0x5f0] sm:$0xff]
      %v4590 = vld [vmem:[#allocation2 + $0x5f8] sm:$0xff]
      %v4591 = vld [vmem:[#allocation2 + $0x600] sm:$0xff]
      %v4592 = vld [vmem:[#allocation2 + $0x608] sm:$0xff]
      %v4593 = vld [vmem:[#allocation2 + $0x610] sm:$0xff]
      %v4594 = vld [vmem:[#allocation2 + $0x618] sm:$0xff]
      %v4595 = vld [vmem:[#allocation2 + $0x620] sm:$0xff]
      %v4596 = vld [vmem:[#allocation2 + $0x628] sm:$0xff]
      %v4597 = vld [vmem:[#allocation2 + $0x630] sm:$0xff]
      %v4598 = vld [vmem:[#allocation2 + $0x638] sm:$0xff]
      %v4599 = vld [vmem:[#allocation2 + $0x640] sm:$0xff]
      %v4600 = vld [vmem:[#allocation2 + $0x648] sm:$0xff]
      %v4601 = vld [vmem:[#allocation2 + $0x650] sm:$0xff]
      %v4602 = vld [vmem:[#allocation2 + $0x658] sm:$0xff]
      %v4603 = vld [vmem:[#allocation2 + $0x660] sm:$0xff]
      %v4604 = vld [vmem:[#allocation2 + $0x668] sm:$0xff]
      %v4605 = vld [vmem:[#allocation2 + $0x670] sm:$0xff]
      %v4606 = vld [vmem:[#allocation2 + $0x678] sm:$0xff]
      %v4607 = vld [vmem:[#allocation2 + $0x680] sm:$0xff]
      %v4608 = vld [vmem:[#allocation2 + $0x688] sm:$0xff]
      %v4609 = vld [vmem:[#allocation2 + $0x690] sm:$0xff]
      %v4610 = vld [vmem:[#allocation2 + $0x698] sm:$0xff]
      %v4611 = vld [vmem:[#allocation2 + $0x6a0] sm:$0xff]
      %v4612 = vld [vmem:[#allocation2 + $0x6a8] sm:$0xff]
      %v4613 = vld [vmem:[#allocation2 + $0x6b0] sm:$0xff]
      %v4614 = vld [vmem:[#allocation2 + $0x6b8] sm:$0xff]
      %v4615 = vld [vmem:[#allocation2 + $0x6c0] sm:$0xff]
      %v4616 = vld [vmem:[#allocation2 + $0x6c8] sm:$0xff]
      %v4617 = vld [vmem:[#allocation2 + $0x6d0] sm:$0xff]
      %v4618 = vld [vmem:[#allocation2 + $0x6d8] sm:$0xff]
      %v4619 = vld [vmem:[#allocation2 + $0x6e0] sm:$0xff]
      %v4620 = vld [vmem:[#allocation2 + $0x6e8] sm:$0xff]
      %v4621 = vld [vmem:[#allocation2 + $0x6f0] sm:$0xff]
      %v4622 = vld [vmem:[#allocation2 + $0x6f8] sm:$0xff]
      %v4623 = vld [vmem:[#allocation2 + $0x700] sm:$0xff]
      %v4624 = vld [vmem:[#allocation2 + $0x708] sm:$0xff]
      %v4625 = vld [vmem:[#allocation2 + $0x710] sm:$0xff]
      %v4626 = vld [vmem:[#allocation2 + $0x718] sm:$0xff]
      %v4627 = vld [vmem:[#allocation2 + $0x720] sm:$0xff]
      %v4628 = vld [vmem:[#allocation2 + $0x728] sm:$0xff]
      %v4629 = vld [vmem:[#allocation2 + $0x730] sm:$0xff]
      %v4630 = vld [vmem:[#allocation2 + $0x738] sm:$0xff]
      %v4631 = vld [vmem:[#allocation2 + $0x740] sm:$0xff]
      %v4632 = vld [vmem:[#allocation2 + $0x748] sm:$0xff]
      %v4633 = vld [vmem:[#allocation2 + $0x750] sm:$0xff]
      %v4634 = vld [vmem:[#allocation2 + $0x758] sm:$0xff]
      %v4635 = vld [vmem:[#allocation2 + $0x760] sm:$0xff]
      %v4636 = vld [vmem:[#allocation2 + $0x768] sm:$0xff]
      %v4637 = vld [vmem:[#allocation2 + $0x770] sm:$0xff]
      %v4638 = vld [vmem:[#allocation2 + $0x778] sm:$0xff]
      %v4639 = vld [vmem:[#allocation2 + $0x780] sm:$0xff]
      %v4640 = vld [vmem:[#allocation2 + $0x788] sm:$0xff]
      %v4641 = vld [vmem:[#allocation2 + $0x790] sm:$0xff]
      %v4642 = vld [vmem:[#allocation2 + $0x798] sm:$0xff]
      %v4643 = vld [vmem:[#allocation2 + $0x7a0] sm:$0xff]
      %v4644 = vld [vmem:[#allocation2 + $0x7a8] sm:$0xff]
      %v4645 = vld [vmem:[#allocation2 + $0x7b0] sm:$0xff]
      %v4646 = vld [vmem:[#allocation2 + $0x7b8] sm:$0xff]
      %v4647 = vld [vmem:[#allocation2 + $0x7c0] sm:$0xff]
      %v4648 = vld [vmem:[#allocation2 + $0x7c8] sm:$0xff]
      %v4649 = vld [vmem:[#allocation2 + $0x7d0] sm:$0xff]
      %v4650 = vld [vmem:[#allocation2 + $0x7d8] sm:$0xff]
      %v4651 = vld [vmem:[#allocation2 + $0x7e0] sm:$0xff]
      %v4652 = vld [vmem:[#allocation2 + $0x7e8] sm:$0xff]
      %v4653 = vld [vmem:[#allocation2 + $0x7f0] sm:$0xff]
      %v4654 = vld [vmem:[#allocation2 + $0x7f8] sm:$0xff]
      %v4655 = vld [vmem:[#allocation2 + $0x800] sm:$0xff]
      %v4656 = vld [vmem:[#allocation2 + $0x808] sm:$0xff]
      %v4657 = vld [vmem:[#allocation2 + $0x810] sm:$0xff]
      %v4658 = vld [vmem:[#allocation2 + $0x818] sm:$0xff]
      %v4659 = vld [vmem:[#allocation2 + $0x820] sm:$0xff]
      %v4660 = vld [vmem:[#allocation2 + $0x828] sm:$0xff]
      %v4661 = vld [vmem:[#allocation2 + $0x830] sm:$0xff]
      %v4662 = vld [vmem:[#allocation2 + $0x838] sm:$0xff]
      %v4663 = vld [vmem:[#allocation2 + $0x840] sm:$0xff]
      %v4664 = vld [vmem:[#allocation2 + $0x848] sm:$0xff]
      %v4665 = vld [vmem:[#allocation2 + $0x850] sm:$0xff]
      %v4666 = vld [vmem:[#allocation2 + $0x858] sm:$0xff]
      %v4667 = vld [vmem:[#allocation2 + $0x860] sm:$0xff]
      %v4668 = vld [vmem:[#allocation2 + $0x868] sm:$0xff]
      %v4669 = vld [vmem:[#allocation2 + $0x870] sm:$0xff]
      %v4670 = vld [vmem:[#allocation2 + $0x878] sm:$0xff]
      %v4671 = vld [vmem:[#allocation2 + $0x880] sm:$0xff]
      %v4672 = vld [vmem:[#allocation2 + $0x888] sm:$0xff]
      %v4673 = vld [vmem:[#allocation2 + $0x890] sm:$0xff]
      %v4674 = vld [vmem:[#allocation2 + $0x898] sm:$0xff]
      %v4675 = vld [vmem:[#allocation2 + $0x8a0] sm:$0xff]
      %v4676 = vld [vmem:[#allocation2 + $0x8a8] sm:$0xff]
      %v4677 = vld [vmem:[#allocation2 + $0x8b0] sm:$0xff]
      %v4678 = vld [vmem:[#allocation2 + $0x8b8] sm:$0xff]
      %v4679 = vld [vmem:[#allocation2 + $0x8c0] sm:$0xff]
      %v4680 = vld [vmem:[#allocation2 + $0x8c8] sm:$0xff]
      %v4681 = vld [vmem:[#allocation2 + $0x8d0] sm:$0xff]
      %v4682 = vld [vmem:[#allocation2 + $0x8d8] sm:$0xff]
      %v4683 = vld [vmem:[#allocation2 + $0x8e0] sm:$0xff]
      %v4684 = vld [vmem:[#allocation2 + $0x8e8] sm:$0xff]
      %v4685 = vld [vmem:[#allocation2 + $0x8f0] sm:$0xff]
      %v4686 = vld [vmem:[#allocation2 + $0x8f8] sm:$0xff]
      %v4687 = vld [vmem:[#allocation2 + $0x900] sm:$0xff]
      %v4688 = vld [vmem:[#allocation2 + $0x908] sm:$0xff]
      %v4689 = vld [vmem:[#allocation2 + $0x910] sm:$0xff]
      %v4690 = vld [vmem:[#allocation2 + $0x918] sm:$0xff]
      %v4691 = vld [vmem:[#allocation2 + $0x920] sm:$0xff]
      %v4692 = vld [vmem:[#allocation2 + $0x928] sm:$0xff]
      %v4693 = vld [vmem:[#allocation2 + $0x930] sm:$0xff]
      %v4694 = vld [vmem:[#allocation2 + $0x938] sm:$0xff]
      %v4695 = vld [vmem:[#allocation2 + $0x940] sm:$0xff]
      %v4696 = vld [vmem:[#allocation2 + $0x948] sm:$0xff]
      %v4697 = vld [vmem:[#allocation2 + $0x950] sm:$0xff]
      %v4698 = vld [vmem:[#allocation2 + $0x958] sm:$0xff]
      %v4699 = vld [vmem:[#allocation2 + $0x960] sm:$0xff]
      %v4700 = vld [vmem:[#allocation2 + $0x968] sm:$0xff]
      %v4701 = vld [vmem:[#allocation2 + $0x970] sm:$0xff]
      %v4702 = vld [vmem:[#allocation2 + $0x978] sm:$0xff]
      %v4703 = vld [vmem:[#allocation2 + $0x980] sm:$0xff]
      %v4704 = vld [vmem:[#allocation2 + $0x988] sm:$0xff]
      %v4705 = vld [vmem:[#allocation2 + $0x990] sm:$0xff]
      %v4706 = vld [vmem:[#allocation2 + $0x998] sm:$0xff]
      %v4707 = vld [vmem:[#allocation2 + $0x9a0] sm:$0xff]
      %v4708 = vld [vmem:[#allocation2 + $0x9a8] sm:$0xff]
      %v4709 = vld [vmem:[#allocation2 + $0x9b0] sm:$0xff]
      %v4710 = vld [vmem:[#allocation2 + $0x9b8] sm:$0xff]
      %v4711 = vld [vmem:[#allocation2 + $0x9c0] sm:$0xff]
      %v4712 = vld [vmem:[#allocation2 + $0x9c8] sm:$0xff]
      %v4713 = vld [vmem:[#allocation2 + $0x9d0] sm:$0xff]
      %v4714 = vld [vmem:[#allocation2 + $0x9d8] sm:$0xff]
      %v4715 = vld [vmem:[#allocation2 + $0x9e0] sm:$0xff]
      %v4716 = vld [vmem:[#allocation2 + $0x9e8] sm:$0xff]
      %v4717 = vld [vmem:[#allocation2 + $0x9f0] sm:$0xff]
      %v4718 = vld [vmem:[#allocation2 + $0x9f8] sm:$0xff]
      %v4719 = vld [vmem:[#allocation2 + $0xa00] sm:$0xff]
      %v4720 = vld [vmem:[#allocation2 + $0xa08] sm:$0xff]
      %v4721 = vld [vmem:[#allocation2 + $0xa10] sm:$0xff]
      %v4722 = vld [vmem:[#allocation2 + $0xa18] sm:$0xff]
      %v4723 = vld [vmem:[#allocation2 + $0xa20] sm:$0xff]
      %v4724 = vld [vmem:[#allocation2 + $0xa28] sm:$0xff]
      %v4725 = vld [vmem:[#allocation2 + $0xa30] sm:$0xff]
      %v4726 = vld [vmem:[#allocation2 + $0xa38] sm:$0xff]
      %v4727 = vld [vmem:[#allocation2 + $0xa40] sm:$0xff]
      %v4728 = vld [vmem:[#allocation2 + $0xa48] sm:$0xff]
      %v4729 = vld [vmem:[#allocation2 + $0xa50] sm:$0xff]
      %v4730 = vld [vmem:[#allocation2 + $0xa58] sm:$0xff]
      %v4731 = vld [vmem:[#allocation2 + $0xa60] sm:$0xff]
      %v4732 = vld [vmem:[#allocation2 + $0xa68] sm:$0xff]
      %v4733 = vld [vmem:[#allocation2 + $0xa70] sm:$0xff]
      %v4734 = vld [vmem:[#allocation2 + $0xa78] sm:$0xff]
      %v4735 = vld [vmem:[#allocation2 + $0xa80] sm:$0xff]
      %v4736 = vld [vmem:[#allocation2 + $0xa88] sm:$0xff]
      %v4737 = vld [vmem:[#allocation2 + $0xa90] sm:$0xff]
      %v4738 = vld [vmem:[#allocation2 + $0xa98] sm:$0xff]
      %v4739 = vld [vmem:[#allocation2 + $0xaa0] sm:$0xff]
      %v4740 = vld [vmem:[#allocation2 + $0xaa8] sm:$0xff]
      %v4741 = vld [vmem:[#allocation2 + $0xab0] sm:$0xff]
      %v4742 = vld [vmem:[#allocation2 + $0xab8] sm:$0xff]
      %v4743 = vld [vmem:[#allocation2 + $0xac0] sm:$0xff]
      %v4744 = vld [vmem:[#allocation2 + $0xac8] sm:$0xff]
      %v4745 = vld [vmem:[#allocation2 + $0xad0] sm:$0xff]
      %v4746 = vld [vmem:[#allocation2 + $0xad8] sm:$0xff]
      %v4747 = vld [vmem:[#allocation2 + $0xae0] sm:$0xff]
      %v4748 = vld [vmem:[#allocation2 + $0xae8] sm:$0xff]
      %v4749 = vld [vmem:[#allocation2 + $0xaf0] sm:$0xff]
      %v4750 = vld [vmem:[#allocation2 + $0xaf8] sm:$0xff]
      %v4751 = vld [vmem:[#allocation2 + $0xb00] sm:$0xff]
      %v4752 = vld [vmem:[#allocation2 + $0xb08] sm:$0xff]
      %v4753 = vld [vmem:[#allocation2 + $0xb10] sm:$0xff]
      %v4754 = vld [vmem:[#allocation2 + $0xb18] sm:$0xff]
      %v4755 = vld [vmem:[#allocation2 + $0xb20] sm:$0xff]
      %v4756 = vld [vmem:[#allocation2 + $0xb28] sm:$0xff]
      %v4757 = vld [vmem:[#allocation2 + $0xb30] sm:$0xff]
      %v4758 = vld [vmem:[#allocation2 + $0xb38] sm:$0xff]
      %v4759 = vld [vmem:[#allocation2 + $0xb40] sm:$0xff]
      %v4760 = vld [vmem:[#allocation2 + $0xb48] sm:$0xff]
      %v4761 = vld [vmem:[#allocation2 + $0xb50] sm:$0xff]
      %v4762 = vld [vmem:[#allocation2 + $0xb58] sm:$0xff]
      %v4763 = vld [vmem:[#allocation2 + $0xb60] sm:$0xff]
      %v4764 = vld [vmem:[#allocation2 + $0xb68] sm:$0xff]
      %v4765 = vld [vmem:[#allocation2 + $0xb70] sm:$0xff]
      %v4766 = vld [vmem:[#allocation2 + $0xb78] sm:$0xff]
      %v4767 = vld [vmem:[#allocation2 + $0xb80] sm:$0xff]
      %v4768 = vld [vmem:[#allocation2 + $0xb88] sm:$0xff]
      %v4769 = vld [vmem:[#allocation2 + $0xb90] sm:$0xff]
      %v4770 = vld [vmem:[#allocation2 + $0xb98] sm:$0xff]
      %v4771 = vld [vmem:[#allocation2 + $0xba0] sm:$0xff]
      %v4772 = vld [vmem:[#allocation2 + $0xba8] sm:$0xff]
      %v4773 = vld [vmem:[#allocation2 + $0xbb0] sm:$0xff]
      %v4774 = vld [vmem:[#allocation2 + $0xbb8] sm:$0xff]
      %v4775 = vld [vmem:[#allocation2 + $0xbc0] sm:$0xff]
      %v4776 = vld [vmem:[#allocation2 + $0xbc8] sm:$0xff]
      %v4777 = vld [vmem:[#allocation2 + $0xbd0] sm:$0xff]
      %v4778 = vld [vmem:[#allocation2 + $0xbd8] sm:$0xff]
      %v4779 = vld [vmem:[#allocation2 + $0xbe0] sm:$0xff]
      %v4780 = vld [vmem:[#allocation2 + $0xbe8] sm:$0xff]
      %v4781 = vld [vmem:[#allocation2 + $0xbf0] sm:$0xff]
      %v4782 = vld [vmem:[#allocation2 + $0xbf8] sm:$0xff]
      %v4783 = vld [vmem:[#allocation8] sm:$0x3f]
      %v4785 = vperm.slane %v4783, 0
      %v4786 = vperm.slane %v4783, 1
      %v4787 = vperm.slane %v4783, 2
      %v4788 = vperm.slane %v4783, 3
      %v4789 = vperm.slane %v4783, 4
      %v4790 = vperm.slane %v4783, 5
      %v4797 = vadd.f32 %v4399, %v4785
      %v4798 = vadd.f32 %v4400, %v4786
      %v4799 = vadd.f32 %v4401, %v4787
      %v4800 = vadd.f32 %v4402, %v4788
      %v4801 = vadd.f32 %v4403, %v4789
      %v4802 = vadd.f32 %v4404, %v4790
      %v4803 = vadd.f32 %v4405, %v4785
      %v4804 = vadd.f32 %v4406, %v4786
      %v4805 = vadd.f32 %v4407, %v4787
      %v4806 = vadd.f32 %v4408, %v4788
      %v4807 = vadd.f32 %v4409, %v4789
      %v4808 = vadd.f32 %v4410, %v4790
      %v4809 = vadd.f32 %v4411, %v4785
      %v4810 = vadd.f32 %v4412, %v4786
      %v4811 = vadd.f32 %v4413, %v4787
      %v4812 = vadd.f32 %v4414, %v4788
      %v4813 = vadd.f32 %v4415, %v4789
      %v4814 = vadd.f32 %v4416, %v4790
      %v4815 = vadd.f32 %v4417, %v4785
      %v4816 = vadd.f32 %v4418, %v4786
      %v4817 = vadd.f32 %v4419, %v4787
      %v4818 = vadd.f32 %v4420, %v4788
      %v4819 = vadd.f32 %v4421, %v4789
      %v4820 = vadd.f32 %v4422, %v4790
      %v4821 = vadd.f32 %v4423, %v4785
      %v4822 = vadd.f32 %v4424, %v4786
      %v4823 = vadd.f32 %v4425, %v4787
      %v4824 = vadd.f32 %v4426, %v4788
      %v4825 = vadd.f32 %v4427, %v4789
      %v4826 = vadd.f32 %v4428, %v4790
      %v4827 = vadd.f32 %v4429, %v4785
      %v4828 = vadd.f32 %v4430, %v4786
      %v4829 = vadd.f32 %v4431, %v4787
      %v4830 = vadd.f32 %v4432, %v4788
      %v4831 = vadd.f32 %v4433, %v4789
      %v4832 = vadd.f32 %v4434, %v4790
      %v4833 = vadd.f32 %v4435, %v4785
      %v4834 = vadd.f32 %v4436, %v4786
      %v4835 = vadd.f32 %v4437, %v4787
      %v4836 = vadd.f32 %v4438, %v4788
      %v4837 = vadd.f32 %v4439, %v4789
      %v4838 = vadd.f32 %v4440, %v4790
      %v4839 = vadd.f32 %v4441, %v4785
      %v4840 = vadd.f32 %v4442, %v4786
      %v4841 = vadd.f32 %v4443, %v4787
      %v4842 = vadd.f32 %v4444, %v4788
      %v4843 = vadd.f32 %v4445, %v4789
      %v4844 = vadd.f32 %v4446, %v4790
      %v4845 = vadd.f32 %v4447, %v4785
      %v4846 = vadd.f32 %v4448, %v4786
      %v4847 = vadd.f32 %v4449, %v4787
      %v4848 = vadd.f32 %v4450, %v4788
      %v4849 = vadd.f32 %v4451, %v4789
      %v4850 = vadd.f32 %v4452, %v4790
      %v4851 = vadd.f32 %v4453, %v4785
      %v4852 = vadd.f32 %v4454, %v4786
      %v4853 = vadd.f32 %v4455, %v4787
      %v4854 = vadd.f32 %v4456, %v4788
      %v4855 = vadd.f32 %v4457, %v4789
      %v4856 = vadd.f32 %v4458, %v4790
      %v4857 = vadd.f32 %v4459, %v4785
      %v4858 = vadd.f32 %v4460, %v4786
      %v4859 = vadd.f32 %v4461, %v4787
      %v4860 = vadd.f32 %v4462, %v4788
      %v4861 = vadd.f32 %v4463, %v4789
      %v4862 = vadd.f32 %v4464, %v4790
      %v4863 = vadd.f32 %v4465, %v4785
      %v4864 = vadd.f32 %v4466, %v4786
      %v4865 = vadd.f32 %v4467, %v4787
      %v4866 = vadd.f32 %v4468, %v4788
      %v4867 = vadd.f32 %v4469, %v4789
      %v4868 = vadd.f32 %v4470, %v4790
      %v4869 = vadd.f32 %v4471, %v4785
      %v4870 = vadd.f32 %v4472, %v4786
      %v4871 = vadd.f32 %v4473, %v4787
      %v4872 = vadd.f32 %v4474, %v4788
      %v4873 = vadd.f32 %v4475, %v4789
      %v4874 = vadd.f32 %v4476, %v4790
      %v4875 = vadd.f32 %v4477, %v4785
      %v4876 = vadd.f32 %v4478, %v4786
      %v4877 = vadd.f32 %v4479, %v4787
      %v4878 = vadd.f32 %v4480, %v4788
      %v4879 = vadd.f32 %v4481, %v4789
      %v4880 = vadd.f32 %v4482, %v4790
      %v4881 = vadd.f32 %v4483, %v4785
      %v4882 = vadd.f32 %v4484, %v4786
      %v4883 = vadd.f32 %v4485, %v4787
      %v4884 = vadd.f32 %v4486, %v4788
      %v4885 = vadd.f32 %v4487, %v4789
      %v4886 = vadd.f32 %v4488, %v4790
      %v4887 = vadd.f32 %v4489, %v4785
      %v4888 = vadd.f32 %v4490, %v4786
      %v4889 = vadd.f32 %v4491, %v4787
      %v4890 = vadd.f32 %v4492, %v4788
      %v4891 = vadd.f32 %v4493, %v4789
      %v4892 = vadd.f32 %v4494, %v4790
      %v4893 = vadd.f32 %v4495, %v4785
      %v4894 = vadd.f32 %v4496, %v4786
      %v4895 = vadd.f32 %v4497, %v4787
      %v4896 = vadd.f32 %v4498, %v4788
      %v4897 = vadd.f32 %v4499, %v4789
      %v4898 = vadd.f32 %v4500, %v4790
      %v4899 = vadd.f32 %v4501, %v4785
      %v4900 = vadd.f32 %v4502, %v4786
      %v4901 = vadd.f32 %v4503, %v4787
      %v4902 = vadd.f32 %v4504, %v4788
      %v4903 = vadd.f32 %v4505, %v4789
      %v4904 = vadd.f32 %v4506, %v4790
      %v4905 = vadd.f32 %v4507, %v4785
      %v4906 = vadd.f32 %v4508, %v4786
      %v4907 = vadd.f32 %v4509, %v4787
      %v4908 = vadd.f32 %v4510, %v4788
      %v4909 = vadd.f32 %v4511, %v4789
      %v4910 = vadd.f32 %v4512, %v4790
      %v4911 = vadd.f32 %v4513, %v4785
      %v4912 = vadd.f32 %v4514, %v4786
      %v4913 = vadd.f32 %v4515, %v4787
      %v4914 = vadd.f32 %v4516, %v4788
      %v4915 = vadd.f32 %v4517, %v4789
      %v4916 = vadd.f32 %v4518, %v4790
      %v4917 = vadd.f32 %v4519, %v4785
      %v4918 = vadd.f32 %v4520, %v4786
      %v4919 = vadd.f32 %v4521, %v4787
      %v4920 = vadd.f32 %v4522, %v4788
      %v4921 = vadd.f32 %v4523, %v4789
      %v4922 = vadd.f32 %v4524, %v4790
      %v4923 = vadd.f32 %v4525, %v4785
      %v4924 = vadd.f32 %v4526, %v4786
      %v4925 = vadd.f32 %v4527, %v4787
      %v4926 = vadd.f32 %v4528, %v4788
      %v4927 = vadd.f32 %v4529, %v4789
      %v4928 = vadd.f32 %v4530, %v4790
      %v4929 = vadd.f32 %v4531, %v4785
      %v4930 = vadd.f32 %v4532, %v4786
      %v4931 = vadd.f32 %v4533, %v4787
      %v4932 = vadd.f32 %v4534, %v4788
      %v4933 = vadd.f32 %v4535, %v4789
      %v4934 = vadd.f32 %v4536, %v4790
      %v4935 = vadd.f32 %v4537, %v4785
      %v4936 = vadd.f32 %v4538, %v4786
      %v4937 = vadd.f32 %v4539, %v4787
      %v4938 = vadd.f32 %v4540, %v4788
      %v4939 = vadd.f32 %v4541, %v4789
      %v4940 = vadd.f32 %v4542, %v4790
      %v4941 = vadd.f32 %v4543, %v4785
      %v4942 = vadd.f32 %v4544, %v4786
      %v4943 = vadd.f32 %v4545, %v4787
      %v4944 = vadd.f32 %v4546, %v4788
      %v4945 = vadd.f32 %v4547, %v4789
      %v4946 = vadd.f32 %v4548, %v4790
      %v4947 = vadd.f32 %v4549, %v4785
      %v4948 = vadd.f32 %v4550, %v4786
      %v4949 = vadd.f32 %v4551, %v4787
      %v4950 = vadd.f32 %v4552, %v4788
      %v4951 = vadd.f32 %v4553, %v4789
      %v4952 = vadd.f32 %v4554, %v4790
      %v4953 = vadd.f32 %v4555, %v4785
      %v4954 = vadd.f32 %v4556, %v4786
      %v4955 = vadd.f32 %v4557, %v4787
      %v4956 = vadd.f32 %v4558, %v4788
      %v4957 = vadd.f32 %v4559, %v4789
      %v4958 = vadd.f32 %v4560, %v4790
      %v4959 = vadd.f32 %v4561, %v4785
      %v4960 = vadd.f32 %v4562, %v4786
      %v4961 = vadd.f32 %v4563, %v4787
      %v4962 = vadd.f32 %v4564, %v4788
      %v4963 = vadd.f32 %v4565, %v4789
      %v4964 = vadd.f32 %v4566, %v4790
      %v4965 = vadd.f32 %v4567, %v4785
      %v4966 = vadd.f32 %v4568, %v4786
      %v4967 = vadd.f32 %v4569, %v4787
      %v4968 = vadd.f32 %v4570, %v4788
      %v4969 = vadd.f32 %v4571, %v4789
      %v4970 = vadd.f32 %v4572, %v4790
      %v4971 = vadd.f32 %v4573, %v4785
      %v4972 = vadd.f32 %v4574, %v4786
      %v4973 = vadd.f32 %v4575, %v4787
      %v4974 = vadd.f32 %v4576, %v4788
      %v4975 = vadd.f32 %v4577, %v4789
      %v4976 = vadd.f32 %v4578, %v4790
      %v4977 = vadd.f32 %v4579, %v4785
      %v4978 = vadd.f32 %v4580, %v4786
      %v4979 = vadd.f32 %v4581, %v4787
      %v4980 = vadd.f32 %v4582, %v4788
      %v4981 = vadd.f32 %v4583, %v4789
      %v4982 = vadd.f32 %v4584, %v4790
      %v4983 = vadd.f32 %v4585, %v4785
      %v4984 = vadd.f32 %v4586, %v4786
      %v4985 = vadd.f32 %v4587, %v4787
      %v4986 = vadd.f32 %v4588, %v4788
      %v4987 = vadd.f32 %v4589, %v4789
      %v4988 = vadd.f32 %v4590, %v4790
      %v4989 = vadd.f32 %v4591, %v4785
      %v4990 = vadd.f32 %v4592, %v4786
      %v4991 = vadd.f32 %v4593, %v4787
      %v4992 = vadd.f32 %v4594, %v4788
      %v4993 = vadd.f32 %v4595, %v4789
      %v4994 = vadd.f32 %v4596, %v4790
      %v4995 = vadd.f32 %v4597, %v4785
      %v4996 = vadd.f32 %v4598, %v4786
      %v4997 = vadd.f32 %v4599, %v4787
      %v4998 = vadd.f32 %v4600, %v4788
      %v4999 = vadd.f32 %v4601, %v4789
      %v5000 = vadd.f32 %v4602, %v4790
      %v5001 = vadd.f32 %v4603, %v4785
      %v5002 = vadd.f32 %v4604, %v4786
      %v5003 = vadd.f32 %v4605, %v4787
      %v5004 = vadd.f32 %v4606, %v4788
      %v5005 = vadd.f32 %v4607, %v4789
      %v5006 = vadd.f32 %v4608, %v4790
      %v5007 = vadd.f32 %v4609, %v4785
      %v5008 = vadd.f32 %v4610, %v4786
      %v5009 = vadd.f32 %v4611, %v4787
      %v5010 = vadd.f32 %v4612, %v4788
      %v5011 = vadd.f32 %v4613, %v4789
      %v5012 = vadd.f32 %v4614, %v4790
      %v5013 = vadd.f32 %v4615, %v4785
      %v5014 = vadd.f32 %v4616, %v4786
      %v5015 = vadd.f32 %v4617, %v4787
      %v5016 = vadd.f32 %v4618, %v4788
      %v5017 = vadd.f32 %v4619, %v4789
      %v5018 = vadd.f32 %v4620, %v4790
      %v5019 = vadd.f32 %v4621, %v4785
      %v5020 = vadd.f32 %v4622, %v4786
      %v5021 = vadd.f32 %v4623, %v4787
      %v5022 = vadd.f32 %v4624, %v4788
      %v5023 = vadd.f32 %v4625, %v4789
      %v5024 = vadd.f32 %v4626, %v4790
      %v5025 = vadd.f32 %v4627, %v4785
      %v5026 = vadd.f32 %v4628, %v4786
      %v5027 = vadd.f32 %v4629, %v4787
      %v5028 = vadd.f32 %v4630, %v4788
      %v5029 = vadd.f32 %v4631, %v4789
      %v5030 = vadd.f32 %v4632, %v4790
      %v5031 = vadd.f32 %v4633, %v4785
      %v5032 = vadd.f32 %v4634, %v4786
      %v5033 = vadd.f32 %v4635, %v4787
      %v5034 = vadd.f32 %v4636, %v4788
      %v5035 = vadd.f32 %v4637, %v4789
      %v5036 = vadd.f32 %v4638, %v4790
      %v5037 = vadd.f32 %v4639, %v4785
      %v5038 = vadd.f32 %v4640, %v4786
      %v5039 = vadd.f32 %v4641, %v4787
      %v5040 = vadd.f32 %v4642, %v4788
      %v5041 = vadd.f32 %v4643, %v4789
      %v5042 = vadd.f32 %v4644, %v4790
      %v5043 = vadd.f32 %v4645, %v4785
      %v5044 = vadd.f32 %v4646, %v4786
      %v5045 = vadd.f32 %v4647, %v4787
      %v5046 = vadd.f32 %v4648, %v4788
      %v5047 = vadd.f32 %v4649, %v4789
      %v5048 = vadd.f32 %v4650, %v4790
      %v5049 = vadd.f32 %v4651, %v4785
      %v5050 = vadd.f32 %v4652, %v4786
      %v5051 = vadd.f32 %v4653, %v4787
      %v5052 = vadd.f32 %v4654, %v4788
      %v5053 = vadd.f32 %v4655, %v4789
      %v5054 = vadd.f32 %v4656, %v4790
      %v5055 = vadd.f32 %v4657, %v4785
      %v5056 = vadd.f32 %v4658, %v4786
      %v5057 = vadd.f32 %v4659, %v4787
      %v5058 = vadd.f32 %v4660, %v4788
      %v5059 = vadd.f32 %v4661, %v4789
      %v5060 = vadd.f32 %v4662, %v4790
      %v5061 = vadd.f32 %v4663, %v4785
      %v5062 = vadd.f32 %v4664, %v4786
      %v5063 = vadd.f32 %v4665, %v4787
      %v5064 = vadd.f32 %v4666, %v4788
      %v5065 = vadd.f32 %v4667, %v4789
      %v5066 = vadd.f32 %v4668, %v4790
      %v5067 = vadd.f32 %v4669, %v4785
      %v5068 = vadd.f32 %v4670, %v4786
      %v5069 = vadd.f32 %v4671, %v4787
      %v5070 = vadd.f32 %v4672, %v4788
      %v5071 = vadd.f32 %v4673, %v4789
      %v5072 = vadd.f32 %v4674, %v4790
      %v5073 = vadd.f32 %v4675, %v4785
      %v5074 = vadd.f32 %v4676, %v4786
      %v5075 = vadd.f32 %v4677, %v4787
      %v5076 = vadd.f32 %v4678, %v4788
      %v5077 = vadd.f32 %v4679, %v4789
      %v5078 = vadd.f32 %v4680, %v4790
      %v5079 = vadd.f32 %v4681, %v4785
      %v5080 = vadd.f32 %v4682, %v4786
      %v5081 = vadd.f32 %v4683, %v4787
      %v5082 = vadd.f32 %v4684, %v4788
      %v5083 = vadd.f32 %v4685, %v4789
      %v5084 = vadd.f32 %v4686, %v4790
      %v5085 = vadd.f32 %v4687, %v4785
      %v5086 = vadd.f32 %v4688, %v4786
      %v5087 = vadd.f32 %v4689, %v4787
      %v5088 = vadd.f32 %v4690, %v4788
      %v5089 = vadd.f32 %v4691, %v4789
      %v5090 = vadd.f32 %v4692, %v4790
      %v5091 = vadd.f32 %v4693, %v4785
      %v5092 = vadd.f32 %v4694, %v4786
      %v5093 = vadd.f32 %v4695, %v4787
      %v5094 = vadd.f32 %v4696, %v4788
      %v5095 = vadd.f32 %v4697, %v4789
      %v5096 = vadd.f32 %v4698, %v4790
      %v5097 = vadd.f32 %v4699, %v4785
      %v5098 = vadd.f32 %v4700, %v4786
      %v5099 = vadd.f32 %v4701, %v4787
      %v5100 = vadd.f32 %v4702, %v4788
      %v5101 = vadd.f32 %v4703, %v4789
      %v5102 = vadd.f32 %v4704, %v4790
      %v5103 = vadd.f32 %v4705, %v4785
      %v5104 = vadd.f32 %v4706, %v4786
      %v5105 = vadd.f32 %v4707, %v4787
      %v5106 = vadd.f32 %v4708, %v4788
      %v5107 = vadd.f32 %v4709, %v4789
      %v5108 = vadd.f32 %v4710, %v4790
      %v5109 = vadd.f32 %v4711, %v4785
      %v5110 = vadd.f32 %v4712, %v4786
      %v5111 = vadd.f32 %v4713, %v4787
      %v5112 = vadd.f32 %v4714, %v4788
      %v5113 = vadd.f32 %v4715, %v4789
      %v5114 = vadd.f32 %v4716, %v4790
      %v5115 = vadd.f32 %v4717, %v4785
      %v5116 = vadd.f32 %v4718, %v4786
      %v5117 = vadd.f32 %v4719, %v4787
      %v5118 = vadd.f32 %v4720, %v4788
      %v5119 = vadd.f32 %v4721, %v4789
      %v5120 = vadd.f32 %v4722, %v4790
      %v5121 = vadd.f32 %v4723, %v4785
      %v5122 = vadd.f32 %v4724, %v4786
      %v5123 = vadd.f32 %v4725, %v4787
      %v5124 = vadd.f32 %v4726, %v4788
      %v5125 = vadd.f32 %v4727, %v4789
      %v5126 = vadd.f32 %v4728, %v4790
      %v5127 = vadd.f32 %v4729, %v4785
      %v5128 = vadd.f32 %v4730, %v4786
      %v5129 = vadd.f32 %v4731, %v4787
      %v5130 = vadd.f32 %v4732, %v4788
      %v5131 = vadd.f32 %v4733, %v4789
      %v5132 = vadd.f32 %v4734, %v4790
      %v5133 = vadd.f32 %v4735, %v4785
      %v5134 = vadd.f32 %v4736, %v4786
      %v5135 = vadd.f32 %v4737, %v4787
      %v5136 = vadd.f32 %v4738, %v4788
      %v5137 = vadd.f32 %v4739, %v4789
      %v5138 = vadd.f32 %v4740, %v4790
      %v5139 = vadd.f32 %v4741, %v4785
      %v5140 = vadd.f32 %v4742, %v4786
      %v5141 = vadd.f32 %v4743, %v4787
      %v5142 = vadd.f32 %v4744, %v4788
      %v5143 = vadd.f32 %v4745, %v4789
      %v5144 = vadd.f32 %v4746, %v4790
      %v5145 = vadd.f32 %v4747, %v4785
      %v5146 = vadd.f32 %v4748, %v4786
      %v5147 = vadd.f32 %v4749, %v4787
      %v5148 = vadd.f32 %v4750, %v4788
      %v5149 = vadd.f32 %v4751, %v4789
      %v5150 = vadd.f32 %v4752, %v4790
      %v5151 = vadd.f32 %v4753, %v4785
      %v5152 = vadd.f32 %v4754, %v4786
      %v5153 = vadd.f32 %v4755, %v4787
      %v5154 = vadd.f32 %v4756, %v4788
      %v5155 = vadd.f32 %v4757, %v4789
      %v5156 = vadd.f32 %v4758, %v4790
      %v5157 = vadd.f32 %v4759, %v4785
      %v5158 = vadd.f32 %v4760, %v4786
      %v5159 = vadd.f32 %v4761, %v4787
      %v5160 = vadd.f32 %v4762, %v4788
      %v5161 = vadd.f32 %v4763, %v4789
      %v5162 = vadd.f32 %v4764, %v4790
      %v5163 = vadd.f32 %v4765, %v4785
      %v5164 = vadd.f32 %v4766, %v4786
      %v5165 = vadd.f32 %v4767, %v4787
      %v5166 = vadd.f32 %v4768, %v4788
      %v5167 = vadd.f32 %v4769, %v4789
      %v5168 = vadd.f32 %v4770, %v4790
      %v5169 = vadd.f32 %v4771, %v4785
      %v5170 = vadd.f32 %v4772, %v4786
      %v5171 = vadd.f32 %v4773, %v4787
      %v5172 = vadd.f32 %v4774, %v4788
      %v5173 = vadd.f32 %v4775, %v4789
      %v5174 = vadd.f32 %v4776, %v4790
      %v5175 = vadd.f32 %v4777, %v4785
      %v5176 = vadd.f32 %v4778, %v4786
      %v5177 = vadd.f32 %v4779, %v4787
      %v5178 = vadd.f32 %v4780, %v4788
      %v5179 = vadd.f32 %v4781, %v4789
      %v5180 = vadd.f32 %v4782, %v4790
      %v5181 = vpack.c.bf16 %v4798, %v4797
      %v5182 = vpack.c.bf16 %v4800, %v4799
      %v5183 = vpack.c.bf16 %v4802, %v4801
      %v5184 = vpack.c.bf16 %v4804, %v4803
      %v5185 = vpack.c.bf16 %v4806, %v4805
      %v5186 = vpack.c.bf16 %v4808, %v4807
      %v5187 = vpack.c.bf16 %v4810, %v4809
      %v5188 = vpack.c.bf16 %v4812, %v4811
      %v5189 = vpack.c.bf16 %v4814, %v4813
      %v5190 = vpack.c.bf16 %v4816, %v4815
      %v5191 = vpack.c.bf16 %v4818, %v4817
      %v5192 = vpack.c.bf16 %v4820, %v4819
      %v5193 = vpack.c.bf16 %v4822, %v4821
      %v5194 = vpack.c.bf16 %v4824, %v4823
      %v5195 = vpack.c.bf16 %v4826, %v4825
      %v5196 = vpack.c.bf16 %v4828, %v4827
      %v5197 = vpack.c.bf16 %v4830, %v4829
      %v5198 = vpack.c.bf16 %v4832, %v4831
      %v5199 = vpack.c.bf16 %v4834, %v4833
      %v5200 = vpack.c.bf16 %v4836, %v4835
      %v5201 = vpack.c.bf16 %v4838, %v4837
      %v5202 = vpack.c.bf16 %v4840, %v4839
      %v5203 = vpack.c.bf16 %v4842, %v4841
      %v5204 = vpack.c.bf16 %v4844, %v4843
      %v5205 = vpack.c.bf16 %v4846, %v4845
      %v5206 = vpack.c.bf16 %v4848, %v4847
      %v5207 = vpack.c.bf16 %v4850, %v4849
      %v5208 = vpack.c.bf16 %v4852, %v4851
      %v5209 = vpack.c.bf16 %v4854, %v4853
      %v5210 = vpack.c.bf16 %v4856, %v4855
      %v5211 = vpack.c.bf16 %v4858, %v4857
      %v5212 = vpack.c.bf16 %v4860, %v4859
      %v5213 = vpack.c.bf16 %v4862, %v4861
      %v5214 = vpack.c.bf16 %v4864, %v4863
      %v5215 = vpack.c.bf16 %v4866, %v4865
      %v5216 = vpack.c.bf16 %v4868, %v4867
      %v5217 = vpack.c.bf16 %v4870, %v4869
      %v5218 = vpack.c.bf16 %v4872, %v4871
      %v5219 = vpack.c.bf16 %v4874, %v4873
      %v5220 = vpack.c.bf16 %v4876, %v4875
      %v5221 = vpack.c.bf16 %v4878, %v4877
      %v5222 = vpack.c.bf16 %v4880, %v4879
      %v5223 = vpack.c.bf16 %v4882, %v4881
      %v5224 = vpack.c.bf16 %v4884, %v4883
      %v5225 = vpack.c.bf16 %v4886, %v4885
      %v5226 = vpack.c.bf16 %v4888, %v4887
      %v5227 = vpack.c.bf16 %v4890, %v4889
      %v5228 = vpack.c.bf16 %v4892, %v4891
      %v5229 = vpack.c.bf16 %v4894, %v4893
      %v5230 = vpack.c.bf16 %v4896, %v4895
      %v5231 = vpack.c.bf16 %v4898, %v4897
      %v5232 = vpack.c.bf16 %v4900, %v4899
      %v5233 = vpack.c.bf16 %v4902, %v4901
      %v5234 = vpack.c.bf16 %v4904, %v4903
      %v5235 = vpack.c.bf16 %v4906, %v4905
      %v5236 = vpack.c.bf16 %v4908, %v4907
      %v5237 = vpack.c.bf16 %v4910, %v4909
      %v5238 = vpack.c.bf16 %v4912, %v4911
      %v5239 = vpack.c.bf16 %v4914, %v4913
      %v5240 = vpack.c.bf16 %v4916, %v4915
      %v5241 = vpack.c.bf16 %v4918, %v4917
      %v5242 = vpack.c.bf16 %v4920, %v4919
      %v5243 = vpack.c.bf16 %v4922, %v4921
      %v5244 = vpack.c.bf16 %v4924, %v4923
      %v5245 = vpack.c.bf16 %v4926, %v4925
      %v5246 = vpack.c.bf16 %v4928, %v4927
      %v5247 = vpack.c.bf16 %v4930, %v4929
      %v5248 = vpack.c.bf16 %v4932, %v4931
      %v5249 = vpack.c.bf16 %v4934, %v4933
      %v5250 = vpack.c.bf16 %v4936, %v4935
      %v5251 = vpack.c.bf16 %v4938, %v4937
      %v5252 = vpack.c.bf16 %v4940, %v4939
      %v5253 = vpack.c.bf16 %v4942, %v4941
      %v5254 = vpack.c.bf16 %v4944, %v4943
      %v5255 = vpack.c.bf16 %v4946, %v4945
      %v5256 = vpack.c.bf16 %v4948, %v4947
      %v5257 = vpack.c.bf16 %v4950, %v4949
      %v5258 = vpack.c.bf16 %v4952, %v4951
      %v5259 = vpack.c.bf16 %v4954, %v4953
      %v5260 = vpack.c.bf16 %v4956, %v4955
      %v5261 = vpack.c.bf16 %v4958, %v4957
      %v5262 = vpack.c.bf16 %v4960, %v4959
      %v5263 = vpack.c.bf16 %v4962, %v4961
      %v5264 = vpack.c.bf16 %v4964, %v4963
      %v5265 = vpack.c.bf16 %v4966, %v4965
      %v5266 = vpack.c.bf16 %v4968, %v4967
      %v5267 = vpack.c.bf16 %v4970, %v4969
      %v5268 = vpack.c.bf16 %v4972, %v4971
      %v5269 = vpack.c.bf16 %v4974, %v4973
      %v5270 = vpack.c.bf16 %v4976, %v4975
      %v5271 = vpack.c.bf16 %v4978, %v4977
      %v5272 = vpack.c.bf16 %v4980, %v4979
      %v5273 = vpack.c.bf16 %v4982, %v4981
      %v5274 = vpack.c.bf16 %v4984, %v4983
      %v5275 = vpack.c.bf16 %v4986, %v4985
      %v5276 = vpack.c.bf16 %v4988, %v4987
      %v5277 = vpack.c.bf16 %v4990, %v4989
      %v5278 = vpack.c.bf16 %v4992, %v4991
      %v5279 = vpack.c.bf16 %v4994, %v4993
      %v5280 = vpack.c.bf16 %v4996, %v4995
      %v5281 = vpack.c.bf16 %v4998, %v4997
      %v5282 = vpack.c.bf16 %v5000, %v4999
      %v5283 = vpack.c.bf16 %v5002, %v5001
      %v5284 = vpack.c.bf16 %v5004, %v5003
      %v5285 = vpack.c.bf16 %v5006, %v5005
      %v5286 = vpack.c.bf16 %v5008, %v5007
      %v5287 = vpack.c.bf16 %v5010, %v5009
      %v5288 = vpack.c.bf16 %v5012, %v5011
      %v5289 = vpack.c.bf16 %v5014, %v5013
      %v5290 = vpack.c.bf16 %v5016, %v5015
      %v5291 = vpack.c.bf16 %v5018, %v5017
      %v5292 = vpack.c.bf16 %v5020, %v5019
      %v5293 = vpack.c.bf16 %v5022, %v5021
      %v5294 = vpack.c.bf16 %v5024, %v5023
      %v5295 = vpack.c.bf16 %v5026, %v5025
      %v5296 = vpack.c.bf16 %v5028, %v5027
      %v5297 = vpack.c.bf16 %v5030, %v5029
      %v5298 = vpack.c.bf16 %v5032, %v5031
      %v5299 = vpack.c.bf16 %v5034, %v5033
      %v5300 = vpack.c.bf16 %v5036, %v5035
      %v5301 = vpack.c.bf16 %v5038, %v5037
      %v5302 = vpack.c.bf16 %v5040, %v5039
      %v5303 = vpack.c.bf16 %v5042, %v5041
      %v5304 = vpack.c.bf16 %v5044, %v5043
      %v5305 = vpack.c.bf16 %v5046, %v5045
      %v5306 = vpack.c.bf16 %v5048, %v5047
      %v5307 = vpack.c.bf16 %v5050, %v5049
      %v5308 = vpack.c.bf16 %v5052, %v5051
      %v5309 = vpack.c.bf16 %v5054, %v5053
      %v5310 = vpack.c.bf16 %v5056, %v5055
      %v5311 = vpack.c.bf16 %v5058, %v5057
      %v5312 = vpack.c.bf16 %v5060, %v5059
      %v5313 = vpack.c.bf16 %v5062, %v5061
      %v5314 = vpack.c.bf16 %v5064, %v5063
      %v5315 = vpack.c.bf16 %v5066, %v5065
      %v5316 = vpack.c.bf16 %v5068, %v5067
      %v5317 = vpack.c.bf16 %v5070, %v5069
      %v5318 = vpack.c.bf16 %v5072, %v5071
      %v5319 = vpack.c.bf16 %v5074, %v5073
      %v5320 = vpack.c.bf16 %v5076, %v5075
      %v5321 = vpack.c.bf16 %v5078, %v5077
      %v5322 = vpack.c.bf16 %v5080, %v5079
      %v5323 = vpack.c.bf16 %v5082, %v5081
      %v5324 = vpack.c.bf16 %v5084, %v5083
      %v5325 = vpack.c.bf16 %v5086, %v5085
      %v5326 = vpack.c.bf16 %v5088, %v5087
      %v5327 = vpack.c.bf16 %v5090, %v5089
      %v5328 = vpack.c.bf16 %v5092, %v5091
      %v5329 = vpack.c.bf16 %v5094, %v5093
      %v5330 = vpack.c.bf16 %v5096, %v5095
      %v5331 = vpack.c.bf16 %v5098, %v5097
      %v5332 = vpack.c.bf16 %v5100, %v5099
      %v5333 = vpack.c.bf16 %v5102, %v5101
      %v5334 = vpack.c.bf16 %v5104, %v5103
      %v5335 = vpack.c.bf16 %v5106, %v5105
      %v5336 = vpack.c.bf16 %v5108, %v5107
      %v5337 = vpack.c.bf16 %v5110, %v5109
      %v5338 = vpack.c.bf16 %v5112, %v5111
      %v5339 = vpack.c.bf16 %v5114, %v5113
      %v5340 = vpack.c.bf16 %v5116, %v5115
      %v5341 = vpack.c.bf16 %v5118, %v5117
      %v5342 = vpack.c.bf16 %v5120, %v5119
      %v5343 = vpack.c.bf16 %v5122, %v5121
      %v5344 = vpack.c.bf16 %v5124, %v5123
      %v5345 = vpack.c.bf16 %v5126, %v5125
      %v5346 = vpack.c.bf16 %v5128, %v5127
      %v5347 = vpack.c.bf16 %v5130, %v5129
      %v5348 = vpack.c.bf16 %v5132, %v5131
      %v5349 = vpack.c.bf16 %v5134, %v5133
      %v5350 = vpack.c.bf16 %v5136, %v5135
      %v5351 = vpack.c.bf16 %v5138, %v5137
      %v5352 = vpack.c.bf16 %v5140, %v5139
      %v5353 = vpack.c.bf16 %v5142, %v5141
      %v5354 = vpack.c.bf16 %v5144, %v5143
      %v5355 = vpack.c.bf16 %v5146, %v5145
      %v5356 = vpack.c.bf16 %v5148, %v5147
      %v5357 = vpack.c.bf16 %v5150, %v5149
      %v5358 = vpack.c.bf16 %v5152, %v5151
      %v5359 = vpack.c.bf16 %v5154, %v5153
      %v5360 = vpack.c.bf16 %v5156, %v5155
      %v5361 = vpack.c.bf16 %v5158, %v5157
      %v5362 = vpack.c.bf16 %v5160, %v5159
      %v5363 = vpack.c.bf16 %v5162, %v5161
      %v5364 = vpack.c.bf16 %v5164, %v5163
      %v5365 = vpack.c.bf16 %v5166, %v5165
      %v5366 = vpack.c.bf16 %v5168, %v5167
      %v5367 = vpack.c.bf16 %v5170, %v5169
      %v5368 = vpack.c.bf16 %v5172, %v5171
      %v5369 = vpack.c.bf16 %v5174, %v5173
      %v5370 = vpack.c.bf16 %v5176, %v5175
      %v5371 = vpack.c.bf16 %v5178, %v5177
      %v5372 = vpack.c.bf16 %v5180, %v5179
      %5373 = vst [vmem:[#allocation9] sm:$0xff] %v5181
      %5374 = vst [vmem:[#allocation9 + $0x8] sm:$0xff] %v5182
      %5375 = vst [vmem:[#allocation9 + $0x10] sm:$0xff] %v5183
      %5376 = vst [vmem:[#allocation9 + $0x18] sm:$0xff] %v5184
      %5377 = vst [vmem:[#allocation9 + $0x20] sm:$0xff] %v5185
      %5378 = vst [vmem:[#allocation9 + $0x28] sm:$0xff] %v5186
      %5379 = vst [vmem:[#allocation9 + $0x30] sm:$0xff] %v5187
      %5380 = vst [vmem:[#allocation9 + $0x38] sm:$0xff] %v5188
      %5381 = vst [vmem:[#allocation9 + $0x40] sm:$0xff] %v5189
      %5382 = vst [vmem:[#allocation9 + $0x48] sm:$0xff] %v5190
      %5383 = vst [vmem:[#allocation9 + $0x50] sm:$0xff] %v5191
      %5384 = vst [vmem:[#allocation9 + $0x58] sm:$0xff] %v5192
      %5385 = vst [vmem:[#allocation9 + $0x60] sm:$0xff] %v5193
      %5386 = vst [vmem:[#allocation9 + $0x68] sm:$0xff] %v5194
      %5387 = vst [vmem:[#allocation9 + $0x70] sm:$0xff] %v5195
      %5388 = vst [vmem:[#allocation9 + $0x78] sm:$0xff] %v5196
      %5389 = vst [vmem:[#allocation9 + $0x80] sm:$0xff] %v5197
      %5390 = vst [vmem:[#allocation9 + $0x88] sm:$0xff] %v5198
      %5391 = vst [vmem:[#allocation9 + $0x90] sm:$0xff] %v5199
      %5392 = vst [vmem:[#allocation9 + $0x98] sm:$0xff] %v5200
      %5393 = vst [vmem:[#allocation9 + $0xa0] sm:$0xff] %v5201
      %5394 = vst [vmem:[#allocation9 + $0xa8] sm:$0xff] %v5202
      %5395 = vst [vmem:[#allocation9 + $0xb0] sm:$0xff] %v5203
      %5396 = vst [vmem:[#allocation9 + $0xb8] sm:$0xff] %v5204
      %5397 = vst [vmem:[#allocation9 + $0xc0] sm:$0xff] %v5205
      %5398 = vst [vmem:[#allocation9 + $0xc8] sm:$0xff] %v5206
      %5399 = vst [vmem:[#allocation9 + $0xd0] sm:$0xff] %v5207
      %5400 = vst [vmem:[#allocation9 + $0xd8] sm:$0xff] %v5208
      %5401 = vst [vmem:[#allocation9 + $0xe0] sm:$0xff] %v5209
      %5402 = vst [vmem:[#allocation9 + $0xe8] sm:$0xff] %v5210
      %5403 = vst [vmem:[#allocation9 + $0xf0] sm:$0xff] %v5211
      %5404 = vst [vmem:[#allocation9 + $0xf8] sm:$0xff] %v5212
      %5405 = vst [vmem:[#allocation9 + $0x100] sm:$0xff] %v5213
      %5406 = vst [vmem:[#allocation9 + $0x108] sm:$0xff] %v5214
      %5407 = vst [vmem:[#allocation9 + $0x110] sm:$0xff] %v5215
      %5408 = vst [vmem:[#allocation9 + $0x118] sm:$0xff] %v5216
      %5409 = vst [vmem:[#allocation9 + $0x120] sm:$0xff] %v5217
      %5410 = vst [vmem:[#allocation9 + $0x128] sm:$0xff] %v5218
      %5411 = vst [vmem:[#allocation9 + $0x130] sm:$0xff] %v5219
      %5412 = vst [vmem:[#allocation9 + $0x138] sm:$0xff] %v5220
      %5413 = vst [vmem:[#allocation9 + $0x140] sm:$0xff] %v5221
      %5414 = vst [vmem:[#allocation9 + $0x148] sm:$0xff] %v5222
      %5415 = vst [vmem:[#allocation9 + $0x150] sm:$0xff] %v5223
      %5416 = vst [vmem:[#allocation9 + $0x158] sm:$0xff] %v5224
      %5417 = vst [vmem:[#allocation9 + $0x160] sm:$0xff] %v5225
      %5418 = vst [vmem:[#allocation9 + $0x168] sm:$0xff] %v5226
      %5419 = vst [vmem:[#allocation9 + $0x170] sm:$0xff] %v5227
      %5420 = vst [vmem:[#allocation9 + $0x178] sm:$0xff] %v5228
      %5421 = vst [vmem:[#allocation9 + $0x180] sm:$0xff] %v5229
      %5422 = vst [vmem:[#allocation9 + $0x188] sm:$0xff] %v5230
      %5423 = vst [vmem:[#allocation9 + $0x190] sm:$0xff] %v5231
      %5424 = vst [vmem:[#allocation9 + $0x198] sm:$0xff] %v5232
      %5425 = vst [vmem:[#allocation9 + $0x1a0] sm:$0xff] %v5233
      %5426 = vst [vmem:[#allocation9 + $0x1a8] sm:$0xff] %v5234
      %5427 = vst [vmem:[#allocation9 + $0x1b0] sm:$0xff] %v5235
      %5428 = vst [vmem:[#allocation9 + $0x1b8] sm:$0xff] %v5236
      %5429 = vst [vmem:[#allocation9 + $0x1c0] sm:$0xff] %v5237
      %5430 = vst [vmem:[#allocation9 + $0x1c8] sm:$0xff] %v5238
      %5431 = vst [vmem:[#allocation9 + $0x1d0] sm:$0xff] %v5239
      %5432 = vst [vmem:[#allocation9 + $0x1d8] sm:$0xff] %v5240
      %5433 = vst [vmem:[#allocation9 + $0x1e0] sm:$0xff] %v5241
      %5434 = vst [vmem:[#allocation9 + $0x1e8] sm:$0xff] %v5242
      %5435 = vst [vmem:[#allocation9 + $0x1f0] sm:$0xff] %v5243
      %5436 = vst [vmem:[#allocation9 + $0x1f8] sm:$0xff] %v5244
      %5437 = vst [vmem:[#allocation9 + $0x200] sm:$0xff] %v5245
      %5438 = vst [vmem:[#allocation9 + $0x208] sm:$0xff] %v5246
      %5439 = vst [vmem:[#allocation9 + $0x210] sm:$0xff] %v5247
      %5440 = vst [vmem:[#allocation9 + $0x218] sm:$0xff] %v5248
      %5441 = vst [vmem:[#allocation9 + $0x220] sm:$0xff] %v5249
      %5442 = vst [vmem:[#allocation9 + $0x228] sm:$0xff] %v5250
      %5443 = vst [vmem:[#allocation9 + $0x230] sm:$0xff] %v5251
      %5444 = vst [vmem:[#allocation9 + $0x238] sm:$0xff] %v5252
      %5445 = vst [vmem:[#allocation9 + $0x240] sm:$0xff] %v5253
      %5446 = vst [vmem:[#allocation9 + $0x248] sm:$0xff] %v5254
      %5447 = vst [vmem:[#allocation9 + $0x250] sm:$0xff] %v5255
      %5448 = vst [vmem:[#allocation9 + $0x258] sm:$0xff] %v5256
      %5449 = vst [vmem:[#allocation9 + $0x260] sm:$0xff] %v5257
      %5450 = vst [vmem:[#allocation9 + $0x268] sm:$0xff] %v5258
      %5451 = vst [vmem:[#allocation9 + $0x270] sm:$0xff] %v5259
      %5452 = vst [vmem:[#allocation9 + $0x278] sm:$0xff] %v5260
      %5453 = vst [vmem:[#allocation9 + $0x280] sm:$0xff] %v5261
      %5454 = vst [vmem:[#allocation9 + $0x288] sm:$0xff] %v5262
      %5455 = vst [vmem:[#allocation9 + $0x290] sm:$0xff] %v5263
      %5456 = vst [vmem:[#allocation9 + $0x298] sm:$0xff] %v5264
      %5457 = vst [vmem:[#allocation9 + $0x2a0] sm:$0xff] %v5265
      %5458 = vst [vmem:[#allocation9 + $0x2a8] sm:$0xff] %v5266
      %5459 = vst [vmem:[#allocation9 + $0x2b0] sm:$0xff] %v5267
      %5460 = vst [vmem:[#allocation9 + $0x2b8] sm:$0xff] %v5268
      %5461 = vst [vmem:[#allocation9 + $0x2c0] sm:$0xff] %v5269
      %5462 = vst [vmem:[#allocation9 + $0x2c8] sm:$0xff] %v5270
      %5463 = vst [vmem:[#allocation9 + $0x2d0] sm:$0xff] %v5271
      %5464 = vst [vmem:[#allocation9 + $0x2d8] sm:$0xff] %v5272
      %5465 = vst [vmem:[#allocation9 + $0x2e0] sm:$0xff] %v5273
      %5466 = vst [vmem:[#allocation9 + $0x2e8] sm:$0xff] %v5274
      %5467 = vst [vmem:[#allocation9 + $0x2f0] sm:$0xff] %v5275
      %5468 = vst [vmem:[#allocation9 + $0x2f8] sm:$0xff] %v5276
      %5469 = vst [vmem:[#allocation9 + $0x300] sm:$0xff] %v5277
      %5470 = vst [vmem:[#allocation9 + $0x308] sm:$0xff] %v5278
      %5471 = vst [vmem:[#allocation9 + $0x310] sm:$0xff] %v5279
      %5472 = vst [vmem:[#allocation9 + $0x318] sm:$0xff] %v5280
      %5473 = vst [vmem:[#allocation9 + $0x320] sm:$0xff] %v5281
      %5474 = vst [vmem:[#allocation9 + $0x328] sm:$0xff] %v5282
      %5475 = vst [vmem:[#allocation9 + $0x330] sm:$0xff] %v5283
      %5476 = vst [vmem:[#allocation9 + $0x338] sm:$0xff] %v5284
      %5477 = vst [vmem:[#allocation9 + $0x340] sm:$0xff] %v5285
      %5478 = vst [vmem:[#allocation9 + $0x348] sm:$0xff] %v5286
      %5479 = vst [vmem:[#allocation9 + $0x350] sm:$0xff] %v5287
      %5480 = vst [vmem:[#allocation9 + $0x358] sm:$0xff] %v5288
      %5481 = vst [vmem:[#allocation9 + $0x360] sm:$0xff] %v5289
      %5482 = vst [vmem:[#allocation9 + $0x368] sm:$0xff] %v5290
      %5483 = vst [vmem:[#allocation9 + $0x370] sm:$0xff] %v5291
      %5484 = vst [vmem:[#allocation9 + $0x378] sm:$0xff] %v5292
      %5485 = vst [vmem:[#allocation9 + $0x380] sm:$0xff] %v5293
      %5486 = vst [vmem:[#allocation9 + $0x388] sm:$0xff] %v5294
      %5487 = vst [vmem:[#allocation9 + $0x390] sm:$0xff] %v5295
      %5488 = vst [vmem:[#allocation9 + $0x398] sm:$0xff] %v5296
      %5489 = vst [vmem:[#allocation9 + $0x3a0] sm:$0xff] %v5297
      %5490 = vst [vmem:[#allocation9 + $0x3a8] sm:$0xff] %v5298
      %5491 = vst [vmem:[#allocation9 + $0x3b0] sm:$0xff] %v5299
      %5492 = vst [vmem:[#allocation9 + $0x3b8] sm:$0xff] %v5300
      %5493 = vst [vmem:[#allocation9 + $0x3c0] sm:$0xff] %v5301
      %5494 = vst [vmem:[#allocation9 + $0x3c8] sm:$0xff] %v5302
      %5495 = vst [vmem:[#allocation9 + $0x3d0] sm:$0xff] %v5303
      %5496 = vst [vmem:[#allocation9 + $0x3d8] sm:$0xff] %v5304
      %5497 = vst [vmem:[#allocation9 + $0x3e0] sm:$0xff] %v5305
      %5498 = vst [vmem:[#allocation9 + $0x3e8] sm:$0xff] %v5306
      %5499 = vst [vmem:[#allocation9 + $0x3f0] sm:$0xff] %v5307
      %5500 = vst [vmem:[#allocation9 + $0x3f8] sm:$0xff] %v5308
      %5501 = vst [vmem:[#allocation9 + $0x400] sm:$0xff] %v5309
      %5502 = vst [vmem:[#allocation9 + $0x408] sm:$0xff] %v5310
      %5503 = vst [vmem:[#allocation9 + $0x410] sm:$0xff] %v5311
      %5504 = vst [vmem:[#allocation9 + $0x418] sm:$0xff] %v5312
      %5505 = vst [vmem:[#allocation9 + $0x420] sm:$0xff] %v5313
      %5506 = vst [vmem:[#allocation9 + $0x428] sm:$0xff] %v5314
      %5507 = vst [vmem:[#allocation9 + $0x430] sm:$0xff] %v5315
      %5508 = vst [vmem:[#allocation9 + $0x438] sm:$0xff] %v5316
      %5509 = vst [vmem:[#allocation9 + $0x440] sm:$0xff] %v5317
      %5510 = vst [vmem:[#allocation9 + $0x448] sm:$0xff] %v5318
      %5511 = vst [vmem:[#allocation9 + $0x450] sm:$0xff] %v5319
      %5512 = vst [vmem:[#allocation9 + $0x458] sm:$0xff] %v5320
      %5513 = vst [vmem:[#allocation9 + $0x460] sm:$0xff] %v5321
      %5514 = vst [vmem:[#allocation9 + $0x468] sm:$0xff] %v5322
      %5515 = vst [vmem:[#allocation9 + $0x470] sm:$0xff] %v5323
      %5516 = vst [vmem:[#allocation9 + $0x478] sm:$0xff] %v5324
      %5517 = vst [vmem:[#allocation9 + $0x480] sm:$0xff] %v5325
      %5518 = vst [vmem:[#allocation9 + $0x488] sm:$0xff] %v5326
      %5519 = vst [vmem:[#allocation9 + $0x490] sm:$0xff] %v5327
      %5520 = vst [vmem:[#allocation9 + $0x498] sm:$0xff] %v5328
      %5521 = vst [vmem:[#allocation9 + $0x4a0] sm:$0xff] %v5329
      %5522 = vst [vmem:[#allocation9 + $0x4a8] sm:$0xff] %v5330
      %5523 = vst [vmem:[#allocation9 + $0x4b0] sm:$0xff] %v5331
      %5524 = vst [vmem:[#allocation9 + $0x4b8] sm:$0xff] %v5332
      %5525 = vst [vmem:[#allocation9 + $0x4c0] sm:$0xff] %v5333
      %5526 = vst [vmem:[#allocation9 + $0x4c8] sm:$0xff] %v5334
      %5527 = vst [vmem:[#allocation9 + $0x4d0] sm:$0xff] %v5335
      %5528 = vst [vmem:[#allocation9 + $0x4d8] sm:$0xff] %v5336
      %5529 = vst [vmem:[#allocation9 + $0x4e0] sm:$0xff] %v5337
      %5530 = vst [vmem:[#allocation9 + $0x4e8] sm:$0xff] %v5338
      %5531 = vst [vmem:[#allocation9 + $0x4f0] sm:$0xff] %v5339
      %5532 = vst [vmem:[#allocation9 + $0x4f8] sm:$0xff] %v5340
      %5533 = vst [vmem:[#allocation9 + $0x500] sm:$0xff] %v5341
      %5534 = vst [vmem:[#allocation9 + $0x508] sm:$0xff] %v5342
      %5535 = vst [vmem:[#allocation9 + $0x510] sm:$0xff] %v5343
      %5536 = vst [vmem:[#allocation9 + $0x518] sm:$0xff] %v5344
      %5537 = vst [vmem:[#allocation9 + $0x520] sm:$0xff] %v5345
      %5538 = vst [vmem:[#allocation9 + $0x528] sm:$0xff] %v5346
      %5539 = vst [vmem:[#allocation9 + $0x530] sm:$0xff] %v5347
      %5540 = vst [vmem:[#allocation9 + $0x538] sm:$0xff] %v5348
      %5541 = vst [vmem:[#allocation9 + $0x540] sm:$0xff] %v5349
      %5542 = vst [vmem:[#allocation9 + $0x548] sm:$0xff] %v5350
      %5543 = vst [vmem:[#allocation9 + $0x550] sm:$0xff] %v5351
      %5544 = vst [vmem:[#allocation9 + $0x558] sm:$0xff] %v5352
      %5545 = vst [vmem:[#allocation9 + $0x560] sm:$0xff] %v5353
      %5546 = vst [vmem:[#allocation9 + $0x568] sm:$0xff] %v5354
      %5547 = vst [vmem:[#allocation9 + $0x570] sm:$0xff] %v5355
      %5548 = vst [vmem:[#allocation9 + $0x578] sm:$0xff] %v5356
      %5549 = vst [vmem:[#allocation9 + $0x580] sm:$0xff] %v5357
      %5550 = vst [vmem:[#allocation9 + $0x588] sm:$0xff] %v5358
      %5551 = vst [vmem:[#allocation9 + $0x590] sm:$0xff] %v5359
      %5552 = vst [vmem:[#allocation9 + $0x598] sm:$0xff] %v5360
      %5553 = vst [vmem:[#allocation9 + $0x5a0] sm:$0xff] %v5361
      %5554 = vst [vmem:[#allocation9 + $0x5a8] sm:$0xff] %v5362
      %5555 = vst [vmem:[#allocation9 + $0x5b0] sm:$0xff] %v5363
      %5556 = vst [vmem:[#allocation9 + $0x5b8] sm:$0xff] %v5364
      %5557 = vst [vmem:[#allocation9 + $0x5c0] sm:$0xff] %v5365
      %5558 = vst [vmem:[#allocation9 + $0x5c8] sm:$0xff] %v5366
      %5559 = vst [vmem:[#allocation9 + $0x5d0] sm:$0xff] %v5367
      %5560 = vst [vmem:[#allocation9 + $0x5d8] sm:$0xff] %v5368
      %5561 = vst [vmem:[#allocation9 + $0x5e0] sm:$0xff] %v5369
      %5562 = vst [vmem:[#allocation9 + $0x5e8] sm:$0xff] %v5370
      %5563 = vst [vmem:[#allocation9 + $0x5f0] sm:$0xff] %v5371
      %5564 = vst [vmem:[#allocation9 + $0x5f8] sm:$0xff] %v5372
    $region33: #{tpu_custom_call.1} parent=1 // pred_fallthru
      _
    // Predicated region
    $region34: #{tpu_custom_call.1} parent=1 // pred_check
      _
    $region35: #{tpu_custom_call.1} parent=1 // pred_check_branch
      %5566 = sbr.rel (0) target = $region37
    $region36: #{tpu_custom_call.1} parent=1 // pred_region
      %5568 = vsyncadd [#allocation5], 0
      %s5569 = sshll.u32 [#allocation9], 4
      %s5570 = int_to_ptr.vmem [resolvable:$true] %s5569
      %s5571 = sshll.u32 %s3, 4
      %s5572 = int_to_ptr.hbm [resolvable:$true] %s5571
      %5577 = dma.vmem_to_hbm [thread:$0]  %s5570, 24576, %s5572, [#allocation5], 384, 384, 24
    $region37: #{tpu_custom_call.1} parent=1 // pred_fallthru
      _
    // Predicated region
    $region38: #{tpu_custom_call.1} parent=1 // pred_check
      _
    $region39: #{tpu_custom_call.1} parent=1 // pred_check_branch
      %5579 = sbr.rel (0) target = $region41
    $region40: #{tpu_custom_call.1} parent=1 // pred_region
      %5581 = dma.done [#allocation5], 24576
    $region41: #{tpu_custom_call.1} parent=1 // pred_fallthru
      _
    %5582 = vsyncpa [#allocation4], 1
    %5583 = vsyncpa [#allocation7], 1
    %5584 = vsyncpa [#allocation5], 1

</llo_original>
